<compile_context>
chip_gen: v7x
topology: tpu7x:2x2x1
jax: 0.10.0
libtpu: 0.0.40
codegen_flags: <defaults>
</compile_context>

<pallas_src>
import jax
import jax.numpy as jnp
from jax.experimental import pallas as pl
from jax.experimental.pallas import tpu as pltpu


def _round_up(x, m):
    return ((x + m - 1) // m) * m


def _num_tensorcores_per_chip():
    try:
        kind = jax.devices()[0].device_kind.lower()
    except Exception:
        return 1
    return 2 if ("v7" in kind or "7x" in kind) else 1


def _choose_tile(B, batch_tile=None):
    """Batch tile: multiple of 128 (lane-dense output), generation-aware."""
    Bp0 = _round_up(B, 128)
    if batch_tile is None:
        if _num_tensorcores_per_chip() >= 2:
            # v7x (2 TCs): aim for >=2 grid steps per core so the x-tile DMA
            # overlaps compute within each core.
            batch_tile = max(128, Bp0 // 4)
        else:
            # v5e / v6e (1 TC): a serial grid only adds per-step overhead ->
            # one big tile, ideally grid of 1 step.
            batch_tile = min(1024, Bp0)
    tile = max(128, (min(batch_tile, Bp0) // 128) * 128)
    return tile


def discriminator_kernel(x_ref,
                         w1_ref, b1_ref,
                         w2_ref, b2_ref,
                         w3_ref, b3_ref,
                         w4t_ref, b4_ref,
                         o_ref):
    # In-kernel f32 -> bf16 cast of the input tile (VPU); avoids a separate
    # wrapper-side convert pass over x in HBM.
    x = x_ref[...].astype(jnp.bfloat16)

    # Layer 1: bf16 MXU operands, f32 accumulation, f32 bias + activation.
    h = jnp.dot(x, w1_ref[...], preferred_element_type=jnp.float32) + b1_ref[...]
    h = jnp.maximum(h, 0.2 * h)                       # LeakyReLU(0.2)

    # Layer 2
    h = jnp.dot(h.astype(jnp.bfloat16), w2_ref[...],
                preferred_element_type=jnp.float32) + b2_ref[...]
    h = jnp.maximum(h, 0.2 * h)

    # Layer 3
    h = jnp.dot(h.astype(jnp.bfloat16), w3_ref[...],
                preferred_element_type=jnp.float32) + b3_ref[...]
    h = jnp.maximum(h, 0.2 * h)

    # Layer 4 (out_features = 1): contract over d3 with the sublane-padded,
    # transposed weight (8, d3).  Result (8, tile) has the per-row outputs
    # along the LANE axis -> lane-dense (1, tile) store, no masked vst and
    # no sublane->lane relayout.  Rows 1..7 of w4t are zero.
    res = jax.lax.dot_general(
        w4t_ref[...], h.astype(jnp.bfloat16),
        dimension_numbers=(((1,), (1,)), ((), ())),
        preferred_element_type=jnp.float32)           # (8, tile)
    o_ref[...] = (res[0:1, :] + b4_ref[...]).astype(o_ref.dtype)   # (1, tile)


def prepare_params(params):
    """One-time (outside the hot path) conversion of parameters to the layout
    the kernel consumes: bf16 matmul weights, f32 biases, transposed +
    sublane-padded final weight."""
    d3 = params["w3"].shape[1]
    w4t = jnp.zeros((8, d3), jnp.bfloat16)
    w4t = w4t.at[0].set(params["w4"][:, 0].astype(jnp.bfloat16))
    return dict(
        w1=params["w1"].astype(jnp.bfloat16),
        b1=params["b1"].astype(jnp.float32),
        w2=params["w2"].astype(jnp.bfloat16),
        b2=params["b2"].astype(jnp.float32),
        w3=params["w3"].astype(jnp.bfloat16),
        b3=params["b3"].astype(jnp.float32),
        w4t=w4t,                                      # (8, d3), rows 1..7 zero
        b4=params["b4"].astype(jnp.float32),          # (1, 1)
    )


def discriminator_forward(x, prep, *, batch_tile=None):
    """x: (B, im_dim) float32.  prep: output of prepare_params()."""
    B, im_dim = x.shape
    out_dtype = x.dtype

    w1, b1 = prep["w1"], prep["b1"]
    w2, b2 = prep["w2"], prep["b2"]
    w3, b3 = prep["w3"], prep["b3"]
    w4t, b4 = prep["w4t"], prep["b4"]
    d1, d2, d3 = w1.shape[1], w2.shape[1], w3.shape[1]

    tile = _choose_tile(B, batch_tile)
    Bp = _round_up(B, tile)
    if Bp != B:
        x = jnp.pad(x, ((0, Bp - B), (0, 0)))
    grid = (Bp // tile,)

    def full(shape):
        # Weights/biases are identical for every batch tile (constant
        # index_map): DMA'd once, VMEM-resident across the whole grid.
        return pl.BlockSpec(shape, lambda i: (0,) * len(shape))

    # Advisory cost estimate for XLA's scheduler.
    flops = 2 * Bp * (im_dim * d1 + d1 * d2 + d2 * d3 + d3 * 1)
    weight_bytes = sum(int(a.size * a.dtype.itemsize)
                       for a in (w1, b1, w2, b2, w3, b3, w4t, b4))
    bytes_accessed = (Bp * im_dim * 4              # f32 x stream (cast in-kernel)
                      + weight_bytes
                      + Bp * jnp.dtype(out_dtype).itemsize)

    # Rough VMEM footprint: double-buffered f32 x tile + output row + weights
    # + f32 intermediates.  Only raise the scoped limit if actually needed,
    # and cap at 48 MiB (v7x has 64 MiB VMEM per TensorCore).
    vmem_needed = (2 * tile * im_dim * 4
                   + 2 * tile * 4
                   + 2 * weight_bytes
                   + 4 * tile * d1 * 4)
    vmem_limit = None
    if vmem_needed > 24 * 1024 * 1024:
        vmem_limit = min(48 * 1024 * 1024, int(vmem_needed * 5 // 4))

    out_row = pl.pallas_call(
        discriminator_kernel,
        out_shape=jax.ShapeDtypeStruct((1, Bp), out_dtype),
        grid_spec=pltpu.PrefetchScalarGridSpec(
            num_scalar_prefetch=0,
            grid=grid,
            in_specs=[
                pl.BlockSpec((tile, im_dim), lambda i: (i, 0)),
                full(w1.shape), full(b1.shape),
                full(w2.shape), full(b2.shape),
                full(w3.shape), full(b3.shape),
                full(w4t.shape), full(b4.shape),
            ],
            # Lane-dense output: each grid step writes an unmasked (1, tile)
            # lane block of the (1, Bp) result row.
            out_specs=pl.BlockSpec((1, tile), lambda i: (0, i)),
        ),
        compiler_params=pltpu.CompilerParams(
            dimension_semantics=("parallel",),
            vmem_limit_bytes=vmem_limit),
        cost_estimate=pl.CostEstimate(
            flops=flops, transcendentals=0, bytes_accessed=bytes_accessed),
    )(x, w1, b1, w2, b2, w3, b3, w4t, b4)

    return out_row[0, :B].reshape(B, 1)


def init_params(key, im_dim, hidden_dim):
    """Deterministic init; weights stored as (in, out), biases as (1, out)."""
    dims = [im_dim, hidden_dim * 4, hidden_dim * 2, hidden_dim, 1]
    params = {}
    for li, (din, dout) in enumerate(zip(dims[:-1], dims[1:]), start=1):
        key, kw, kb = jax.random.split(key, 3)
        bound = 1.0 / jnp.sqrt(din)  # matches torch.nn.Linear default init range
        params[f"w{li}"] = jax.random.uniform(
            kw, (din, dout), jnp.float32, minval=-bound, maxval=bound)
        params[f"b{li}"] = jax.random.uniform(
            kb, (1, dout), jnp.float32, minval=-bound, maxval=bound)
    return params


def reference_forward_bf16(x, params):
    """Mirrors the kernel's numerics: bf16 matmul operands, f32 accumulation."""
    h = x
    for li in range(1, 4):
        w = params[f"w{li}"].astype(jnp.bfloat16)
        h = jnp.dot(h.astype(jnp.bfloat16), w,
                    preferred_element_type=jnp.float32) + params[f"b{li}"]
        h = jnp.maximum(h, 0.2 * h)
    return (jnp.dot(h.astype(jnp.bfloat16), params["w4"].astype(jnp.bfloat16),
                    preferred_element_type=jnp.float32) + params["b4"])


def reference_forward_f32(x, params):
    """Full-precision reference of the PyTorch module semantics."""
    h = x
    for li in range(1, 4):
        h = h @ params[f"w{li}"] + params[f"b{li}"]
        h = jnp.where(h >= 0, h, 0.2 * h)
    return h @ params["w4"] + params["b4"]


if __name__ == "__main__":
    # Module defaults: im_dim=784, hidden_dim=128 -> widths 784->512->256->128->1.
    B, IM_DIM, HIDDEN = 256, 784, 128

    key = jax.random.PRNGKey(0)
    key, kx = jax.random.split(key)
    x = jax.random.normal(kx, (B, IM_DIM), dtype=jnp.float32)
    params = init_params(key, IM_DIM, HIDDEN)

    # One-time weight preparation (bf16 cast / transpose) outside the hot path.
    prep = prepare_params(params)

    out = discriminator_forward(x, prep)
    out = jax.block_until_ready(out)
    assert out.shape == (B, 1), out.shape

    # Tight check against a reference with identical (bf16-in / f32-acc) numerics.
    ref_bf = reference_forward_bf16(x, params)
    err_bf = float(jnp.max(jnp.abs(out - ref_bf)))
    assert jnp.allclose(out, ref_bf, atol=2e-3, rtol=2e-3), err_bf

    # Loose sanity check against the full-f32 module semantics.
    ref_f32 = reference_forward_f32(x, params)
    err_f32 = float(jnp.max(jnp.abs(out - ref_f32)))
    assert jnp.allclose(out, ref_f32, atol=5e-2, rtol=5e-2), err_f32

    print("KERNEL_OK")
</pallas_src>

<mosaic_0001>
module attributes {stable_mosaic.version = 11 : i64} {
  func.func @discriminator_kernel(%arg0: i32, %arg1: memref<256x784xf32, #tpu.memory_space<vmem>>, %arg2: memref<784x512xbf16, #tpu.memory_space<vmem>>, %arg3: memref<1x512xf32, #tpu.memory_space<vmem>>, %arg4: memref<512x256xbf16, #tpu.memory_space<vmem>>, %arg5: memref<1x256xf32, #tpu.memory_space<vmem>>, %arg6: memref<256x128xbf16, #tpu.memory_space<vmem>>, %arg7: memref<1x128xf32, #tpu.memory_space<vmem>>, %arg8: memref<8x128xbf16, #tpu.memory_space<vmem>>, %arg9: memref<1x1xf32, #tpu.memory_space<vmem>>, %arg10: memref<1x256xf32, #tpu.memory_space<vmem>>) attributes {dimension_semantics = [#tpu.dimension_semantics<parallel>], iteration_bounds = array<i64: 1>, scalar_prefetch = 0 : i64, scratch_operands = 0 : i64, tpu.core_type = #tpu.core_type<tc>, window_params = [{transform_indices = @transform_0, window_bounds = array<i64: 256, 784>}, {pipeline_mode = #tpu.pipeline_mode<synchronous>, transform_indices = @transform_1, window_bounds = array<i64: 784, 512>}, {pipeline_mode = #tpu.pipeline_mode<synchronous>, transform_indices = @transform_2, window_bounds = array<i64: 1, 512>}, {pipeline_mode = #tpu.pipeline_mode<synchronous>, transform_indices = @transform_3, window_bounds = array<i64: 512, 256>}, {pipeline_mode = #tpu.pipeline_mode<synchronous>, transform_indices = @transform_4, window_bounds = array<i64: 1, 256>}, {pipeline_mode = #tpu.pipeline_mode<synchronous>, transform_indices = @transform_5, window_bounds = array<i64: 256, 128>}, {pipeline_mode = #tpu.pipeline_mode<synchronous>, transform_indices = @transform_6, window_bounds = array<i64: 1, 128>}, {pipeline_mode = #tpu.pipeline_mode<synchronous>, transform_indices = @transform_7, window_bounds = array<i64: 8, 128>}, {pipeline_mode = #tpu.pipeline_mode<synchronous>, transform_indices = @transform_8, window_bounds = array<i64: 1, 1>}, {transform_indices = @transform_9, window_bounds = array<i64: 1, 256>}]} {
    %c0 = arith.constant 0 : index
    %c0_0 = arith.constant 0 : index
    %0 = vector.load %arg1[%c0, %c0_0] : memref<256x784xf32, #tpu.memory_space<vmem>>, vector<256x784xf32>
    %1 = arith.truncf %0 : vector<256x784xf32> to vector<256x784xbf16>
    %c0_1 = arith.constant 0 : index
    %c0_2 = arith.constant 0 : index
    %2 = vector.load %arg2[%c0_1, %c0_2] : memref<784x512xbf16, #tpu.memory_space<vmem>>, vector<784x512xbf16>
    %cst = arith.constant dense<0.000000e+00> : vector<256x512xf32>
    %3 = tpu.matmul %1, %2, %cst {dimension_numbers = #tpu.dot_dimension_numbers<[1], [0], [0], [1], [0, 0, 1, 1], [], []>} : vector<256x784xbf16>, vector<784x512xbf16>, vector<256x512xf32> -> vector<256x512xf32>
    %c0_3 = arith.constant 0 : index
    %c0_4 = arith.constant 0 : index
    %4 = vector.load %arg3[%c0_3, %c0_4] : memref<1x512xf32, #tpu.memory_space<vmem>>, vector<1x512xf32>
    %5 = vector.broadcast %4 : vector<1x512xf32> to vector<256x512xf32>
    %6 = arith.addf %3, %5 : vector<256x512xf32>
    %cst_5 = arith.constant 2.000000e-01 : f32
    %7 = vector.broadcast %cst_5 : f32 to vector<256x512xf32>
    %8 = arith.mulf %7, %6 : vector<256x512xf32>
    %9 = arith.maximumf %6, %8 : vector<256x512xf32>
    %10 = arith.truncf %9 : vector<256x512xf32> to vector<256x512xbf16>
    %c0_6 = arith.constant 0 : index
    %c0_7 = arith.constant 0 : index
    %11 = vector.load %arg4[%c0_6, %c0_7] : memref<512x256xbf16, #tpu.memory_space<vmem>>, vector<512x256xbf16>
    %cst_8 = arith.constant dense<0.000000e+00> : vector<256x256xf32>
    %12 = tpu.matmul %10, %11, %cst_8 {dimension_numbers = #tpu.dot_dimension_numbers<[1], [0], [0], [1], [0, 0, 1, 1], [], []>} : vector<256x512xbf16>, vector<512x256xbf16>, vector<256x256xf32> -> vector<256x256xf32>
    %c0_9 = arith.constant 0 : index
    %c0_10 = arith.constant 0 : index
    %13 = vector.load %arg5[%c0_9, %c0_10] : memref<1x256xf32, #tpu.memory_space<vmem>>, vector<1x256xf32>
    %14 = vector.broadcast %13 : vector<1x256xf32> to vector<256x256xf32>
    %15 = arith.addf %12, %14 : vector<256x256xf32>
    %cst_11 = arith.constant 2.000000e-01 : f32
    %16 = vector.broadcast %cst_11 : f32 to vector<256x256xf32>
    %17 = arith.mulf %16, %15 : vector<256x256xf32>
    %18 = arith.maximumf %15, %17 : vector<256x256xf32>
    %19 = arith.truncf %18 : vector<256x256xf32> to vector<256x256xbf16>
    %c0_12 = arith.constant 0 : index
    %c0_13 = arith.constant 0 : index
    %20 = vector.load %arg6[%c0_12, %c0_13] : memref<256x128xbf16, #tpu.memory_space<vmem>>, vector<256x128xbf16>
    %cst_14 = arith.constant dense<0.000000e+00> : vector<256x128xf32>
    %21 = tpu.matmul %19, %20, %cst_14 {dimension_numbers = #tpu.dot_dimension_numbers<[1], [0], [0], [1], [0, 0, 1, 1], [], []>} : vector<256x256xbf16>, vector<256x128xbf16>, vector<256x128xf32> -> vector<256x128xf32>
    %c0_15 = arith.constant 0 : index
    %c0_16 = arith.constant 0 : index
    %22 = vector.load %arg7[%c0_15, %c0_16] : memref<1x128xf32, #tpu.memory_space<vmem>>, vector<1x128xf32>
    %23 = vector.broadcast %22 : vector<1x128xf32> to vector<256x128xf32>
    %24 = arith.addf %21, %23 : vector<256x128xf32>
    %cst_17 = arith.constant 2.000000e-01 : f32
    %25 = vector.broadcast %cst_17 : f32 to vector<256x128xf32>
    %26 = arith.mulf %25, %24 : vector<256x128xf32>
    %27 = arith.maximumf %24, %26 : vector<256x128xf32>
    %c0_18 = arith.constant 0 : index
    %c0_19 = arith.constant 0 : index
    %28 = vector.load %arg8[%c0_18, %c0_19] : memref<8x128xbf16, #tpu.memory_space<vmem>>, vector<8x128xbf16>
    %29 = arith.truncf %27 : vector<256x128xf32> to vector<256x128xbf16>
    %cst_20 = arith.constant dense<0.000000e+00> : vector<8x256xf32>
    %30 = tpu.matmul %28, %29, %cst_20 {dimension_numbers = #tpu.dot_dimension_numbers<[1], [1], [0], [0], [0, 0, 1, 0], [], []>} : vector<8x128xbf16>, vector<256x128xbf16>, vector<8x256xf32> -> vector<8x256xf32>
    %31 = vector.extract_strided_slice %30 {offsets = [0, 0], sizes = [1, 256], strides = [1, 1]} : vector<8x256xf32> to vector<1x256xf32>
    %c0_21 = arith.constant 0 : index
    %c0_22 = arith.constant 0 : index
    %32 = vector.load %arg9[%c0_21, %c0_22] : memref<1x1xf32, #tpu.memory_space<vmem>>, vector<1x1xf32>
    %33 = vector.broadcast %32 : vector<1x1xf32> to vector<1x256xf32>
    %34 = arith.addf %31, %33 : vector<1x256xf32>
    %c0_23 = arith.constant 0 : index
    %c0_24 = arith.constant 0 : index
    %35 = vector.load %arg10[%c0_23, %c0_24] : memref<1x256xf32, #tpu.memory_space<vmem>>, vector<1x256xf32>
    tpu.vector_store %arg10[%c0_23, %c0_24], %34 {strides = array<i32>} : memref<1x256xf32, #tpu.memory_space<vmem>>, vector<1x256xf32>,
    return
  }
  func.func @transform_0(%arg0: i32) -> (i32, i32) {
    %c0_i32 = arith.constant 0 : i32
    %c0_i32_0 = arith.constant 0 : i32
    return %arg0, %c0_i32 : i32, i32
  }
  func.func @transform_1(%arg0: i32) -> (i32, i32) {
    %c0_i32 = arith.constant 0 : i32
    %c0_i32_0 = arith.constant 0 : i32
    %c0_i32_1 = arith.constant 0 : i32
    return %c0_i32, %c0_i32_0 : i32, i32
  }
  func.func @transform_2(%arg0: i32) -> (i32, i32) {
    %c0_i32 = arith.constant 0 : i32
    %c0_i32_0 = arith.constant 0 : i32
    %c0_i32_1 = arith.constant 0 : i32
    return %c0_i32, %c0_i32_0 : i32, i32
  }
  func.func @transform_3(%arg0: i32) -> (i32, i32) {
    %c0_i32 = arith.constant 0 : i32
    %c0_i32_0 = arith.constant 0 : i32
    %c0_i32_1 = arith.constant 0 : i32
    return %c0_i32, %c0_i32_0 : i32, i32
  }
  func.func @transform_4(%arg0: i32) -> (i32, i32) {
    %c0_i32 = arith.constant 0 : i32
    %c0_i32_0 = arith.constant 0 : i32
    %c0_i32_1 = arith.constant 0 : i32
    return %c0_i32, %c0_i32_0 : i32, i32
  }
  func.func @transform_5(%arg0: i32) -> (i32, i32) {
    %c0_i32 = arith.constant 0 : i32
    %c0_i32_0 = arith.constant 0 : i32
    %c0_i32_1 = arith.constant 0 : i32
    return %c0_i32, %c0_i32_0 : i32, i32
  }
  func.func @transform_6(%arg0: i32) -> (i32, i32) {
    %c0_i32 = arith.constant 0 : i32
    %c0_i32_0 = arith.constant 0 : i32
    %c0_i32_1 = arith.constant 0 : i32
    return %c0_i32, %c0_i32_0 : i32, i32
  }
  func.func @transform_7(%arg0: i32) -> (i32, i32) {
    %c0_i32 = arith.constant 0 : i32
    %c0_i32_0 = arith.constant 0 : i32
    %c0_i32_1 = arith.constant 0 : i32
    return %c0_i32, %c0_i32_0 : i32, i32
  }
  func.func @transform_8(%arg0: i32) -> (i32, i32) {
    %c0_i32 = arith.constant 0 : i32
    %c0_i32_0 = arith.constant 0 : i32
    %c0_i32_1 = arith.constant 0 : i32
    return %c0_i32, %c0_i32_0 : i32, i32
  }
  func.func @transform_9(%arg0: i32) -> (i32, i32) {
    %c0_i32 = arith.constant 0 : i32
    %c0_i32_0 = arith.constant 0 : i32
    return %c0_i32, %arg0 : i32, i32
  }
}

</mosaic_0001>

<llo_original>
// kernel: tpu_custom_call.1
$region0: #{tpu_custom_call.1}
  #allocation0 [shape = 'u32[]', space=smem, size = 0x4, offset = 0x4, fixed_abs, tag = 'smem constant byte address 0x4 - core index']
  #allocation1 [shape = 'u32[144,128]{1,0:T(1,128)}', space=vmem, size = 0x12000, scoped, tag = 'internal scratch']
  #allocation2 [shape = 'f32[1,1]{1,0:T(1,128)S(1)}', space=vmem, size = 0x200, scoped, tag = 'scoped memory for tpu_custom_call.1']
  %s0 = inlined_call_operand.vmem [shape: f32[256,784], index: 0, kind: input, shape index: {}]
  %s1 = inlined_call_operand.vmem [shape: bf16[784,512], index: 1, kind: input, shape index: {}]
  %s2 = inlined_call_operand.vmem [shape: f32[1,512], index: 2, kind: input, shape index: {}]
  %s3 = inlined_call_operand.vmem [shape: bf16[512,256], index: 3, kind: input, shape index: {}]
  %s4 = inlined_call_operand.vmem [shape: f32[1,256], index: 4, kind: input, shape index: {}]
  %s5 = inlined_call_operand.vmem [shape: bf16[256,128], index: 5, kind: input, shape index: {}]
  %s6 = inlined_call_operand.vmem [shape: f32[1,128], index: 6, kind: input, shape index: {}]
  %s7 = inlined_call_operand.vmem [shape: bf16[8,128], index: 7, kind: input, shape index: {}]
  %s8 = inlined_call_operand.<no memory space> [shape: f32[1,1], index: 8, kind: input, shape index: {}]
  %s9 = inlined_call_operand.hbm [shape: f32[1,256], index: 9, kind: output, shape index: {}]
  %s10 = sld [smem:[#allocation0]]
  $region46: #{tpu_custom_call.1} parent=0
    _
  %s12 = ssub.s32 1, %s10
  %s13 = scalar_select 0, %s12, %s10
  %v14 = vstv %s8
  %15 = vst [vmem:[#allocation2] sm:$0x1] %v14
  $region1: #{tpu_custom_call.1} parent=0
    #allocation3 [shape = 'u8[1024]{0}', space=vmem, size = 0x400, scoped, tag = 'output window, operand 0, single buffered']
    #allocation4 [shape = 's32[1]{0}', space=sflag, size = 0x4, scoped, tag = 'scoped memory for tpu_custom_call.1']
    %16 = vsyncpa [#allocation4], 0
    // Predicated region
    $region2: #{tpu_custom_call.1} parent=1 // pred_check
      _
    $region3: #{tpu_custom_call.1} parent=1 // pred_check_branch
      %18 = sbr.rel (0) target = $region5
    $region4: #{tpu_custom_call.1} parent=1 // pred_region
      _
    $region5: #{tpu_custom_call.1} parent=1 // pred_fallthru
      _
    // Predicated region
    $region6: #{tpu_custom_call.1} parent=1 // pred_check
      _
    $region7: #{tpu_custom_call.1} parent=1 // pred_check_branch
      %20 = sbr.rel (0) target = $region9
    $region8: #{tpu_custom_call.1} parent=1 // pred_region
      _
    $region9: #{tpu_custom_call.1} parent=1 // pred_fallthru
      _
    // Predicated region
    $region10: #{tpu_custom_call.1} parent=1 // pred_check
      _
    $region11: #{tpu_custom_call.1} parent=1 // pred_check_branch
      %22 = sbr.rel (0) target = $region13
    $region12: #{tpu_custom_call.1} parent=1 // pred_region
      _
    $region13: #{tpu_custom_call.1} parent=1 // pred_fallthru
      _
    // Predicated region
    $region14: #{tpu_custom_call.1} parent=1 // pred_check
      _
    $region15: #{tpu_custom_call.1} parent=1 // pred_check_branch
      %24 = sbr.rel (0) target = $region17
    $region16: #{tpu_custom_call.1} parent=1 // pred_region
      _
    $region17: #{tpu_custom_call.1} parent=1 // pred_fallthru
      _
    // Predicated region
    $region18: #{tpu_custom_call.1} parent=1 // pred_check
      _
    $region19: #{tpu_custom_call.1} parent=1 // pred_check_branch
      %26 = sbr.rel (0) target = $region21
    $region20: #{tpu_custom_call.1} parent=1 // pred_region
      _
    $region21: #{tpu_custom_call.1} parent=1 // pred_fallthru
      _
    // Predicated region
    $region22: #{tpu_custom_call.1} parent=1 // pred_check
      _
    $region23: #{tpu_custom_call.1} parent=1 // pred_check_branch
      %28 = sbr.rel (0) target = $region25
    $region24: #{tpu_custom_call.1} parent=1 // pred_region
      _
    $region25: #{tpu_custom_call.1} parent=1 // pred_fallthru
      _
    // Predicated region
    $region26: #{tpu_custom_call.1} parent=1 // pred_check
      _
    $region27: #{tpu_custom_call.1} parent=1 // pred_check_branch
      %30 = sbr.rel (0) target = $region29
    $region28: #{tpu_custom_call.1} parent=1 // pred_region
      _
    $region29: #{tpu_custom_call.1} parent=1 // pred_fallthru
      _
    // Predicated region
    $region30: #{tpu_custom_call.1} parent=1 // pred_check
      _
    $region31: #{tpu_custom_call.1} parent=1 // pred_check_branch
      %32 = sbr.rel (0) target = $region33
    $region32: #{tpu_custom_call.1} parent=1 // pred_region
      _
    $region33: #{tpu_custom_call.1} parent=1 // pred_fallthru
      _
    // Predicated region
    $region34: #{tpu_custom_call.1} parent=1 // pred_check
      _
    $region35: #{tpu_custom_call.1} parent=1 // pred_check_branch
      %34 = sbr.rel (0) target = $region37
    $region36: #{tpu_custom_call.1} parent=1 // pred_region
      _
    $region37: #{tpu_custom_call.1} parent=1 // pred_fallthru
      _
    %v36 = vld [vmem:[%s0] sm:$0xff]
    %v37 = vld [vmem:[%s0 + $0x8] sm:$0xff]
    %v38 = vld [vmem:[%s0 + $0x10] sm:$0xff]
    %v39 = vld [vmem:[%s0 + $0x18] sm:$0xff]
    %v40 = vld [vmem:[%s0 + $0x20] sm:$0xff]
    %v41 = vld [vmem:[%s0 + $0x28] sm:$0xff]
    %v42 = vld [vmem:[%s0 + $0x30] sm:$0xff]
    %v43 = vld [vmem:[%s0 + $0x38] sm:$0xff]
    %v44 = vld [vmem:[%s0 + $0x40] sm:$0xff]
    %v45 = vld [vmem:[%s0 + $0x48] sm:$0xff]
    %v46 = vld [vmem:[%s0 + $0x50] sm:$0xff]
    %v47 = vld [vmem:[%s0 + $0x58] sm:$0xff]
    %v48 = vld [vmem:[%s0 + $0x60] sm:$0xff]
    %v49 = vld [vmem:[%s0 + $0x68] sm:$0xff]
    %v50 = vld [vmem:[%s0 + $0x70] sm:$0xff]
    %v51 = vld [vmem:[%s0 + $0x78] sm:$0xff]
    %v52 = vld [vmem:[%s0 + $0x80] sm:$0xff]
    %v53 = vld [vmem:[%s0 + $0x88] sm:$0xff]
    %v54 = vld [vmem:[%s0 + $0x90] sm:$0xff]
    %v55 = vld [vmem:[%s0 + $0x98] sm:$0xff]
    %v56 = vld [vmem:[%s0 + $0xa0] sm:$0xff]
    %v57 = vld [vmem:[%s0 + $0xa8] sm:$0xff]
    %v58 = vld [vmem:[%s0 + $0xb0] sm:$0xff]
    %v59 = vld [vmem:[%s0 + $0xb8] sm:$0xff]
    %v60 = vld [vmem:[%s0 + $0xc0] sm:$0xff]
    %v61 = vld [vmem:[%s0 + $0xc8] sm:$0xff]
    %v62 = vld [vmem:[%s0 + $0xd0] sm:$0xff]
    %v63 = vld [vmem:[%s0 + $0xd8] sm:$0xff]
    %v64 = vld [vmem:[%s0 + $0xe0] sm:$0xff]
    %v65 = vld [vmem:[%s0 + $0xe8] sm:$0xff]
    %v66 = vld [vmem:[%s0 + $0xf0] sm:$0xff]
    %v67 = vld [vmem:[%s0 + $0xf8] sm:$0xff]
    %v68 = vld [vmem:[%s0 + $0x100] sm:$0xff]
    %v69 = vld [vmem:[%s0 + $0x108] sm:$0xff]
    %v70 = vld [vmem:[%s0 + $0x110] sm:$0xff]
    %v71 = vld [vmem:[%s0 + $0x118] sm:$0xff]
    %v72 = vld [vmem:[%s0 + $0x120] sm:$0xff]
    %v73 = vld [vmem:[%s0 + $0x128] sm:$0xff]
    %v74 = vld [vmem:[%s0 + $0x130] sm:$0xff]
    %v75 = vld [vmem:[%s0 + $0x138] sm:$0xff]
    %v76 = vld [vmem:[%s0 + $0x140] sm:$0xff]
    %v77 = vld [vmem:[%s0 + $0x148] sm:$0xff]
    %v78 = vld [vmem:[%s0 + $0x150] sm:$0xff]
    %v79 = vld [vmem:[%s0 + $0x158] sm:$0xff]
    %v80 = vld [vmem:[%s0 + $0x160] sm:$0xff]
    %v81 = vld [vmem:[%s0 + $0x168] sm:$0xff]
    %v82 = vld [vmem:[%s0 + $0x170] sm:$0xff]
    %v83 = vld [vmem:[%s0 + $0x178] sm:$0xff]
    %v84 = vld [vmem:[%s0 + $0x180] sm:$0xff]
    %v85 = vld [vmem:[%s0 + $0x188] sm:$0xff]
    %v86 = vld [vmem:[%s0 + $0x190] sm:$0xff]
    %v87 = vld [vmem:[%s0 + $0x198] sm:$0xff]
    %v88 = vld [vmem:[%s0 + $0x1a0] sm:$0xff]
    %v89 = vld [vmem:[%s0 + $0x1a8] sm:$0xff]
    %v90 = vld [vmem:[%s0 + $0x1b0] sm:$0xff]
    %v91 = vld [vmem:[%s0 + $0x1b8] sm:$0xff]
    %v92 = vld [vmem:[%s0 + $0x1c0] sm:$0xff]
    %v93 = vld [vmem:[%s0 + $0x1c8] sm:$0xff]
    %v94 = vld [vmem:[%s0 + $0x1d0] sm:$0xff]
    %v95 = vld [vmem:[%s0 + $0x1d8] sm:$0xff]
    %v96 = vld [vmem:[%s0 + $0x1e0] sm:$0xff]
    %v97 = vld [vmem:[%s0 + $0x1e8] sm:$0xff]
    %v98 = vld [vmem:[%s0 + $0x1f0] sm:$0xff]
    %v99 = vld [vmem:[%s0 + $0x1f8] sm:$0xff]
    %v100 = vld [vmem:[%s0 + $0x200] sm:$0xff]
    %v101 = vld [vmem:[%s0 + $0x208] sm:$0xff]
    %v102 = vld [vmem:[%s0 + $0x210] sm:$0xff]
    %v103 = vld [vmem:[%s0 + $0x218] sm:$0xff]
    %v104 = vld [vmem:[%s0 + $0x220] sm:$0xff]
    %v105 = vld [vmem:[%s0 + $0x228] sm:$0xff]
    %v106 = vld [vmem:[%s0 + $0x230] sm:$0xff]
    %v107 = vld [vmem:[%s0 + $0x238] sm:$0xff]
    %v108 = vld [vmem:[%s0 + $0x240] sm:$0xff]
    %v109 = vld [vmem:[%s0 + $0x248] sm:$0xff]
    %v110 = vld [vmem:[%s0 + $0x250] sm:$0xff]
    %v111 = vld [vmem:[%s0 + $0x258] sm:$0xff]
    %v112 = vld [vmem:[%s0 + $0x260] sm:$0xff]
    %v113 = vld [vmem:[%s0 + $0x268] sm:$0xff]
    %v114 = vld [vmem:[%s0 + $0x270] sm:$0xff]
    %v115 = vld [vmem:[%s0 + $0x278] sm:$0xff]
    %v116 = vld [vmem:[%s0 + $0x280] sm:$0xff]
    %v117 = vld [vmem:[%s0 + $0x288] sm:$0xff]
    %v118 = vld [vmem:[%s0 + $0x290] sm:$0xff]
    %v119 = vld [vmem:[%s0 + $0x298] sm:$0xff]
    %v120 = vld [vmem:[%s0 + $0x2a0] sm:$0xff]
    %v121 = vld [vmem:[%s0 + $0x2a8] sm:$0xff]
    %v122 = vld [vmem:[%s0 + $0x2b0] sm:$0xff]
    %v123 = vld [vmem:[%s0 + $0x2b8] sm:$0xff]
    %v124 = vld [vmem:[%s0 + $0x2c0] sm:$0xff]
    %v125 = vld [vmem:[%s0 + $0x2c8] sm:$0xff]
    %v126 = vld [vmem:[%s0 + $0x2d0] sm:$0xff]
    %v127 = vld [vmem:[%s0 + $0x2d8] sm:$0xff]
    %v128 = vld [vmem:[%s0 + $0x2e0] sm:$0xff]
    %v129 = vld [vmem:[%s0 + $0x2e8] sm:$0xff]
    %v130 = vld [vmem:[%s0 + $0x2f0] sm:$0xff]
    %v131 = vld [vmem:[%s0 + $0x2f8] sm:$0xff]
    %v132 = vld [vmem:[%s0 + $0x300] sm:$0xff]
    %v133 = vld [vmem:[%s0 + $0x308] sm:$0xff]
    %v134 = vld [vmem:[%s0 + $0x310] sm:$0xff]
    %v135 = vld [vmem:[%s0 + $0x318] sm:$0xff]
    %v136 = vld [vmem:[%s0 + $0x320] sm:$0xff]
    %v137 = vld [vmem:[%s0 + $0x328] sm:$0xff]
    %v138 = vld [vmem:[%s0 + $0x330] sm:$0xff]
    %v139 = vld [vmem:[%s0 + $0x338] sm:$0xff]
    %v140 = vld [vmem:[%s0 + $0x340] sm:$0xff]
    %v141 = vld [vmem:[%s0 + $0x348] sm:$0xff]
    %v142 = vld [vmem:[%s0 + $0x350] sm:$0xff]
    %v143 = vld [vmem:[%s0 + $0x358] sm:$0xff]
    %v144 = vld [vmem:[%s0 + $0x360] sm:$0xff]
    %v145 = vld [vmem:[%s0 + $0x368] sm:$0xff]
    %v146 = vld [vmem:[%s0 + $0x370] sm:$0xff]
    %v147 = vld [vmem:[%s0 + $0x378] sm:$0xff]
    %v148 = vld [vmem:[%s0 + $0x380] sm:$0xff]
    %v149 = vld [vmem:[%s0 + $0x388] sm:$0xff]
    %v150 = vld [vmem:[%s0 + $0x390] sm:$0xff]
    %v151 = vld [vmem:[%s0 + $0x398] sm:$0xff]
    %v152 = vld [vmem:[%s0 + $0x3a0] sm:$0xff]
    %v153 = vld [vmem:[%s0 + $0x3a8] sm:$0xff]
    %v154 = vld [vmem:[%s0 + $0x3b0] sm:$0xff]
    %v155 = vld [vmem:[%s0 + $0x3b8] sm:$0xff]
    %v156 = vld [vmem:[%s0 + $0x3c0] sm:$0xff]
    %v157 = vld [vmem:[%s0 + $0x3c8] sm:$0xff]
    %v158 = vld [vmem:[%s0 + $0x3d0] sm:$0xff]
    %v159 = vld [vmem:[%s0 + $0x3d8] sm:$0xff]
    %v160 = vld [vmem:[%s0 + $0x3e0] sm:$0xff]
    %v161 = vld [vmem:[%s0 + $0x3e8] sm:$0xff]
    %v162 = vld [vmem:[%s0 + $0x3f0] sm:$0xff]
    %v163 = vld [vmem:[%s0 + $0x3f8] sm:$0xff]
    %v164 = vld [vmem:[%s0 + $0x400] sm:$0xff]
    %v165 = vld [vmem:[%s0 + $0x408] sm:$0xff]
    %v166 = vld [vmem:[%s0 + $0x410] sm:$0xff]
    %v167 = vld [vmem:[%s0 + $0x418] sm:$0xff]
    %v168 = vld [vmem:[%s0 + $0x420] sm:$0xff]
    %v169 = vld [vmem:[%s0 + $0x428] sm:$0xff]
    %v170 = vld [vmem:[%s0 + $0x430] sm:$0xff]
    %v171 = vld [vmem:[%s0 + $0x438] sm:$0xff]
    %v172 = vld [vmem:[%s0 + $0x440] sm:$0xff]
    %v173 = vld [vmem:[%s0 + $0x448] sm:$0xff]
    %v174 = vld [vmem:[%s0 + $0x450] sm:$0xff]
    %v175 = vld [vmem:[%s0 + $0x458] sm:$0xff]
    %v176 = vld [vmem:[%s0 + $0x460] sm:$0xff]
    %v177 = vld [vmem:[%s0 + $0x468] sm:$0xff]
    %v178 = vld [vmem:[%s0 + $0x470] sm:$0xff]
    %v179 = vld [vmem:[%s0 + $0x478] sm:$0xff]
    %v180 = vld [vmem:[%s0 + $0x480] sm:$0xff]
    %v181 = vld [vmem:[%s0 + $0x488] sm:$0xff]
    %v182 = vld [vmem:[%s0 + $0x490] sm:$0xff]
    %v183 = vld [vmem:[%s0 + $0x498] sm:$0xff]
    %v184 = vld [vmem:[%s0 + $0x4a0] sm:$0xff]
    %v185 = vld [vmem:[%s0 + $0x4a8] sm:$0xff]
    %v186 = vld [vmem:[%s0 + $0x4b0] sm:$0xff]
    %v187 = vld [vmem:[%s0 + $0x4b8] sm:$0xff]
    %v188 = vld [vmem:[%s0 + $0x4c0] sm:$0xff]
    %v189 = vld [vmem:[%s0 + $0x4c8] sm:$0xff]
    %v190 = vld [vmem:[%s0 + $0x4d0] sm:$0xff]
    %v191 = vld [vmem:[%s0 + $0x4d8] sm:$0xff]
    %v192 = vld [vmem:[%s0 + $0x4e0] sm:$0xff]
    %v193 = vld [vmem:[%s0 + $0x4e8] sm:$0xff]
    %v194 = vld [vmem:[%s0 + $0x4f0] sm:$0xff]
    %v195 = vld [vmem:[%s0 + $0x4f8] sm:$0xff]
    %v196 = vld [vmem:[%s0 + $0x500] sm:$0xff]
    %v197 = vld [vmem:[%s0 + $0x508] sm:$0xff]
    %v198 = vld [vmem:[%s0 + $0x510] sm:$0xff]
    %v199 = vld [vmem:[%s0 + $0x518] sm:$0xff]
    %v200 = vld [vmem:[%s0 + $0x520] sm:$0xff]
    %v201 = vld [vmem:[%s0 + $0x528] sm:$0xff]
    %v202 = vld [vmem:[%s0 + $0x530] sm:$0xff]
    %v203 = vld [vmem:[%s0 + $0x538] sm:$0xff]
    %v204 = vld [vmem:[%s0 + $0x540] sm:$0xff]
    %v205 = vld [vmem:[%s0 + $0x548] sm:$0xff]
    %v206 = vld [vmem:[%s0 + $0x550] sm:$0xff]
    %v207 = vld [vmem:[%s0 + $0x558] sm:$0xff]
    %v208 = vld [vmem:[%s0 + $0x560] sm:$0xff]
    %v209 = vld [vmem:[%s0 + $0x568] sm:$0xff]
    %v210 = vld [vmem:[%s0 + $0x570] sm:$0xff]
    %v211 = vld [vmem:[%s0 + $0x578] sm:$0xff]
    %v212 = vld [vmem:[%s0 + $0x580] sm:$0xff]
    %v213 = vld [vmem:[%s0 + $0x588] sm:$0xff]
    %v214 = vld [vmem:[%s0 + $0x590] sm:$0xff]
    %v215 = vld [vmem:[%s0 + $0x598] sm:$0xff]
    %v216 = vld [vmem:[%s0 + $0x5a0] sm:$0xff]
    %v217 = vld [vmem:[%s0 + $0x5a8] sm:$0xff]
    %v218 = vld [vmem:[%s0 + $0x5b0] sm:$0xff]
    %v219 = vld [vmem:[%s0 + $0x5b8] sm:$0xff]
    %v220 = vld [vmem:[%s0 + $0x5c0] sm:$0xff]
    %v221 = vld [vmem:[%s0 + $0x5c8] sm:$0xff]
    %v222 = vld [vmem:[%s0 + $0x5d0] sm:$0xff]
    %v223 = vld [vmem:[%s0 + $0x5d8] sm:$0xff]
    %v224 = vld [vmem:[%s0 + $0x5e0] sm:$0xff]
    %v225 = vld [vmem:[%s0 + $0x5e8] sm:$0xff]
    %v226 = vld [vmem:[%s0 + $0x5f0] sm:$0xff]
    %v227 = vld [vmem:[%s0 + $0x5f8] sm:$0xff]
    %v228 = vld [vmem:[%s0 + $0x600] sm:$0xff]
    %v229 = vld [vmem:[%s0 + $0x608] sm:$0xff]
    %v230 = vld [vmem:[%s0 + $0x610] sm:$0xff]
    %v231 = vld [vmem:[%s0 + $0x618] sm:$0xff]
    %v232 = vld [vmem:[%s0 + $0x620] sm:$0xff]
    %v233 = vld [vmem:[%s0 + $0x628] sm:$0xff]
    %v234 = vld [vmem:[%s0 + $0x630] sm:$0xff]
    %v235 = vld [vmem:[%s0 + $0x638] sm:$0xff]
    %v236 = vld [vmem:[%s0 + $0x640] sm:$0xff]
    %v237 = vld [vmem:[%s0 + $0x648] sm:$0xff]
    %v238 = vld [vmem:[%s0 + $0x650] sm:$0xff]
    %v239 = vld [vmem:[%s0 + $0x658] sm:$0xff]
    %v240 = vld [vmem:[%s0 + $0x660] sm:$0xff]
    %v241 = vld [vmem:[%s0 + $0x668] sm:$0xff]
    %v242 = vld [vmem:[%s0 + $0x670] sm:$0xff]
    %v243 = vld [vmem:[%s0 + $0x678] sm:$0xff]
    %v244 = vld [vmem:[%s0 + $0x680] sm:$0xff]
    %v245 = vld [vmem:[%s0 + $0x688] sm:$0xff]
    %v246 = vld [vmem:[%s0 + $0x690] sm:$0xff]
    %v247 = vld [vmem:[%s0 + $0x698] sm:$0xff]
    %v248 = vld [vmem:[%s0 + $0x6a0] sm:$0xff]
    %v249 = vld [vmem:[%s0 + $0x6a8] sm:$0xff]
    %v250 = vld [vmem:[%s0 + $0x6b0] sm:$0xff]
    %v251 = vld [vmem:[%s0 + $0x6b8] sm:$0xff]
    %v252 = vld [vmem:[%s0 + $0x6c0] sm:$0xff]
    %v253 = vld [vmem:[%s0 + $0x6c8] sm:$0xff]
    %v254 = vld [vmem:[%s0 + $0x6d0] sm:$0xff]
    %v255 = vld [vmem:[%s0 + $0x6d8] sm:$0xff]
    %v256 = vld [vmem:[%s0 + $0x6e0] sm:$0xff]
    %v257 = vld [vmem:[%s0 + $0x6e8] sm:$0xff]
    %v258 = vld [vmem:[%s0 + $0x6f0] sm:$0xff]
    %v259 = vld [vmem:[%s0 + $0x6f8] sm:$0xff]
    %v260 = vpack.c.bf16 %v43, %v36
    %v261 = vpack.c.bf16 %v44, %v37
    %v262 = vpack.c.bf16 %v45, %v38
    %v263 = vpack.c.bf16 %v46, %v39
    %v264 = vpack.c.bf16 %v47, %v40
    %v265 = vpack.c.bf16 %v48, %v41
    %v266 = vpack.c.bf16 %v49, %v42
    %v267 = vpack.c.bf16 %v57, %v50
    %v268 = vpack.c.bf16 %v58, %v51
    %v269 = vpack.c.bf16 %v59, %v52
    %v270 = vpack.c.bf16 %v60, %v53
    %v271 = vpack.c.bf16 %v61, %v54
    %v272 = vpack.c.bf16 %v62, %v55
    %v273 = vpack.c.bf16 %v63, %v56
    %v274 = vpack.c.bf16 %v71, %v64
    %v275 = vpack.c.bf16 %v72, %v65
    %v276 = vpack.c.bf16 %v73, %v66
    %v277 = vpack.c.bf16 %v74, %v67
    %v278 = vpack.c.bf16 %v75, %v68
    %v279 = vpack.c.bf16 %v76, %v69
    %v280 = vpack.c.bf16 %v77, %v70
    %v281 = vpack.c.bf16 %v85, %v78
    %v282 = vpack.c.bf16 %v86, %v79
    %v283 = vpack.c.bf16 %v87, %v80
    %v284 = vpack.c.bf16 %v88, %v81
    %v285 = vpack.c.bf16 %v89, %v82
    %v286 = vpack.c.bf16 %v90, %v83
    %v287 = vpack.c.bf16 %v91, %v84
    %v288 = vpack.c.bf16 %v99, %v92
    %v289 = vpack.c.bf16 %v100, %v93
    %v290 = vpack.c.bf16 %v101, %v94
    %v291 = vpack.c.bf16 %v102, %v95
    %v292 = vpack.c.bf16 %v103, %v96
    %v293 = vpack.c.bf16 %v104, %v97
    %v294 = vpack.c.bf16 %v105, %v98
    %v295 = vpack.c.bf16 %v113, %v106
    %v296 = vpack.c.bf16 %v114, %v107
    %v297 = vpack.c.bf16 %v115, %v108
    %v298 = vpack.c.bf16 %v116, %v109
    %v299 = vpack.c.bf16 %v117, %v110
    %v300 = vpack.c.bf16 %v118, %v111
    %v301 = vpack.c.bf16 %v119, %v112
    %v302 = vpack.c.bf16 %v127, %v120
    %v303 = vpack.c.bf16 %v128, %v121
    %v304 = vpack.c.bf16 %v129, %v122
    %v305 = vpack.c.bf16 %v130, %v123
    %v306 = vpack.c.bf16 %v131, %v124
    %v307 = vpack.c.bf16 %v132, %v125
    %v308 = vpack.c.bf16 %v133, %v126
    %v309 = vpack.c.bf16 %v141, %v134
    %v310 = vpack.c.bf16 %v142, %v135
    %v311 = vpack.c.bf16 %v143, %v136
    %v312 = vpack.c.bf16 %v144, %v137
    %v313 = vpack.c.bf16 %v145, %v138
    %v314 = vpack.c.bf16 %v146, %v139
    %v315 = vpack.c.bf16 %v147, %v140
    %v316 = vpack.c.bf16 %v155, %v148
    %v317 = vpack.c.bf16 %v156, %v149
    %v318 = vpack.c.bf16 %v157, %v150
    %v319 = vpack.c.bf16 %v158, %v151
    %v320 = vpack.c.bf16 %v159, %v152
    %v321 = vpack.c.bf16 %v160, %v153
    %v322 = vpack.c.bf16 %v161, %v154
    %v323 = vpack.c.bf16 %v169, %v162
    %v324 = vpack.c.bf16 %v170, %v163
    %v325 = vpack.c.bf16 %v171, %v164
    %v326 = vpack.c.bf16 %v172, %v165
    %v327 = vpack.c.bf16 %v173, %v166
    %v328 = vpack.c.bf16 %v174, %v167
    %v329 = vpack.c.bf16 %v175, %v168
    %v330 = vpack.c.bf16 %v183, %v176
    %v331 = vpack.c.bf16 %v184, %v177
    %v332 = vpack.c.bf16 %v185, %v178
    %v333 = vpack.c.bf16 %v186, %v179
    %v334 = vpack.c.bf16 %v187, %v180
    %v335 = vpack.c.bf16 %v188, %v181
    %v336 = vpack.c.bf16 %v189, %v182
    %v337 = vpack.c.bf16 %v197, %v190
    %v338 = vpack.c.bf16 %v198, %v191
    %v339 = vpack.c.bf16 %v199, %v192
    %v340 = vpack.c.bf16 %v200, %v193
    %v341 = vpack.c.bf16 %v201, %v194
    %v342 = vpack.c.bf16 %v202, %v195
    %v343 = vpack.c.bf16 %v203, %v196
    %v344 = vpack.c.bf16 %v211, %v204
    %v345 = vpack.c.bf16 %v212, %v205
    %v346 = vpack.c.bf16 %v213, %v206
    %v347 = vpack.c.bf16 %v214, %v207
    %v348 = vpack.c.bf16 %v215, %v208
    %v349 = vpack.c.bf16 %v216, %v209
    %v350 = vpack.c.bf16 %v217, %v210
    %v351 = vpack.c.bf16 %v225, %v218
    %v352 = vpack.c.bf16 %v226, %v219
    %v353 = vpack.c.bf16 %v227, %v220
    %v354 = vpack.c.bf16 %v228, %v221
    %v355 = vpack.c.bf16 %v229, %v222
    %v356 = vpack.c.bf16 %v230, %v223
    %v357 = vpack.c.bf16 %v231, %v224
    %v358 = vpack.c.bf16 %v239, %v232
    %v359 = vpack.c.bf16 %v240, %v233
    %v360 = vpack.c.bf16 %v241, %v234
    %v361 = vpack.c.bf16 %v242, %v235
    %v362 = vpack.c.bf16 %v243, %v236
    %v363 = vpack.c.bf16 %v244, %v237
    %v364 = vpack.c.bf16 %v245, %v238
    %v365 = vpack.c.bf16 %v253, %v246
    %v366 = vpack.c.bf16 %v254, %v247
    %v367 = vpack.c.bf16 %v255, %v248
    %v368 = vpack.c.bf16 %v256, %v249
    %v369 = vpack.c.bf16 %v257, %v250
    %v370 = vpack.c.bf16 %v258, %v251
    %v371 = vpack.c.bf16 %v259, %v252
    %v372 = vld [vmem:[%s1] sm:$0xff]
    %v373 = vld [vmem:[%s1 + $0x8] sm:$0xff]
    %v374 = vld [vmem:[%s1 + $0x10] sm:$0xff]
    %v375 = vld [vmem:[%s1 + $0x18] sm:$0xff]
    %v376 = vld [vmem:[%s1 + $0x20] sm:$0xff]
    %v377 = vld [vmem:[%s1 + $0x28] sm:$0xff]
    %v378 = vld [vmem:[%s1 + $0x30] sm:$0xff]
    %v379 = vld [vmem:[%s1 + $0x38] sm:$0xff]
    %v380 = vld [vmem:[%s1 + $0x40] sm:$0xff]
    %v381 = vld [vmem:[%s1 + $0x48] sm:$0xff]
    %v382 = vld [vmem:[%s1 + $0x50] sm:$0xff]
    %v383 = vld [vmem:[%s1 + $0x58] sm:$0xff]
    %v384 = vld [vmem:[%s1 + $0x60] sm:$0xff]
    %v385 = vld [vmem:[%s1 + $0x68] sm:$0xff]
    %v386 = vld [vmem:[%s1 + $0x70] sm:$0xff]
    %v387 = vld [vmem:[%s1 + $0x78] sm:$0xff]
    %v388 = vld [vmem:[%s1 + $0x80] sm:$0xff]
    %v389 = vld [vmem:[%s1 + $0x88] sm:$0xff]
    %v390 = vld [vmem:[%s1 + $0x90] sm:$0xff]
    %v391 = vld [vmem:[%s1 + $0x98] sm:$0xff]
    %v392 = vld [vmem:[%s1 + $0xa0] sm:$0xff]
    %v393 = vld [vmem:[%s1 + $0xa8] sm:$0xff]
    %v394 = vld [vmem:[%s1 + $0xb0] sm:$0xff]
    %v395 = vld [vmem:[%s1 + $0xb8] sm:$0xff]
    %v396 = vld [vmem:[%s1 + $0xc0] sm:$0xff]
    %v397 = vld [vmem:[%s1 + $0xc8] sm:$0xff]
    %v398 = vld [vmem:[%s1 + $0xd0] sm:$0xff]
    %v399 = vld [vmem:[%s1 + $0xd8] sm:$0xff]
    %v400 = vld [vmem:[%s1 + $0xe0] sm:$0xff]
    %v401 = vld [vmem:[%s1 + $0xe8] sm:$0xff]
    %v402 = vld [vmem:[%s1 + $0xf0] sm:$0xff]
    %v403 = vld [vmem:[%s1 + $0xf8] sm:$0xff]
    %v404 = vld [vmem:[%s1 + $0x100] sm:$0xff]
    %v405 = vld [vmem:[%s1 + $0x108] sm:$0xff]
    %v406 = vld [vmem:[%s1 + $0x110] sm:$0xff]
    %v407 = vld [vmem:[%s1 + $0x118] sm:$0xff]
    %v408 = vld [vmem:[%s1 + $0x120] sm:$0xff]
    %v409 = vld [vmem:[%s1 + $0x128] sm:$0xff]
    %v410 = vld [vmem:[%s1 + $0x130] sm:$0xff]
    %v411 = vld [vmem:[%s1 + $0x138] sm:$0xff]
    %v412 = vld [vmem:[%s1 + $0x140] sm:$0xff]
    %v413 = vld [vmem:[%s1 + $0x148] sm:$0xff]
    %v414 = vld [vmem:[%s1 + $0x150] sm:$0xff]
    %v415 = vld [vmem:[%s1 + $0x158] sm:$0xff]
    %v416 = vld [vmem:[%s1 + $0x160] sm:$0xff]
    %v417 = vld [vmem:[%s1 + $0x168] sm:$0xff]
    %v418 = vld [vmem:[%s1 + $0x170] sm:$0xff]
    %v419 = vld [vmem:[%s1 + $0x178] sm:$0xff]
    %v420 = vld [vmem:[%s1 + $0x180] sm:$0xff]
    %v421 = vld [vmem:[%s1 + $0x188] sm:$0xff]
    %v422 = vld [vmem:[%s1 + $0x190] sm:$0xff]
    %v423 = vld [vmem:[%s1 + $0x198] sm:$0xff]
    %v424 = vld [vmem:[%s1 + $0x1a0] sm:$0xff]
    %v425 = vld [vmem:[%s1 + $0x1a8] sm:$0xff]
    %v426 = vld [vmem:[%s1 + $0x1b0] sm:$0xff]
    %v427 = vld [vmem:[%s1 + $0x1b8] sm:$0xff]
    %v428 = vld [vmem:[%s1 + $0x1c0] sm:$0xff]
    %v429 = vld [vmem:[%s1 + $0x1c8] sm:$0xff]
    %v430 = vld [vmem:[%s1 + $0x1d0] sm:$0xff]
    %v431 = vld [vmem:[%s1 + $0x1d8] sm:$0xff]
    %v432 = vld [vmem:[%s1 + $0x1e0] sm:$0xff]
    %v433 = vld [vmem:[%s1 + $0x1e8] sm:$0xff]
    %v434 = vld [vmem:[%s1 + $0x1f0] sm:$0xff]
    %v435 = vld [vmem:[%s1 + $0x1f8] sm:$0xff]
    %v436 = vld [vmem:[%s1 + $0x200] sm:$0xff]
    %v437 = vld [vmem:[%s1 + $0x208] sm:$0xff]
    %v438 = vld [vmem:[%s1 + $0x210] sm:$0xff]
    %v439 = vld [vmem:[%s1 + $0x218] sm:$0xff]
    %v440 = vld [vmem:[%s1 + $0x220] sm:$0xff]
    %v441 = vld [vmem:[%s1 + $0x228] sm:$0xff]
    %v442 = vld [vmem:[%s1 + $0x230] sm:$0xff]
    %v443 = vld [vmem:[%s1 + $0x238] sm:$0xff]
    %v444 = vld [vmem:[%s1 + $0x240] sm:$0xff]
    %v445 = vld [vmem:[%s1 + $0x248] sm:$0xff]
    %v446 = vld [vmem:[%s1 + $0x250] sm:$0xff]
    %v447 = vld [vmem:[%s1 + $0x258] sm:$0xff]
    %v448 = vld [vmem:[%s1 + $0x260] sm:$0xff]
    %v449 = vld [vmem:[%s1 + $0x268] sm:$0xff]
    %v450 = vld [vmem:[%s1 + $0x270] sm:$0xff]
    %v451 = vld [vmem:[%s1 + $0x278] sm:$0xff]
    %v452 = vld [vmem:[%s1 + $0x280] sm:$0xff]
    %v453 = vld [vmem:[%s1 + $0x288] sm:$0xff]
    %v454 = vld [vmem:[%s1 + $0x290] sm:$0xff]
    %v455 = vld [vmem:[%s1 + $0x298] sm:$0xff]
    %v456 = vld [vmem:[%s1 + $0x2a0] sm:$0xff]
    %v457 = vld [vmem:[%s1 + $0x2a8] sm:$0xff]
    %v458 = vld [vmem:[%s1 + $0x2b0] sm:$0xff]
    %v459 = vld [vmem:[%s1 + $0x2b8] sm:$0xff]
    %v460 = vld [vmem:[%s1 + $0x2c0] sm:$0xff]
    %v461 = vld [vmem:[%s1 + $0x2c8] sm:$0xff]
    %v462 = vld [vmem:[%s1 + $0x2d0] sm:$0xff]
    %v463 = vld [vmem:[%s1 + $0x2d8] sm:$0xff]
    %v464 = vld [vmem:[%s1 + $0x2e0] sm:$0xff]
    %v465 = vld [vmem:[%s1 + $0x2e8] sm:$0xff]
    %v466 = vld [vmem:[%s1 + $0x2f0] sm:$0xff]
    %v467 = vld [vmem:[%s1 + $0x2f8] sm:$0xff]
    %v468 = vld [vmem:[%s1 + $0x300] sm:$0xff]
    %v469 = vld [vmem:[%s1 + $0x308] sm:$0xff]
    %v470 = vld [vmem:[%s1 + $0x310] sm:$0xff]
    %v471 = vld [vmem:[%s1 + $0x318] sm:$0xff]
    %v472 = vld [vmem:[%s1 + $0x320] sm:$0xff]
    %v473 = vld [vmem:[%s1 + $0x328] sm:$0xff]
    %v474 = vld [vmem:[%s1 + $0x330] sm:$0xff]
    %v475 = vld [vmem:[%s1 + $0x338] sm:$0xff]
    %v476 = vld [vmem:[%s1 + $0x340] sm:$0xff]
    %v477 = vld [vmem:[%s1 + $0x348] sm:$0xff]
    %v478 = vld [vmem:[%s1 + $0x350] sm:$0xff]
    %v479 = vld [vmem:[%s1 + $0x358] sm:$0xff]
    %v480 = vld [vmem:[%s1 + $0x360] sm:$0xff]
    %v481 = vld [vmem:[%s1 + $0x368] sm:$0xff]
    %v482 = vld [vmem:[%s1 + $0x370] sm:$0xff]
    %v483 = vld [vmem:[%s1 + $0x378] sm:$0xff]
    %v484 = vld [vmem:[%s1 + $0x380] sm:$0xff]
    %v485 = vld [vmem:[%s1 + $0x388] sm:$0xff]
    %v486 = vld [vmem:[%s1 + $0x390] sm:$0xff]
    %v487 = vld [vmem:[%s1 + $0x398] sm:$0xff]
    %v488 = vld [vmem:[%s1 + $0x3a0] sm:$0xff]
    %v489 = vld [vmem:[%s1 + $0x3a8] sm:$0xff]
    %v490 = vld [vmem:[%s1 + $0x3b0] sm:$0xff]
    %v491 = vld [vmem:[%s1 + $0x3b8] sm:$0xff]
    %v492 = vld [vmem:[%s1 + $0x3c0] sm:$0xff]
    %v493 = vld [vmem:[%s1 + $0x3c8] sm:$0xff]
    %v494 = vld [vmem:[%s1 + $0x3d0] sm:$0xff]
    %v495 = vld [vmem:[%s1 + $0x3d8] sm:$0xff]
    %v496 = vld [vmem:[%s1 + $0x3e0] sm:$0xff]
    %v497 = vld [vmem:[%s1 + $0x3e8] sm:$0xff]
    %v498 = vld [vmem:[%s1 + $0x3f0] sm:$0xff]
    %v499 = vld [vmem:[%s1 + $0x3f8] sm:$0xff]
    %v500 = vld [vmem:[%s1 + $0x400] sm:$0xff]
    %v501 = vld [vmem:[%s1 + $0x408] sm:$0xff]
    %v502 = vld [vmem:[%s1 + $0x410] sm:$0xff]
    %v503 = vld [vmem:[%s1 + $0x418] sm:$0xff]
    %v504 = vld [vmem:[%s1 + $0x420] sm:$0xff]
    %v505 = vld [vmem:[%s1 + $0x428] sm:$0xff]
    %v506 = vld [vmem:[%s1 + $0x430] sm:$0xff]
    %v507 = vld [vmem:[%s1 + $0x438] sm:$0xff]
    %v508 = vld [vmem:[%s1 + $0x440] sm:$0xff]
    %v509 = vld [vmem:[%s1 + $0x448] sm:$0xff]
    %v510 = vld [vmem:[%s1 + $0x450] sm:$0xff]
    %v511 = vld [vmem:[%s1 + $0x458] sm:$0xff]
    %v512 = vld [vmem:[%s1 + $0x460] sm:$0xff]
    %v513 = vld [vmem:[%s1 + $0x468] sm:$0xff]
    %v514 = vld [vmem:[%s1 + $0x470] sm:$0xff]
    %v515 = vld [vmem:[%s1 + $0x478] sm:$0xff]
    %v516 = vld [vmem:[%s1 + $0x480] sm:$0xff]
    %v517 = vld [vmem:[%s1 + $0x488] sm:$0xff]
    %v518 = vld [vmem:[%s1 + $0x490] sm:$0xff]
    %v519 = vld [vmem:[%s1 + $0x498] sm:$0xff]
    %v520 = vld [vmem:[%s1 + $0x4a0] sm:$0xff]
    %v521 = vld [vmem:[%s1 + $0x4a8] sm:$0xff]
    %v522 = vld [vmem:[%s1 + $0x4b0] sm:$0xff]
    %v523 = vld [vmem:[%s1 + $0x4b8] sm:$0xff]
    %v524 = vld [vmem:[%s1 + $0x4c0] sm:$0xff]
    %v525 = vld [vmem:[%s1 + $0x4c8] sm:$0xff]
    %v526 = vld [vmem:[%s1 + $0x4d0] sm:$0xff]
    %v527 = vld [vmem:[%s1 + $0x4d8] sm:$0xff]
    %v528 = vld [vmem:[%s1 + $0x4e0] sm:$0xff]
    %v529 = vld [vmem:[%s1 + $0x4e8] sm:$0xff]
    %v530 = vld [vmem:[%s1 + $0x4f0] sm:$0xff]
    %v531 = vld [vmem:[%s1 + $0x4f8] sm:$0xff]
    %v532 = vld [vmem:[%s1 + $0x500] sm:$0xff]
    %v533 = vld [vmem:[%s1 + $0x508] sm:$0xff]
    %v534 = vld [vmem:[%s1 + $0x510] sm:$0xff]
    %v535 = vld [vmem:[%s1 + $0x518] sm:$0xff]
    %v536 = vld [vmem:[%s1 + $0x520] sm:$0xff]
    %v537 = vld [vmem:[%s1 + $0x528] sm:$0xff]
    %v538 = vld [vmem:[%s1 + $0x530] sm:$0xff]
    %v539 = vld [vmem:[%s1 + $0x538] sm:$0xff]
    %v540 = vld [vmem:[%s1 + $0x540] sm:$0xff]
    %v541 = vld [vmem:[%s1 + $0x548] sm:$0xff]
    %v542 = vld [vmem:[%s1 + $0x550] sm:$0xff]
    %v543 = vld [vmem:[%s1 + $0x558] sm:$0xff]
    %v544 = vld [vmem:[%s1 + $0x560] sm:$0xff]
    %v545 = vld [vmem:[%s1 + $0x568] sm:$0xff]
    %v546 = vld [vmem:[%s1 + $0x570] sm:$0xff]
    %v547 = vld [vmem:[%s1 + $0x578] sm:$0xff]
    %v548 = vld [vmem:[%s1 + $0x580] sm:$0xff]
    %v549 = vld [vmem:[%s1 + $0x588] sm:$0xff]
    %v550 = vld [vmem:[%s1 + $0x590] sm:$0xff]
    %v551 = vld [vmem:[%s1 + $0x598] sm:$0xff]
    %v552 = vld [vmem:[%s1 + $0x5a0] sm:$0xff]
    %v553 = vld [vmem:[%s1 + $0x5a8] sm:$0xff]
    %v554 = vld [vmem:[%s1 + $0x5b0] sm:$0xff]
    %v555 = vld [vmem:[%s1 + $0x5b8] sm:$0xff]
    %v556 = vld [vmem:[%s1 + $0x5c0] sm:$0xff]
    %v557 = vld [vmem:[%s1 + $0x5c8] sm:$0xff]
    %v558 = vld [vmem:[%s1 + $0x5d0] sm:$0xff]
    %v559 = vld [vmem:[%s1 + $0x5d8] sm:$0xff]
    %v560 = vld [vmem:[%s1 + $0x5e0] sm:$0xff]
    %v561 = vld [vmem:[%s1 + $0x5e8] sm:$0xff]
    %v562 = vld [vmem:[%s1 + $0x5f0] sm:$0xff]
    %v563 = vld [vmem:[%s1 + $0x5f8] sm:$0xff]
    %v564 = vld [vmem:[%s1 + $0x600] sm:$0xff]
    %v565 = vld [vmem:[%s1 + $0x608] sm:$0xff]
    %v566 = vld [vmem:[%s1 + $0x610] sm:$0xff]
    %v567 = vld [vmem:[%s1 + $0x618] sm:$0xff]
    %v568 = vld [vmem:[%s2] sm:$0xf]
    %v570 = vlaneseq
    %v571 = vshrl.u32 %v570, 7
    %v572 = vsub.s32 0, %v571
    %v573 = vrot.slane %v568, %v572
    %v574 = vlaneseq
    %v575 = vshrl.u32 %v574, 7
    %v576 = vsub.s32 1, %v575
    %v577 = vrot.slane %v568, %v576
    %v578 = vlaneseq
    %v579 = vshrl.u32 %v578, 7
    %v580 = vsub.s32 2, %v579
    %v581 = vrot.slane %v568, %v580
    %v582 = vlaneseq
    %v583 = vshrl.u32 %v582, 7
    %v584 = vsub.s32 3, %v583
    %v585 = vrot.slane %v568, %v584
    %v786 = vunpack.c.l.b16 %v372
    %v787 = vunpack.c.h.b16 %v372
    %v788 = vunpack.c.l.b16 %v373
    %v789 = vunpack.c.h.b16 %v373
    %v790 = vunpack.c.l.b16 %v374
    %v791 = vunpack.c.h.b16 %v374
    %v792 = vunpack.c.l.b16 %v375
    %v793 = vunpack.c.h.b16 %v375
    %v794 = vunpack.c.l.b16 %v376
    %v795 = vunpack.c.h.b16 %v376
    %v796 = vunpack.c.l.b16 %v377
    %v797 = vunpack.c.h.b16 %v377
    %v798 = vunpack.c.l.b16 %v378
    %v799 = vunpack.c.h.b16 %v378
    %v800 = vunpack.c.l.b16 %v379
    %v801 = vunpack.c.h.b16 %v379
    %v802 = vunpack.c.l.b16 %v380
    %v803 = vunpack.c.h.b16 %v380
    %v804 = vunpack.c.l.b16 %v381
    %v805 = vunpack.c.h.b16 %v381
    %v806 = vunpack.c.l.b16 %v382
    %v807 = vunpack.c.h.b16 %v382
    %v808 = vunpack.c.l.b16 %v383
    %v809 = vunpack.c.h.b16 %v383
    %v810 = vunpack.c.l.b16 %v384
    %v811 = vunpack.c.h.b16 %v384
    %v812 = vunpack.c.l.b16 %v385
    %v813 = vunpack.c.h.b16 %v385
    %v814 = vunpack.c.l.b16 %v386
    %v815 = vunpack.c.h.b16 %v386
    %v816 = vunpack.c.l.b16 %v387
    %v817 = vunpack.c.h.b16 %v387
    %v818 = vunpack.c.l.b16 %v388
    %v819 = vunpack.c.h.b16 %v388
    %v820 = vunpack.c.l.b16 %v389
    %v821 = vunpack.c.h.b16 %v389
    %v822 = vunpack.c.l.b16 %v390
    %v823 = vunpack.c.h.b16 %v390
    %v824 = vunpack.c.l.b16 %v391
    %v825 = vunpack.c.h.b16 %v391
    %v826 = vunpack.c.l.b16 %v392
    %v827 = vunpack.c.h.b16 %v392
    %v828 = vunpack.c.l.b16 %v393
    %v829 = vunpack.c.h.b16 %v393
    %v830 = vunpack.c.l.b16 %v394
    %v831 = vunpack.c.h.b16 %v394
    %v832 = vunpack.c.l.b16 %v395
    %v833 = vunpack.c.h.b16 %v395
    %v834 = vunpack.c.l.b16 %v396
    %v835 = vunpack.c.h.b16 %v396
    %v836 = vunpack.c.l.b16 %v397
    %v837 = vunpack.c.h.b16 %v397
    %v838 = vunpack.c.l.b16 %v398
    %v839 = vunpack.c.h.b16 %v398
    %v840 = vunpack.c.l.b16 %v399
    %v841 = vunpack.c.h.b16 %v399
    %v842 = vunpack.c.l.b16 %v400
    %v843 = vunpack.c.h.b16 %v400
    %v844 = vunpack.c.l.b16 %v401
    %v845 = vunpack.c.h.b16 %v401
    %v846 = vunpack.c.l.b16 %v402
    %v847 = vunpack.c.h.b16 %v402
    %v848 = vunpack.c.l.b16 %v403
    %v849 = vunpack.c.h.b16 %v403
    %v850 = vunpack.c.l.b16 %v404
    %v851 = vunpack.c.h.b16 %v404
    %v852 = vunpack.c.l.b16 %v405
    %v853 = vunpack.c.h.b16 %v405
    %v854 = vunpack.c.l.b16 %v406
    %v855 = vunpack.c.h.b16 %v406
    %v856 = vunpack.c.l.b16 %v407
    %v857 = vunpack.c.h.b16 %v407
    %v858 = vunpack.c.l.b16 %v408
    %v859 = vunpack.c.h.b16 %v408
    %v860 = vunpack.c.l.b16 %v409
    %v861 = vunpack.c.h.b16 %v409
    %v862 = vunpack.c.l.b16 %v410
    %v863 = vunpack.c.h.b16 %v410
    %v864 = vunpack.c.l.b16 %v411
    %v865 = vunpack.c.h.b16 %v411
    %v866 = vunpack.c.l.b16 %v412
    %v867 = vunpack.c.h.b16 %v412
    %v868 = vunpack.c.l.b16 %v413
    %v869 = vunpack.c.h.b16 %v413
    %v870 = vunpack.c.l.b16 %v414
    %v871 = vunpack.c.h.b16 %v414
    %v872 = vunpack.c.l.b16 %v415
    %v873 = vunpack.c.h.b16 %v415
    %v874 = vunpack.c.l.b16 %v416
    %v875 = vunpack.c.h.b16 %v416
    %v876 = vunpack.c.l.b16 %v417
    %v877 = vunpack.c.h.b16 %v417
    %v878 = vunpack.c.l.b16 %v418
    %v879 = vunpack.c.h.b16 %v418
    %v880 = vunpack.c.l.b16 %v419
    %v881 = vunpack.c.h.b16 %v419
    %v882 = vunpack.c.l.b16 %v420
    %v883 = vunpack.c.h.b16 %v420
    %v884 = vunpack.c.l.b16 %v421
    %v885 = vunpack.c.h.b16 %v421
    %v886 = vunpack.c.l.b16 %v422
    %v887 = vunpack.c.h.b16 %v422
    %v888 = vunpack.c.l.b16 %v423
    %v889 = vunpack.c.h.b16 %v423
    %v890 = vunpack.c.l.b16 %v424
    %v891 = vunpack.c.h.b16 %v424
    %v892 = vunpack.c.l.b16 %v425
    %v893 = vunpack.c.h.b16 %v425
    %v894 = vunpack.c.l.b16 %v426
    %v895 = vunpack.c.h.b16 %v426
    %v896 = vunpack.c.l.b16 %v427
    %v897 = vunpack.c.h.b16 %v427
    %v898 = vunpack.c.l.b16 %v428
    %v899 = vunpack.c.h.b16 %v428
    %v900 = vunpack.c.l.b16 %v429
    %v901 = vunpack.c.h.b16 %v429
    %v902 = vunpack.c.l.b16 %v430
    %v903 = vunpack.c.h.b16 %v430
    %v904 = vunpack.c.l.b16 %v431
    %v905 = vunpack.c.h.b16 %v431
    %v906 = vunpack.c.l.b16 %v432
    %v907 = vunpack.c.h.b16 %v432
    %v908 = vunpack.c.l.b16 %v433
    %v909 = vunpack.c.h.b16 %v433
    %v910 = vunpack.c.l.b16 %v434
    %v911 = vunpack.c.h.b16 %v434
    %v912 = vunpack.c.l.b16 %v435
    %v913 = vunpack.c.h.b16 %v435
    %v914 = vunpack.c.l.b16 %v436
    %v915 = vunpack.c.h.b16 %v436
    %v916 = vunpack.c.l.b16 %v437
    %v917 = vunpack.c.h.b16 %v437
    %v918 = vunpack.c.l.b16 %v438
    %v919 = vunpack.c.h.b16 %v438
    %v920 = vunpack.c.l.b16 %v439
    %v921 = vunpack.c.h.b16 %v439
    %v922 = vunpack.c.l.b16 %v440
    %v923 = vunpack.c.h.b16 %v440
    %v924 = vunpack.c.l.b16 %v441
    %v925 = vunpack.c.h.b16 %v441
    %v926 = vunpack.c.l.b16 %v442
    %v927 = vunpack.c.h.b16 %v442
    %v928 = vunpack.c.l.b16 %v443
    %v929 = vunpack.c.h.b16 %v443
    %v930 = vunpack.c.l.b16 %v444
    %v931 = vunpack.c.h.b16 %v444
    %v932 = vunpack.c.l.b16 %v445
    %v933 = vunpack.c.h.b16 %v445
    %v934 = vunpack.c.l.b16 %v446
    %v935 = vunpack.c.h.b16 %v446
    %v936 = vunpack.c.l.b16 %v447
    %v937 = vunpack.c.h.b16 %v447
    %v938 = vunpack.c.l.b16 %v448
    %v939 = vunpack.c.h.b16 %v448
    %v940 = vunpack.c.l.b16 %v449
    %v941 = vunpack.c.h.b16 %v449
    %v942 = vunpack.c.l.b16 %v450
    %v943 = vunpack.c.h.b16 %v450
    %v944 = vunpack.c.l.b16 %v451
    %v945 = vunpack.c.h.b16 %v451
    %v946 = vunpack.c.l.b16 %v452
    %v947 = vunpack.c.h.b16 %v452
    %v948 = vunpack.c.l.b16 %v453
    %v949 = vunpack.c.h.b16 %v453
    %v950 = vunpack.c.l.b16 %v454
    %v951 = vunpack.c.h.b16 %v454
    %v952 = vunpack.c.l.b16 %v455
    %v953 = vunpack.c.h.b16 %v455
    %v954 = vunpack.c.l.b16 %v456
    %v955 = vunpack.c.h.b16 %v456
    %v956 = vunpack.c.l.b16 %v457
    %v957 = vunpack.c.h.b16 %v457
    %v958 = vunpack.c.l.b16 %v458
    %v959 = vunpack.c.h.b16 %v458
    %v960 = vunpack.c.l.b16 %v459
    %v961 = vunpack.c.h.b16 %v459
    %v962 = vunpack.c.l.b16 %v460
    %v963 = vunpack.c.h.b16 %v460
    %v964 = vunpack.c.l.b16 %v461
    %v965 = vunpack.c.h.b16 %v461
    %v966 = vunpack.c.l.b16 %v462
    %v967 = vunpack.c.h.b16 %v462
    %v968 = vunpack.c.l.b16 %v463
    %v969 = vunpack.c.h.b16 %v463
    %v970 = vunpack.c.l.b16 %v464
    %v971 = vunpack.c.h.b16 %v464
    %v972 = vunpack.c.l.b16 %v465
    %v973 = vunpack.c.h.b16 %v465
    %v974 = vunpack.c.l.b16 %v466
    %v975 = vunpack.c.h.b16 %v466
    %v976 = vunpack.c.l.b16 %v467
    %v977 = vunpack.c.h.b16 %v467
    %v978 = vunpack.c.l.b16 %v468
    %v979 = vunpack.c.h.b16 %v468
    %v980 = vunpack.c.l.b16 %v469
    %v981 = vunpack.c.h.b16 %v469
    %v982 = vunpack.c.l.b16 %v470
    %v983 = vunpack.c.h.b16 %v470
    %v984 = vunpack.c.l.b16 %v471
    %v985 = vunpack.c.h.b16 %v471
    %v986 = vunpack.c.l.b16 %v472
    %v987 = vunpack.c.h.b16 %v472
    %v988 = vunpack.c.l.b16 %v473
    %v989 = vunpack.c.h.b16 %v473
    %v990 = vunpack.c.l.b16 %v474
    %v991 = vunpack.c.h.b16 %v474
    %v992 = vunpack.c.l.b16 %v475
    %v993 = vunpack.c.h.b16 %v475
    %v994 = vunpack.c.l.b16 %v476
    %v995 = vunpack.c.h.b16 %v476
    %v996 = vunpack.c.l.b16 %v477
    %v997 = vunpack.c.h.b16 %v477
    %v998 = vunpack.c.l.b16 %v478
    %v999 = vunpack.c.h.b16 %v478
    %v1000 = vunpack.c.l.b16 %v479
    %v1001 = vunpack.c.h.b16 %v479
    %v1002 = vunpack.c.l.b16 %v480
    %v1003 = vunpack.c.h.b16 %v480
    %v1004 = vunpack.c.l.b16 %v481
    %v1005 = vunpack.c.h.b16 %v481
    %v1006 = vunpack.c.l.b16 %v482
    %v1007 = vunpack.c.h.b16 %v482
    %v1008 = vunpack.c.l.b16 %v483
    %v1009 = vunpack.c.h.b16 %v483
    %v1010 = vunpack.c.l.b16 %v484
    %v1011 = vunpack.c.h.b16 %v484
    %v1012 = vunpack.c.l.b16 %v485
    %v1013 = vunpack.c.h.b16 %v485
    %v1014 = vunpack.c.l.b16 %v486
    %v1015 = vunpack.c.h.b16 %v486
    %v1016 = vunpack.c.l.b16 %v487
    %v1017 = vunpack.c.h.b16 %v487
    %v1018 = vunpack.c.l.b16 %v488
    %v1019 = vunpack.c.h.b16 %v488
    %v1020 = vunpack.c.l.b16 %v489
    %v1021 = vunpack.c.h.b16 %v489
    %v1022 = vunpack.c.l.b16 %v490
    %v1023 = vunpack.c.h.b16 %v490
    %v1024 = vunpack.c.l.b16 %v491
    %v1025 = vunpack.c.h.b16 %v491
    %v1026 = vunpack.c.l.b16 %v492
    %v1027 = vunpack.c.h.b16 %v492
    %v1028 = vunpack.c.l.b16 %v493
    %v1029 = vunpack.c.h.b16 %v493
    %v1030 = vunpack.c.l.b16 %v494
    %v1031 = vunpack.c.h.b16 %v494
    %v1032 = vunpack.c.l.b16 %v495
    %v1033 = vunpack.c.h.b16 %v495
    %v1034 = vunpack.c.l.b16 %v496
    %v1035 = vunpack.c.h.b16 %v496
    %v1036 = vunpack.c.l.b16 %v497
    %v1037 = vunpack.c.h.b16 %v497
    %v1038 = vunpack.c.l.b16 %v498
    %v1039 = vunpack.c.h.b16 %v498
    %v1040 = vunpack.c.l.b16 %v499
    %v1041 = vunpack.c.h.b16 %v499
    %v1042 = vunpack.c.l.b16 %v500
    %v1043 = vunpack.c.h.b16 %v500
    %v1044 = vunpack.c.l.b16 %v501
    %v1045 = vunpack.c.h.b16 %v501
    %v1046 = vunpack.c.l.b16 %v502
    %v1047 = vunpack.c.h.b16 %v502
    %v1048 = vunpack.c.l.b16 %v503
    %v1049 = vunpack.c.h.b16 %v503
    %v1050 = vunpack.c.l.b16 %v504
    %v1051 = vunpack.c.h.b16 %v504
    %v1052 = vunpack.c.l.b16 %v505
    %v1053 = vunpack.c.h.b16 %v505
    %v1054 = vunpack.c.l.b16 %v506
    %v1055 = vunpack.c.h.b16 %v506
    %v1056 = vunpack.c.l.b16 %v507
    %v1057 = vunpack.c.h.b16 %v507
    %v1058 = vunpack.c.l.b16 %v508
    %v1059 = vunpack.c.h.b16 %v508
    %v1060 = vunpack.c.l.b16 %v509
    %v1061 = vunpack.c.h.b16 %v509
    %v1062 = vunpack.c.l.b16 %v510
    %v1063 = vunpack.c.h.b16 %v510
    %v1064 = vunpack.c.l.b16 %v511
    %v1065 = vunpack.c.h.b16 %v511
    %v1066 = vunpack.c.l.b16 %v512
    %v1067 = vunpack.c.h.b16 %v512
    %v1068 = vunpack.c.l.b16 %v513
    %v1069 = vunpack.c.h.b16 %v513
    %v1070 = vunpack.c.l.b16 %v514
    %v1071 = vunpack.c.h.b16 %v514
    %v1072 = vunpack.c.l.b16 %v515
    %v1073 = vunpack.c.h.b16 %v515
    %v1074 = vunpack.c.l.b16 %v516
    %v1075 = vunpack.c.h.b16 %v516
    %v1076 = vunpack.c.l.b16 %v517
    %v1077 = vunpack.c.h.b16 %v517
    %v1078 = vunpack.c.l.b16 %v518
    %v1079 = vunpack.c.h.b16 %v518
    %v1080 = vunpack.c.l.b16 %v519
    %v1081 = vunpack.c.h.b16 %v519
    %v1082 = vunpack.c.l.b16 %v520
    %v1083 = vunpack.c.h.b16 %v520
    %v1084 = vunpack.c.l.b16 %v521
    %v1085 = vunpack.c.h.b16 %v521
    %v1086 = vunpack.c.l.b16 %v522
    %v1087 = vunpack.c.h.b16 %v522
    %v1088 = vunpack.c.l.b16 %v523
    %v1089 = vunpack.c.h.b16 %v523
    %v1090 = vunpack.c.l.b16 %v524
    %v1091 = vunpack.c.h.b16 %v524
    %v1092 = vunpack.c.l.b16 %v525
    %v1093 = vunpack.c.h.b16 %v525
    %v1094 = vunpack.c.l.b16 %v526
    %v1095 = vunpack.c.h.b16 %v526
    %v1096 = vunpack.c.l.b16 %v527
    %v1097 = vunpack.c.h.b16 %v527
    %v1098 = vunpack.c.l.b16 %v528
    %v1099 = vunpack.c.h.b16 %v528
    %v1100 = vunpack.c.l.b16 %v529
    %v1101 = vunpack.c.h.b16 %v529
    %v1102 = vunpack.c.l.b16 %v530
    %v1103 = vunpack.c.h.b16 %v530
    %v1104 = vunpack.c.l.b16 %v531
    %v1105 = vunpack.c.h.b16 %v531
    %v1106 = vunpack.c.l.b16 %v532
    %v1107 = vunpack.c.h.b16 %v532
    %v1108 = vunpack.c.l.b16 %v533
    %v1109 = vunpack.c.h.b16 %v533
    %v1110 = vunpack.c.l.b16 %v534
    %v1111 = vunpack.c.h.b16 %v534
    %v1112 = vunpack.c.l.b16 %v535
    %v1113 = vunpack.c.h.b16 %v535
    %v1114 = vunpack.c.l.b16 %v536
    %v1115 = vunpack.c.h.b16 %v536
    %v1116 = vunpack.c.l.b16 %v537
    %v1117 = vunpack.c.h.b16 %v537
    %v1118 = vunpack.c.l.b16 %v538
    %v1119 = vunpack.c.h.b16 %v538
    %v1120 = vunpack.c.l.b16 %v539
    %v1121 = vunpack.c.h.b16 %v539
    %v1122 = vunpack.c.l.b16 %v540
    %v1123 = vunpack.c.h.b16 %v540
    %v1124 = vunpack.c.l.b16 %v541
    %v1125 = vunpack.c.h.b16 %v541
    %v1126 = vunpack.c.l.b16 %v542
    %v1127 = vunpack.c.h.b16 %v542
    %v1128 = vunpack.c.l.b16 %v543
    %v1129 = vunpack.c.h.b16 %v543
    %v1130 = vunpack.c.l.b16 %v544
    %v1131 = vunpack.c.h.b16 %v544
    %v1132 = vunpack.c.l.b16 %v545
    %v1133 = vunpack.c.h.b16 %v545
    %v1134 = vunpack.c.l.b16 %v546
    %v1135 = vunpack.c.h.b16 %v546
    %v1136 = vunpack.c.l.b16 %v547
    %v1137 = vunpack.c.h.b16 %v547
    %v1138 = vunpack.c.l.b16 %v548
    %v1139 = vunpack.c.h.b16 %v548
    %v1140 = vunpack.c.l.b16 %v549
    %v1141 = vunpack.c.h.b16 %v549
    %v1142 = vunpack.c.l.b16 %v550
    %v1143 = vunpack.c.h.b16 %v550
    %v1144 = vunpack.c.l.b16 %v551
    %v1145 = vunpack.c.h.b16 %v551
    %v1146 = vunpack.c.l.b16 %v552
    %v1147 = vunpack.c.h.b16 %v552
    %v1148 = vunpack.c.l.b16 %v553
    %v1149 = vunpack.c.h.b16 %v553
    %v1150 = vunpack.c.l.b16 %v554
    %v1151 = vunpack.c.h.b16 %v554
    %v1152 = vunpack.c.l.b16 %v555
    %v1153 = vunpack.c.h.b16 %v555
    %v1154 = vunpack.c.l.b16 %v556
    %v1155 = vunpack.c.h.b16 %v556
    %v1156 = vunpack.c.l.b16 %v557
    %v1157 = vunpack.c.h.b16 %v557
    %v1158 = vunpack.c.l.b16 %v558
    %v1159 = vunpack.c.h.b16 %v558
    %v1160 = vunpack.c.l.b16 %v559
    %v1161 = vunpack.c.h.b16 %v559
    %v1162 = vunpack.c.l.b16 %v560
    %v1163 = vunpack.c.h.b16 %v560
    %v1164 = vunpack.c.l.b16 %v561
    %v1165 = vunpack.c.h.b16 %v561
    %v1166 = vunpack.c.l.b16 %v562
    %v1167 = vunpack.c.h.b16 %v562
    %v1168 = vunpack.c.l.b16 %v563
    %v1169 = vunpack.c.h.b16 %v563
    %v1170 = vunpack.c.l.b16 %v564
    %v1171 = vunpack.c.h.b16 %v564
    %v1172 = vunpack.c.l.b16 %v565
    %v1173 = vunpack.c.h.b16 %v565
    %v1174 = vunpack.c.l.b16 %v566
    %v1175 = vunpack.c.h.b16 %v566
    %v1176 = vunpack.c.l.b16 %v567
    %v1177 = vunpack.c.h.b16 %v567
    %v1178 = vpack.c.b16 %v790, %v786
    %v1179 = vpack.c.b16 %v791, %v787
    %v1180 = vpack.c.b16 %v792, %v788
    %v1181 = vpack.c.b16 %v793, %v789
    %v1182 = vpack.c.b16 %v798, %v794
    %v1183 = vpack.c.b16 %v799, %v795
    %v1184 = vpack.c.b16 %v800, %v796
    %v1185 = vpack.c.b16 %v801, %v797
    %v1186 = vpack.c.b16 %v806, %v802
    %v1187 = vpack.c.b16 %v807, %v803
    %v1188 = vpack.c.b16 %v808, %v804
    %v1189 = vpack.c.b16 %v809, %v805
    %v1190 = vpack.c.b16 %v814, %v810
    %v1191 = vpack.c.b16 %v815, %v811
    %v1192 = vpack.c.b16 %v816, %v812
    %v1193 = vpack.c.b16 %v817, %v813
    %v1194 = vpack.c.b16 %v822, %v818
    %v1195 = vpack.c.b16 %v823, %v819
    %v1196 = vpack.c.b16 %v824, %v820
    %v1197 = vpack.c.b16 %v825, %v821
    %v1198 = vpack.c.b16 %v830, %v826
    %v1199 = vpack.c.b16 %v831, %v827
    %v1200 = vpack.c.b16 %v832, %v828
    %v1201 = vpack.c.b16 %v833, %v829
    %v1202 = vpack.c.b16 %v838, %v834
    %v1203 = vpack.c.b16 %v839, %v835
    %v1204 = vpack.c.b16 %v840, %v836
    %v1205 = vpack.c.b16 %v841, %v837
    %v1206 = vpack.c.b16 %v846, %v842
    %v1207 = vpack.c.b16 %v847, %v843
    %v1208 = vpack.c.b16 %v848, %v844
    %v1209 = vpack.c.b16 %v849, %v845
    %v1210 = vpack.c.b16 %v854, %v850
    %v1211 = vpack.c.b16 %v855, %v851
    %v1212 = vpack.c.b16 %v856, %v852
    %v1213 = vpack.c.b16 %v857, %v853
    %v1214 = vpack.c.b16 %v862, %v858
    %v1215 = vpack.c.b16 %v863, %v859
    %v1216 = vpack.c.b16 %v864, %v860
    %v1217 = vpack.c.b16 %v865, %v861
    %v1218 = vpack.c.b16 %v870, %v866
    %v1219 = vpack.c.b16 %v871, %v867
    %v1220 = vpack.c.b16 %v872, %v868
    %v1221 = vpack.c.b16 %v873, %v869
    %v1222 = vpack.c.b16 %v878, %v874
    %v1223 = vpack.c.b16 %v879, %v875
    %v1224 = vpack.c.b16 %v880, %v876
    %v1225 = vpack.c.b16 %v881, %v877
    %v1226 = vpack.c.b16 %v886, %v882
    %v1227 = vpack.c.b16 %v887, %v883
    %v1228 = vpack.c.b16 %v888, %v884
    %v1229 = vpack.c.b16 %v889, %v885
    %v1230 = vpack.c.b16 %v894, %v890
    %v1231 = vpack.c.b16 %v895, %v891
    %v1232 = vpack.c.b16 %v896, %v892
    %v1233 = vpack.c.b16 %v897, %v893
    %v1234 = vpack.c.b16 %v902, %v898
    %v1235 = vpack.c.b16 %v903, %v899
    %v1236 = vpack.c.b16 %v904, %v900
    %v1237 = vpack.c.b16 %v905, %v901
    %v1238 = vpack.c.b16 %v910, %v906
    %v1239 = vpack.c.b16 %v911, %v907
    %v1240 = vpack.c.b16 %v912, %v908
    %v1241 = vpack.c.b16 %v913, %v909
    %v1242 = vpack.c.b16 %v918, %v914
    %v1243 = vpack.c.b16 %v919, %v915
    %v1244 = vpack.c.b16 %v920, %v916
    %v1245 = vpack.c.b16 %v921, %v917
    %v1246 = vpack.c.b16 %v926, %v922
    %v1247 = vpack.c.b16 %v927, %v923
    %v1248 = vpack.c.b16 %v928, %v924
    %v1249 = vpack.c.b16 %v929, %v925
    %v1250 = vpack.c.b16 %v934, %v930
    %v1251 = vpack.c.b16 %v935, %v931
    %v1252 = vpack.c.b16 %v936, %v932
    %v1253 = vpack.c.b16 %v937, %v933
    %v1254 = vpack.c.b16 %v942, %v938
    %v1255 = vpack.c.b16 %v943, %v939
    %v1256 = vpack.c.b16 %v944, %v940
    %v1257 = vpack.c.b16 %v945, %v941
    %v1258 = vpack.c.b16 %v950, %v946
    %v1259 = vpack.c.b16 %v951, %v947
    %v1260 = vpack.c.b16 %v952, %v948
    %v1261 = vpack.c.b16 %v953, %v949
    %v1262 = vpack.c.b16 %v958, %v954
    %v1263 = vpack.c.b16 %v959, %v955
    %v1264 = vpack.c.b16 %v960, %v956
    %v1265 = vpack.c.b16 %v961, %v957
    %v1266 = vpack.c.b16 %v966, %v962
    %v1267 = vpack.c.b16 %v967, %v963
    %v1268 = vpack.c.b16 %v968, %v964
    %v1269 = vpack.c.b16 %v969, %v965
    %v1270 = vpack.c.b16 %v974, %v970
    %v1271 = vpack.c.b16 %v975, %v971
    %v1272 = vpack.c.b16 %v976, %v972
    %v1273 = vpack.c.b16 %v977, %v973
    %v1274 = vpack.c.b16 %v982, %v978
    %v1275 = vpack.c.b16 %v983, %v979
    %v1276 = vpack.c.b16 %v984, %v980
    %v1277 = vpack.c.b16 %v985, %v981
    %v1278 = vpack.c.b16 %v990, %v986
    %v1279 = vpack.c.b16 %v991, %v987
    %v1280 = vpack.c.b16 %v992, %v988
    %v1281 = vpack.c.b16 %v993, %v989
    %v1282 = vpack.c.b16 %v998, %v994
    %v1283 = vpack.c.b16 %v999, %v995
    %v1284 = vpack.c.b16 %v1000, %v996
    %v1285 = vpack.c.b16 %v1001, %v997
    %v1286 = vpack.c.b16 %v1006, %v1002
    %v1287 = vpack.c.b16 %v1007, %v1003
    %v1288 = vpack.c.b16 %v1008, %v1004
    %v1289 = vpack.c.b16 %v1009, %v1005
    %v1290 = vpack.c.b16 %v1014, %v1010
    %v1291 = vpack.c.b16 %v1015, %v1011
    %v1292 = vpack.c.b16 %v1016, %v1012
    %v1293 = vpack.c.b16 %v1017, %v1013
    %v1294 = vpack.c.b16 %v1022, %v1018
    %v1295 = vpack.c.b16 %v1023, %v1019
    %v1296 = vpack.c.b16 %v1024, %v1020
    %v1297 = vpack.c.b16 %v1025, %v1021
    %v1298 = vpack.c.b16 %v1030, %v1026
    %v1299 = vpack.c.b16 %v1031, %v1027
    %v1300 = vpack.c.b16 %v1032, %v1028
    %v1301 = vpack.c.b16 %v1033, %v1029
    %v1302 = vpack.c.b16 %v1038, %v1034
    %v1303 = vpack.c.b16 %v1039, %v1035
    %v1304 = vpack.c.b16 %v1040, %v1036
    %v1305 = vpack.c.b16 %v1041, %v1037
    %v1306 = vpack.c.b16 %v1046, %v1042
    %v1307 = vpack.c.b16 %v1047, %v1043
    %v1308 = vpack.c.b16 %v1048, %v1044
    %v1309 = vpack.c.b16 %v1049, %v1045
    %v1310 = vpack.c.b16 %v1054, %v1050
    %v1311 = vpack.c.b16 %v1055, %v1051
    %v1312 = vpack.c.b16 %v1056, %v1052
    %v1313 = vpack.c.b16 %v1057, %v1053
    %v1314 = vpack.c.b16 %v1062, %v1058
    %v1315 = vpack.c.b16 %v1063, %v1059
    %v1316 = vpack.c.b16 %v1064, %v1060
    %v1317 = vpack.c.b16 %v1065, %v1061
    %v1318 = vpack.c.b16 %v1070, %v1066
    %v1319 = vpack.c.b16 %v1071, %v1067
    %v1320 = vpack.c.b16 %v1072, %v1068
    %v1321 = vpack.c.b16 %v1073, %v1069
    %v1322 = vpack.c.b16 %v1078, %v1074
    %v1323 = vpack.c.b16 %v1079, %v1075
    %v1324 = vpack.c.b16 %v1080, %v1076
    %v1325 = vpack.c.b16 %v1081, %v1077
    %v1326 = vpack.c.b16 %v1086, %v1082
    %v1327 = vpack.c.b16 %v1087, %v1083
    %v1328 = vpack.c.b16 %v1088, %v1084
    %v1329 = vpack.c.b16 %v1089, %v1085
    %v1330 = vpack.c.b16 %v1094, %v1090
    %v1331 = vpack.c.b16 %v1095, %v1091
    %v1332 = vpack.c.b16 %v1096, %v1092
    %v1333 = vpack.c.b16 %v1097, %v1093
    %v1334 = vpack.c.b16 %v1102, %v1098
    %v1335 = vpack.c.b16 %v1103, %v1099
    %v1336 = vpack.c.b16 %v1104, %v1100
    %v1337 = vpack.c.b16 %v1105, %v1101
    %v1338 = vpack.c.b16 %v1110, %v1106
    %v1339 = vpack.c.b16 %v1111, %v1107
    %v1340 = vpack.c.b16 %v1112, %v1108
    %v1341 = vpack.c.b16 %v1113, %v1109
    %v1342 = vpack.c.b16 %v1118, %v1114
    %v1343 = vpack.c.b16 %v1119, %v1115
    %v1344 = vpack.c.b16 %v1120, %v1116
    %v1345 = vpack.c.b16 %v1121, %v1117
    %v1346 = vpack.c.b16 %v1126, %v1122
    %v1347 = vpack.c.b16 %v1127, %v1123
    %v1348 = vpack.c.b16 %v1128, %v1124
    %v1349 = vpack.c.b16 %v1129, %v1125
    %v1350 = vpack.c.b16 %v1134, %v1130
    %v1351 = vpack.c.b16 %v1135, %v1131
    %v1352 = vpack.c.b16 %v1136, %v1132
    %v1353 = vpack.c.b16 %v1137, %v1133
    %v1354 = vpack.c.b16 %v1142, %v1138
    %v1355 = vpack.c.b16 %v1143, %v1139
    %v1356 = vpack.c.b16 %v1144, %v1140
    %v1357 = vpack.c.b16 %v1145, %v1141
    %v1358 = vpack.c.b16 %v1150, %v1146
    %v1359 = vpack.c.b16 %v1151, %v1147
    %v1360 = vpack.c.b16 %v1152, %v1148
    %v1361 = vpack.c.b16 %v1153, %v1149
    %v1362 = vpack.c.b16 %v1158, %v1154
    %v1363 = vpack.c.b16 %v1159, %v1155
    %v1364 = vpack.c.b16 %v1160, %v1156
    %v1365 = vpack.c.b16 %v1161, %v1157
    %v1366 = vpack.c.b16 %v1166, %v1162
    %v1367 = vpack.c.b16 %v1167, %v1163
    %v1368 = vpack.c.b16 %v1168, %v1164
    %v1369 = vpack.c.b16 %v1169, %v1165
    %v1370 = vpack.c.b16 %v1174, %v1170
    %v1371 = vpack.c.b16 %v1175, %v1171
    %v1372 = vpack.c.b16 %v1176, %v1172
    %v1373 = vpack.c.b16 %v1177, %v1173
    %vm1570 = vcmask 130048
    %v1572 = vsel %vm1570, %v266, 0
    %v1575 = vsel %vm1570, %v273, 0
    %v1578 = vsel %vm1570, %v280, 0
    %v1581 = vsel %vm1570, %v287, 0
    %v1584 = vsel %vm1570, %v294, 0
    %v1587 = vsel %vm1570, %v301, 0
    %v1590 = vsel %vm1570, %v308, 0
    %v1593 = vsel %vm1570, %v315, 0
    %v1596 = vsel %vm1570, %v322, 0
    %v1599 = vsel %vm1570, %v329, 0
    %v1602 = vsel %vm1570, %v336, 0
    %v1605 = vsel %vm1570, %v343, 0
    %v1608 = vsel %vm1570, %v350, 0
    %v1611 = vsel %vm1570, %v357, 0
    %v1614 = vsel %vm1570, %v364, 0
    %v1617 = vsel %vm1570, %v371, 0
    %1619 = vmatprep.subr.bf16.mxu0 %v1179
    %1620 = vmatpush1.bf16.msra.mxu0 %v1178
    %1621 = vmatprep.subr.bf16.mxu0 %v1183
    %1622 = vmatpush1.bf16.msra.mxu0 %v1182
    %1623 = vmatprep.subr.bf16.mxu0 %v1187
    %1624 = vmatpush1.bf16.msra.mxu0 %v1186
    %1625 = vmatprep.subr.bf16.mxu0 %v1191
    %1626 = vmatpush1.bf16.msra.mxu0 %v1190
    %1627 = vmatprep.subr.bf16.mxu0 %v1195
    %1628 = vmatpush1.bf16.msra.mxu0 %v1194
    %1629 = vmatprep.subr.bf16.mxu0 %v1199
    %1630 = vmatpush1.bf16.msra.mxu0 %v1198
    %1631 = vmatprep.subr.bf16.mxu0 %v1203
    %1632 = vmatpush1.bf16.msra.mxu0 %v1202
    %1633 = vmatprep.subr.bf16.mxu0 %v1207
    %1634 = vmatpush1.bf16.msra.mxu0 %v1206
    %1635 = vmatprep.subr.bf16.mxu0 %v1211
    %1636 = vmatpush1.bf16.msra.mxu0 %v1210
    %1637 = vmatprep.subr.bf16.mxu0 %v1215
    %1638 = vmatpush1.bf16.msra.mxu0 %v1214
    %1639 = vmatprep.subr.bf16.mxu0 %v1219
    %1640 = vmatpush1.bf16.msra.mxu0 %v1218
    %1641 = vmatprep.subr.bf16.mxu0 %v1223
    %1642 = vmatpush1.bf16.msra.mxu0 %v1222
    %1643 = vmatprep.subr.bf16.mxu0 %v1227
    %1644 = vmatpush1.bf16.msra.mxu0 %v1226
    %1645 = vmatprep.subr.bf16.mxu0 %v1231
    %1646 = vmatpush1.bf16.msra.mxu0 %v1230
    %1647 = vmatprep.subr.bf16.mxu0 %v1235
    %1648 = vmatpush1.bf16.msra.mxu0 %v1234
    %1649 = vmatprep.subr.bf16.mxu0 %v1239
    %1650 = vmatpush1.bf16.msra.mxu0 %v1238
    %1651 = vmatprep.mubr.bf16.mxu0 %v261
    %1652 = vmatmul.mubr.bf16.gmra.mrb[0].mxu0 %v260
    %v1653 = vpop.f32.mrb[0].mxu0
    %v1654 = vadd.f32 %v573, %v1653
    %v1655 = vpop.f32.mrb[0].mxu0
    %v1656 = vadd.f32 %v577, %v1655
    %v1657 = vpop.f32.mrb[0].mxu0
    %v1658 = vadd.f32 %v573, %v1657
    %v1659 = vpop.f32.mrb[0].mxu0
    %v1660 = vadd.f32 %v577, %v1659
    %1661 = vmatprep.mubr.bf16.mxu0 %v268
    %1662 = vmatmul.mubr.bf16.gmra.mrb[0].mxu0 %v267
    %v1663 = vpop.f32.mrb[0].mxu0
    %v1664 = vadd.f32 %v573, %v1663
    %v1665 = vpop.f32.mrb[0].mxu0
    %v1666 = vadd.f32 %v577, %v1665
    %v1667 = vpop.f32.mrb[0].mxu0
    %v1668 = vadd.f32 %v573, %v1667
    %v1669 = vpop.f32.mrb[0].mxu0
    %v1670 = vadd.f32 %v577, %v1669
    %1671 = vmatprep.mubr.bf16.mxu0 %v275
    %1672 = vmatmul.mubr.bf16.gmra.mrb[0].mxu0 %v274
    %v1673 = vpop.f32.mrb[0].mxu0
    %v1674 = vadd.f32 %v573, %v1673
    %v1675 = vpop.f32.mrb[0].mxu0
    %v1676 = vadd.f32 %v577, %v1675
    %v1677 = vpop.f32.mrb[0].mxu0
    %v1678 = vadd.f32 %v573, %v1677
    %v1679 = vpop.f32.mrb[0].mxu0
    %v1680 = vadd.f32 %v577, %v1679
    %1681 = vmatprep.mubr.bf16.mxu0 %v282
    %1682 = vmatmul.mubr.bf16.gmra.mrb[0].mxu0 %v281
    %v1683 = vpop.f32.mrb[0].mxu0
    %v1684 = vadd.f32 %v573, %v1683
    %v1685 = vpop.f32.mrb[0].mxu0
    %v1686 = vadd.f32 %v577, %v1685
    %v1687 = vpop.f32.mrb[0].mxu0
    %v1688 = vadd.f32 %v573, %v1687
    %v1689 = vpop.f32.mrb[0].mxu0
    %v1690 = vadd.f32 %v577, %v1689
    %1691 = vmatprep.mubr.bf16.mxu0 %v289
    %1692 = vmatmul.mubr.bf16.gmra.mrb[0].mxu0 %v288
    %v1693 = vpop.f32.mrb[0].mxu0
    %v1694 = vadd.f32 %v573, %v1693
    %v1695 = vpop.f32.mrb[0].mxu0
    %v1696 = vadd.f32 %v577, %v1695
    %v1697 = vpop.f32.mrb[0].mxu0
    %v1698 = vadd.f32 %v573, %v1697
    %v1699 = vpop.f32.mrb[0].mxu0
    %v1700 = vadd.f32 %v577, %v1699
    %1701 = vmatprep.mubr.bf16.mxu0 %v296
    %1702 = vmatmul.mubr.bf16.gmra.mrb[0].mxu0 %v295
    %v1703 = vpop.f32.mrb[0].mxu0
    %v1704 = vadd.f32 %v573, %v1703
    %v1705 = vpop.f32.mrb[0].mxu0
    %v1706 = vadd.f32 %v577, %v1705
    %v1707 = vpop.f32.mrb[0].mxu0
    %v1708 = vadd.f32 %v573, %v1707
    %v1709 = vpop.f32.mrb[0].mxu0
    %v1710 = vadd.f32 %v577, %v1709
    %1711 = vmatprep.mubr.bf16.mxu0 %v303
    %1712 = vmatmul.mubr.bf16.gmra.mrb[0].mxu0 %v302
    %v1713 = vpop.f32.mrb[0].mxu0
    %v1714 = vadd.f32 %v573, %v1713
    %v1715 = vpop.f32.mrb[0].mxu0
    %v1716 = vadd.f32 %v577, %v1715
    %v1717 = vpop.f32.mrb[0].mxu0
    %v1718 = vadd.f32 %v573, %v1717
    %v1719 = vpop.f32.mrb[0].mxu0
    %v1720 = vadd.f32 %v577, %v1719
    %1721 = vmatprep.mubr.bf16.mxu0 %v310
    %1722 = vmatmul.mubr.bf16.gmra.mrb[0].mxu0 %v309
    %v1723 = vpop.f32.mrb[0].mxu0
    %v1724 = vadd.f32 %v573, %v1723
    %v1725 = vpop.f32.mrb[0].mxu0
    %v1726 = vadd.f32 %v577, %v1725
    %v1727 = vpop.f32.mrb[0].mxu0
    %v1728 = vadd.f32 %v573, %v1727
    %v1729 = vpop.f32.mrb[0].mxu0
    %v1730 = vadd.f32 %v577, %v1729
    %1731 = vmatprep.mubr.bf16.mxu0 %v317
    %1732 = vmatmul.mubr.bf16.gmra.mrb[0].mxu0 %v316
    %v1733 = vpop.f32.mrb[0].mxu0
    %v1734 = vadd.f32 %v573, %v1733
    %v1735 = vpop.f32.mrb[0].mxu0
    %v1736 = vadd.f32 %v577, %v1735
    %v1737 = vpop.f32.mrb[0].mxu0
    %v1738 = vadd.f32 %v573, %v1737
    %v1739 = vpop.f32.mrb[0].mxu0
    %v1740 = vadd.f32 %v577, %v1739
    %1741 = vmatprep.mubr.bf16.mxu0 %v324
    %1742 = vmatmul.mubr.bf16.gmra.mrb[0].mxu0 %v323
    %v1743 = vpop.f32.mrb[0].mxu0
    %v1744 = vadd.f32 %v573, %v1743
    %v1745 = vpop.f32.mrb[0].mxu0
    %v1746 = vadd.f32 %v577, %v1745
    %v1747 = vpop.f32.mrb[0].mxu0
    %v1748 = vadd.f32 %v573, %v1747
    %v1749 = vpop.f32.mrb[0].mxu0
    %v1750 = vadd.f32 %v577, %v1749
    %1751 = vmatprep.mubr.bf16.mxu0 %v331
    %1752 = vmatmul.mubr.bf16.gmra.mrb[0].mxu0 %v330
    %v1753 = vpop.f32.mrb[0].mxu0
    %v1754 = vadd.f32 %v573, %v1753
    %v1755 = vpop.f32.mrb[0].mxu0
    %v1756 = vadd.f32 %v577, %v1755
    %v1757 = vpop.f32.mrb[0].mxu0
    %v1758 = vadd.f32 %v573, %v1757
    %v1759 = vpop.f32.mrb[0].mxu0
    %v1760 = vadd.f32 %v577, %v1759
    %1761 = vmatprep.mubr.bf16.mxu0 %v338
    %1762 = vmatmul.mubr.bf16.gmra.mrb[0].mxu0 %v337
    %v1763 = vpop.f32.mrb[0].mxu0
    %v1764 = vadd.f32 %v573, %v1763
    %v1765 = vpop.f32.mrb[0].mxu0
    %v1766 = vadd.f32 %v577, %v1765
    %v1767 = vpop.f32.mrb[0].mxu0
    %v1768 = vadd.f32 %v573, %v1767
    %v1769 = vpop.f32.mrb[0].mxu0
    %v1770 = vadd.f32 %v577, %v1769
    %1771 = vmatprep.mubr.bf16.mxu0 %v345
    %1772 = vmatmul.mubr.bf16.gmra.mrb[0].mxu0 %v344
    %v1773 = vpop.f32.mrb[0].mxu0
    %v1774 = vadd.f32 %v573, %v1773
    %v1775 = vpop.f32.mrb[0].mxu0
    %v1776 = vadd.f32 %v577, %v1775
    %v1777 = vpop.f32.mrb[0].mxu0
    %v1778 = vadd.f32 %v573, %v1777
    %v1779 = vpop.f32.mrb[0].mxu0
    %v1780 = vadd.f32 %v577, %v1779
    %1781 = vmatprep.mubr.bf16.mxu0 %v352
    %1782 = vmatmul.mubr.bf16.gmra.mrb[0].mxu0 %v351
    %v1783 = vpop.f32.mrb[0].mxu0
    %v1784 = vadd.f32 %v573, %v1783
    %v1785 = vpop.f32.mrb[0].mxu0
    %v1786 = vadd.f32 %v577, %v1785
    %v1787 = vpop.f32.mrb[0].mxu0
    %v1788 = vadd.f32 %v573, %v1787
    %v1789 = vpop.f32.mrb[0].mxu0
    %v1790 = vadd.f32 %v577, %v1789
    %1791 = vmatprep.mubr.bf16.mxu0 %v359
    %1792 = vmatmul.mubr.bf16.gmra.mrb[0].mxu0 %v358
    %v1793 = vpop.f32.mrb[0].mxu0
    %v1794 = vadd.f32 %v573, %v1793
    %v1795 = vpop.f32.mrb[0].mxu0
    %v1796 = vadd.f32 %v577, %v1795
    %v1797 = vpop.f32.mrb[0].mxu0
    %v1798 = vadd.f32 %v573, %v1797
    %v1799 = vpop.f32.mrb[0].mxu0
    %v1800 = vadd.f32 %v577, %v1799
    %1801 = vmatprep.mubr.bf16.mxu0 %v366
    %1802 = vmatmul.mubr.bf16.gmra.mrb[0].mxu0 %v365
    %v1803 = vpop.f32.mrb[0].mxu0
    %v1804 = vadd.f32 %v573, %v1803
    %v1805 = vpop.f32.mrb[0].mxu0
    %v1806 = vadd.f32 %v577, %v1805
    %v1807 = vpop.f32.mrb[0].mxu0
    %v1808 = vadd.f32 %v573, %v1807
    %v1809 = vpop.f32.mrb[0].mxu0
    %v1810 = vadd.f32 %v577, %v1809
    %1811 = vdwg.mxu0
    %1812 = vmatprep.subr.bf16.mxu0 %v1243
    %1813 = vmatpush1.bf16.msra.mxu0 %v1242
    %1814 = vmatprep.subr.bf16.mxu0 %v1247
    %1815 = vmatpush1.bf16.msra.mxu0 %v1246
    %1816 = vmatprep.subr.bf16.mxu0 %v1251
    %1817 = vmatpush1.bf16.msra.mxu0 %v1250
    %1818 = vmatprep.subr.bf16.mxu0 %v1255
    %1819 = vmatpush1.bf16.msra.mxu0 %v1254
    %1820 = vmatprep.subr.bf16.mxu0 %v1259
    %1821 = vmatpush1.bf16.msra.mxu0 %v1258
    %1822 = vmatprep.subr.bf16.mxu0 %v1263
    %1823 = vmatpush1.bf16.msra.mxu0 %v1262
    %1824 = vmatprep.subr.bf16.mxu0 %v1267
    %1825 = vmatpush1.bf16.msra.mxu0 %v1266
    %1826 = vmatprep.subr.bf16.mxu0 %v1271
    %1827 = vmatpush1.bf16.msra.mxu0 %v1270
    %1828 = vmatprep.subr.bf16.mxu0 %v1275
    %1829 = vmatpush1.bf16.msra.mxu0 %v1274
    %1830 = vmatprep.subr.bf16.mxu0 %v1279
    %1831 = vmatpush1.bf16.msra.mxu0 %v1278
    %1832 = vmatprep.subr.bf16.mxu0 %v1283
    %1833 = vmatpush1.bf16.msra.mxu0 %v1282
    %1834 = vmatprep.subr.bf16.mxu0 %v1287
    %1835 = vmatpush1.bf16.msra.mxu0 %v1286
    %1836 = vmatprep.subr.bf16.mxu0 %v1291
    %1837 = vmatpush1.bf16.msra.mxu0 %v1290
    %1838 = vmatprep.subr.bf16.mxu0 %v1295
    %1839 = vmatpush1.bf16.msra.mxu0 %v1294
    %1840 = vmatprep.subr.bf16.mxu0 %v1299
    %1841 = vmatpush1.bf16.msra.mxu0 %v1298
    %1842 = vmatprep.subr.bf16.mxu0 %v1303
    %1843 = vmatpush1.bf16.msra.mxu0 %v1302
    %1844 = vmatprep.mubr.bf16.mxu0 %v263
    %1845 = vmatmul.mubr.bf16.gmra.mrb[0].mxu0 %v262
    %v1846 = vpop.f32.mrb[0].mxu0
    %v1847 = vadd.f32 %v1654, %v1846
    %v1848 = vpop.f32.mrb[0].mxu0
    %v1849 = vadd.f32 %v1656, %v1848
    %v1850 = vpop.f32.mrb[0].mxu0
    %v1851 = vadd.f32 %v1658, %v1850
    %v1852 = vpop.f32.mrb[0].mxu0
    %v1853 = vadd.f32 %v1660, %v1852
    %1854 = vmatprep.mubr.bf16.mxu0 %v270
    %1855 = vmatmul.mubr.bf16.gmra.mrb[0].mxu0 %v269
    %v1856 = vpop.f32.mrb[0].mxu0
    %v1857 = vadd.f32 %v1664, %v1856
    %v1858 = vpop.f32.mrb[0].mxu0
    %v1859 = vadd.f32 %v1666, %v1858
    %v1860 = vpop.f32.mrb[0].mxu0
    %v1861 = vadd.f32 %v1668, %v1860
    %v1862 = vpop.f32.mrb[0].mxu0
    %v1863 = vadd.f32 %v1670, %v1862
    %1864 = vmatprep.mubr.bf16.mxu0 %v277
    %1865 = vmatmul.mubr.bf16.gmra.mrb[0].mxu0 %v276
    %v1866 = vpop.f32.mrb[0].mxu0
    %v1867 = vadd.f32 %v1674, %v1866
    %v1868 = vpop.f32.mrb[0].mxu0
    %v1869 = vadd.f32 %v1676, %v1868
    %v1870 = vpop.f32.mrb[0].mxu0
    %v1871 = vadd.f32 %v1678, %v1870
    %v1872 = vpop.f32.mrb[0].mxu0
    %v1873 = vadd.f32 %v1680, %v1872
    %1874 = vmatprep.mubr.bf16.mxu0 %v284
    %1875 = vmatmul.mubr.bf16.gmra.mrb[0].mxu0 %v283
    %v1876 = vpop.f32.mrb[0].mxu0
    %v1877 = vadd.f32 %v1684, %v1876
    %v1878 = vpop.f32.mrb[0].mxu0
    %v1879 = vadd.f32 %v1686, %v1878
    %v1880 = vpop.f32.mrb[0].mxu0
    %v1881 = vadd.f32 %v1688, %v1880
    %v1882 = vpop.f32.mrb[0].mxu0
    %v1883 = vadd.f32 %v1690, %v1882
    %1884 = vmatprep.mubr.bf16.mxu0 %v291
    %1885 = vmatmul.mubr.bf16.gmra.mrb[0].mxu0 %v290
    %v1886 = vpop.f32.mrb[0].mxu0
    %v1887 = vadd.f32 %v1694, %v1886
    %v1888 = vpop.f32.mrb[0].mxu0
    %v1889 = vadd.f32 %v1696, %v1888
    %v1890 = vpop.f32.mrb[0].mxu0
    %v1891 = vadd.f32 %v1698, %v1890
    %v1892 = vpop.f32.mrb[0].mxu0
    %v1893 = vadd.f32 %v1700, %v1892
    %1894 = vmatprep.mubr.bf16.mxu0 %v298
    %1895 = vmatmul.mubr.bf16.gmra.mrb[0].mxu0 %v297
    %v1896 = vpop.f32.mrb[0].mxu0
    %v1897 = vadd.f32 %v1704, %v1896
    %v1898 = vpop.f32.mrb[0].mxu0
    %v1899 = vadd.f32 %v1706, %v1898
    %v1900 = vpop.f32.mrb[0].mxu0
    %v1901 = vadd.f32 %v1708, %v1900
    %v1902 = vpop.f32.mrb[0].mxu0
    %v1903 = vadd.f32 %v1710, %v1902
    %1904 = vmatprep.mubr.bf16.mxu0 %v305
    %1905 = vmatmul.mubr.bf16.gmra.mrb[0].mxu0 %v304
    %v1906 = vpop.f32.mrb[0].mxu0
    %v1907 = vadd.f32 %v1714, %v1906
    %v1908 = vpop.f32.mrb[0].mxu0
    %v1909 = vadd.f32 %v1716, %v1908
    %v1910 = vpop.f32.mrb[0].mxu0
    %v1911 = vadd.f32 %v1718, %v1910
    %v1912 = vpop.f32.mrb[0].mxu0
    %v1913 = vadd.f32 %v1720, %v1912
    %1914 = vmatprep.mubr.bf16.mxu0 %v312
    %1915 = vmatmul.mubr.bf16.gmra.mrb[0].mxu0 %v311
    %v1916 = vpop.f32.mrb[0].mxu0
    %v1917 = vadd.f32 %v1724, %v1916
    %v1918 = vpop.f32.mrb[0].mxu0
    %v1919 = vadd.f32 %v1726, %v1918
    %v1920 = vpop.f32.mrb[0].mxu0
    %v1921 = vadd.f32 %v1728, %v1920
    %v1922 = vpop.f32.mrb[0].mxu0
    %v1923 = vadd.f32 %v1730, %v1922
    %1924 = vmatprep.mubr.bf16.mxu0 %v319
    %1925 = vmatmul.mubr.bf16.gmra.mrb[0].mxu0 %v318
    %v1926 = vpop.f32.mrb[0].mxu0
    %v1927 = vadd.f32 %v1734, %v1926
    %v1928 = vpop.f32.mrb[0].mxu0
    %v1929 = vadd.f32 %v1736, %v1928
    %v1930 = vpop.f32.mrb[0].mxu0
    %v1931 = vadd.f32 %v1738, %v1930
    %v1932 = vpop.f32.mrb[0].mxu0
    %v1933 = vadd.f32 %v1740, %v1932
    %1934 = vmatprep.mubr.bf16.mxu0 %v326
    %1935 = vmatmul.mubr.bf16.gmra.mrb[0].mxu0 %v325
    %v1936 = vpop.f32.mrb[0].mxu0
    %v1937 = vadd.f32 %v1744, %v1936
    %v1938 = vpop.f32.mrb[0].mxu0
    %v1939 = vadd.f32 %v1746, %v1938
    %v1940 = vpop.f32.mrb[0].mxu0
    %v1941 = vadd.f32 %v1748, %v1940
    %v1942 = vpop.f32.mrb[0].mxu0
    %v1943 = vadd.f32 %v1750, %v1942
    %1944 = vmatprep.mubr.bf16.mxu0 %v333
    %1945 = vmatmul.mubr.bf16.gmra.mrb[0].mxu0 %v332
    %v1946 = vpop.f32.mrb[0].mxu0
    %v1947 = vadd.f32 %v1754, %v1946
    %v1948 = vpop.f32.mrb[0].mxu0
    %v1949 = vadd.f32 %v1756, %v1948
    %v1950 = vpop.f32.mrb[0].mxu0
    %v1951 = vadd.f32 %v1758, %v1950
    %v1952 = vpop.f32.mrb[0].mxu0
    %v1953 = vadd.f32 %v1760, %v1952
    %1954 = vmatprep.mubr.bf16.mxu0 %v340
    %1955 = vmatmul.mubr.bf16.gmra.mrb[0].mxu0 %v339
    %v1956 = vpop.f32.mrb[0].mxu0
    %v1957 = vadd.f32 %v1764, %v1956
    %v1958 = vpop.f32.mrb[0].mxu0
    %v1959 = vadd.f32 %v1766, %v1958
    %v1960 = vpop.f32.mrb[0].mxu0
    %v1961 = vadd.f32 %v1768, %v1960
    %v1962 = vpop.f32.mrb[0].mxu0
    %v1963 = vadd.f32 %v1770, %v1962
    %1964 = vmatprep.mubr.bf16.mxu0 %v347
    %1965 = vmatmul.mubr.bf16.gmra.mrb[0].mxu0 %v346
    %v1966 = vpop.f32.mrb[0].mxu0
    %v1967 = vadd.f32 %v1774, %v1966
    %v1968 = vpop.f32.mrb[0].mxu0
    %v1969 = vadd.f32 %v1776, %v1968
    %v1970 = vpop.f32.mrb[0].mxu0
    %v1971 = vadd.f32 %v1778, %v1970
    %v1972 = vpop.f32.mrb[0].mxu0
    %v1973 = vadd.f32 %v1780, %v1972
    %1974 = vmatprep.mubr.bf16.mxu0 %v354
    %1975 = vmatmul.mubr.bf16.gmra.mrb[0].mxu0 %v353
    %v1976 = vpop.f32.mrb[0].mxu0
    %v1977 = vadd.f32 %v1784, %v1976
    %v1978 = vpop.f32.mrb[0].mxu0
    %v1979 = vadd.f32 %v1786, %v1978
    %v1980 = vpop.f32.mrb[0].mxu0
    %v1981 = vadd.f32 %v1788, %v1980
    %v1982 = vpop.f32.mrb[0].mxu0
    %v1983 = vadd.f32 %v1790, %v1982
    %1984 = vmatprep.mubr.bf16.mxu0 %v361
    %1985 = vmatmul.mubr.bf16.gmra.mrb[0].mxu0 %v360
    %v1986 = vpop.f32.mrb[0].mxu0
    %v1987 = vadd.f32 %v1794, %v1986
    %v1988 = vpop.f32.mrb[0].mxu0
    %v1989 = vadd.f32 %v1796, %v1988
    %v1990 = vpop.f32.mrb[0].mxu0
    %v1991 = vadd.f32 %v1798, %v1990
    %v1992 = vpop.f32.mrb[0].mxu0
    %v1993 = vadd.f32 %v1800, %v1992
    %1994 = vmatprep.mubr.bf16.mxu0 %v368
    %1995 = vmatmul.mubr.bf16.gmra.mrb[0].mxu0 %v367
    %v1996 = vpop.f32.mrb[0].mxu0
    %v1997 = vadd.f32 %v1804, %v1996
    %v1998 = vpop.f32.mrb[0].mxu0
    %v1999 = vadd.f32 %v1806, %v1998
    %v2000 = vpop.f32.mrb[0].mxu0
    %v2001 = vadd.f32 %v1808, %v2000
    %v2002 = vpop.f32.mrb[0].mxu0
    %v2003 = vadd.f32 %v1810, %v2002
    %2004 = vdwg.mxu0
    %2005 = vmatprep.subr.bf16.mxu0 %v1307
    %2006 = vmatpush1.bf16.msra.mxu0 %v1306
    %2007 = vmatprep.subr.bf16.mxu0 %v1311
    %2008 = vmatpush1.bf16.msra.mxu0 %v1310
    %2009 = vmatprep.subr.bf16.mxu0 %v1315
    %2010 = vmatpush1.bf16.msra.mxu0 %v1314
    %2011 = vmatprep.subr.bf16.mxu0 %v1319
    %2012 = vmatpush1.bf16.msra.mxu0 %v1318
    %2013 = vmatprep.subr.bf16.mxu0 %v1323
    %2014 = vmatpush1.bf16.msra.mxu0 %v1322
    %2015 = vmatprep.subr.bf16.mxu0 %v1327
    %2016 = vmatpush1.bf16.msra.mxu0 %v1326
    %2017 = vmatprep.subr.bf16.mxu0 %v1331
    %2018 = vmatpush1.bf16.msra.mxu0 %v1330
    %2019 = vmatprep.subr.bf16.mxu0 %v1335
    %2020 = vmatpush1.bf16.msra.mxu0 %v1334
    %2021 = vmatprep.subr.bf16.mxu0 %v1339
    %2022 = vmatpush1.bf16.msra.mxu0 %v1338
    %2023 = vmatprep.subr.bf16.mxu0 %v1343
    %2024 = vmatpush1.bf16.msra.mxu0 %v1342
    %2025 = vmatprep.subr.bf16.mxu0 %v1347
    %2026 = vmatpush1.bf16.msra.mxu0 %v1346
    %2027 = vmatprep.subr.bf16.mxu0 %v1351
    %2028 = vmatpush1.bf16.msra.mxu0 %v1350
    %2029 = vmatprep.subr.bf16.mxu0 %v1355
    %2030 = vmatpush1.bf16.msra.mxu0 %v1354
    %2031 = vmatprep.subr.bf16.mxu0 %v1359
    %2032 = vmatpush1.bf16.msra.mxu0 %v1358
    %2033 = vmatprep.subr.bf16.mxu0 %v1363
    %2034 = vmatpush1.bf16.msra.mxu0 %v1362
    %2035 = vmatprep.subr.bf16.mxu0 %v1367
    %2036 = vmatpush1.bf16.msra.mxu0 %v1366
    %2037 = vmatprep.mubr.bf16.mxu0 %v265
    %2038 = vmatmul.mubr.bf16.gmra.mrb[0].mxu0 %v264
    %v2039 = vpop.f32.mrb[0].mxu0
    %v2040 = vadd.f32 %v1847, %v2039
    %v2041 = vpop.f32.mrb[0].mxu0
    %v2042 = vadd.f32 %v1849, %v2041
    %v2043 = vpop.f32.mrb[0].mxu0
    %v2044 = vadd.f32 %v1851, %v2043
    %v2045 = vpop.f32.mrb[0].mxu0
    %v2046 = vadd.f32 %v1853, %v2045
    %2047 = vmatprep.mubr.bf16.mxu0 %v272
    %2048 = vmatmul.mubr.bf16.gmra.mrb[0].mxu0 %v271
    %v2049 = vpop.f32.mrb[0].mxu0
    %v2050 = vadd.f32 %v1857, %v2049
    %v2051 = vpop.f32.mrb[0].mxu0
    %v2052 = vadd.f32 %v1859, %v2051
    %v2053 = vpop.f32.mrb[0].mxu0
    %v2054 = vadd.f32 %v1861, %v2053
    %v2055 = vpop.f32.mrb[0].mxu0
    %v2056 = vadd.f32 %v1863, %v2055
    %2057 = vmatprep.mubr.bf16.mxu0 %v279
    %2058 = vmatmul.mubr.bf16.gmra.mrb[0].mxu0 %v278
    %v2059 = vpop.f32.mrb[0].mxu0
    %v2060 = vadd.f32 %v1867, %v2059
    %v2061 = vpop.f32.mrb[0].mxu0
    %v2062 = vadd.f32 %v1869, %v2061
    %v2063 = vpop.f32.mrb[0].mxu0
    %v2064 = vadd.f32 %v1871, %v2063
    %v2065 = vpop.f32.mrb[0].mxu0
    %v2066 = vadd.f32 %v1873, %v2065
    %2067 = vmatprep.mubr.bf16.mxu0 %v286
    %2068 = vmatmul.mubr.bf16.gmra.mrb[0].mxu0 %v285
    %v2069 = vpop.f32.mrb[0].mxu0
    %v2070 = vadd.f32 %v1877, %v2069
    %v2071 = vpop.f32.mrb[0].mxu0
    %v2072 = vadd.f32 %v1879, %v2071
    %v2073 = vpop.f32.mrb[0].mxu0
    %v2074 = vadd.f32 %v1881, %v2073
    %v2075 = vpop.f32.mrb[0].mxu0
    %v2076 = vadd.f32 %v1883, %v2075
    %2077 = vmatprep.mubr.bf16.mxu0 %v293
    %2078 = vmatmul.mubr.bf16.gmra.mrb[0].mxu0 %v292
    %v2079 = vpop.f32.mrb[0].mxu0
    %v2080 = vadd.f32 %v1887, %v2079
    %v2081 = vpop.f32.mrb[0].mxu0
    %v2082 = vadd.f32 %v1889, %v2081
    %v2083 = vpop.f32.mrb[0].mxu0
    %v2084 = vadd.f32 %v1891, %v2083
    %v2085 = vpop.f32.mrb[0].mxu0
    %v2086 = vadd.f32 %v1893, %v2085
    %2087 = vmatprep.mubr.bf16.mxu0 %v300
    %2088 = vmatmul.mubr.bf16.gmra.mrb[0].mxu0 %v299
    %v2089 = vpop.f32.mrb[0].mxu0
    %v2090 = vadd.f32 %v1897, %v2089
    %v2091 = vpop.f32.mrb[0].mxu0
    %v2092 = vadd.f32 %v1899, %v2091
    %v2093 = vpop.f32.mrb[0].mxu0
    %v2094 = vadd.f32 %v1901, %v2093
    %v2095 = vpop.f32.mrb[0].mxu0
    %v2096 = vadd.f32 %v1903, %v2095
    %2097 = vmatprep.mubr.bf16.mxu0 %v307
    %2098 = vmatmul.mubr.bf16.gmra.mrb[0].mxu0 %v306
    %v2099 = vpop.f32.mrb[0].mxu0
    %v2100 = vadd.f32 %v1907, %v2099
    %v2101 = vpop.f32.mrb[0].mxu0
    %v2102 = vadd.f32 %v1909, %v2101
    %v2103 = vpop.f32.mrb[0].mxu0
    %v2104 = vadd.f32 %v1911, %v2103
    %v2105 = vpop.f32.mrb[0].mxu0
    %v2106 = vadd.f32 %v1913, %v2105
    %2107 = vmatprep.mubr.bf16.mxu0 %v314
    %2108 = vmatmul.mubr.bf16.gmra.mrb[0].mxu0 %v313
    %v2109 = vpop.f32.mrb[0].mxu0
    %v2110 = vadd.f32 %v1917, %v2109
    %v2111 = vpop.f32.mrb[0].mxu0
    %v2112 = vadd.f32 %v1919, %v2111
    %v2113 = vpop.f32.mrb[0].mxu0
    %v2114 = vadd.f32 %v1921, %v2113
    %v2115 = vpop.f32.mrb[0].mxu0
    %v2116 = vadd.f32 %v1923, %v2115
    %2117 = vmatprep.mubr.bf16.mxu0 %v321
    %2118 = vmatmul.mubr.bf16.gmra.mrb[0].mxu0 %v320
    %v2119 = vpop.f32.mrb[0].mxu0
    %v2120 = vadd.f32 %v1927, %v2119
    %v2121 = vpop.f32.mrb[0].mxu0
    %v2122 = vadd.f32 %v1929, %v2121
    %v2123 = vpop.f32.mrb[0].mxu0
    %v2124 = vadd.f32 %v1931, %v2123
    %v2125 = vpop.f32.mrb[0].mxu0
    %v2126 = vadd.f32 %v1933, %v2125
    %2127 = vmatprep.mubr.bf16.mxu0 %v328
    %2128 = vmatmul.mubr.bf16.gmra.mrb[0].mxu0 %v327
    %v2129 = vpop.f32.mrb[0].mxu0
    %v2130 = vadd.f32 %v1937, %v2129
    %v2131 = vpop.f32.mrb[0].mxu0
    %v2132 = vadd.f32 %v1939, %v2131
    %v2133 = vpop.f32.mrb[0].mxu0
    %v2134 = vadd.f32 %v1941, %v2133
    %v2135 = vpop.f32.mrb[0].mxu0
    %v2136 = vadd.f32 %v1943, %v2135
    %2137 = vmatprep.mubr.bf16.mxu0 %v335
    %2138 = vmatmul.mubr.bf16.gmra.mrb[0].mxu0 %v334
    %v2139 = vpop.f32.mrb[0].mxu0
    %v2140 = vadd.f32 %v1947, %v2139
    %v2141 = vpop.f32.mrb[0].mxu0
    %v2142 = vadd.f32 %v1949, %v2141
    %v2143 = vpop.f32.mrb[0].mxu0
    %v2144 = vadd.f32 %v1951, %v2143
    %v2145 = vpop.f32.mrb[0].mxu0
    %v2146 = vadd.f32 %v1953, %v2145
    %2147 = vmatprep.mubr.bf16.mxu0 %v342
    %2148 = vmatmul.mubr.bf16.gmra.mrb[0].mxu0 %v341
    %v2149 = vpop.f32.mrb[0].mxu0
    %v2150 = vadd.f32 %v1957, %v2149
    %v2151 = vpop.f32.mrb[0].mxu0
    %v2152 = vadd.f32 %v1959, %v2151
    %v2153 = vpop.f32.mrb[0].mxu0
    %v2154 = vadd.f32 %v1961, %v2153
    %v2155 = vpop.f32.mrb[0].mxu0
    %v2156 = vadd.f32 %v1963, %v2155
    %2157 = vmatprep.mubr.bf16.mxu0 %v349
    %2158 = vmatmul.mubr.bf16.gmra.mrb[0].mxu0 %v348
    %v2159 = vpop.f32.mrb[0].mxu0
    %v2160 = vadd.f32 %v1967, %v2159
    %v2161 = vpop.f32.mrb[0].mxu0
    %v2162 = vadd.f32 %v1969, %v2161
    %v2163 = vpop.f32.mrb[0].mxu0
    %v2164 = vadd.f32 %v1971, %v2163
    %v2165 = vpop.f32.mrb[0].mxu0
    %v2166 = vadd.f32 %v1973, %v2165
    %2167 = vmatprep.mubr.bf16.mxu0 %v356
    %2168 = vmatmul.mubr.bf16.gmra.mrb[0].mxu0 %v355
    %v2169 = vpop.f32.mrb[0].mxu0
    %v2170 = vadd.f32 %v1977, %v2169
    %v2171 = vpop.f32.mrb[0].mxu0
    %v2172 = vadd.f32 %v1979, %v2171
    %v2173 = vpop.f32.mrb[0].mxu0
    %v2174 = vadd.f32 %v1981, %v2173
    %v2175 = vpop.f32.mrb[0].mxu0
    %v2176 = vadd.f32 %v1983, %v2175
    %2177 = vmatprep.mubr.bf16.mxu0 %v363
    %2178 = vmatmul.mubr.bf16.gmra.mrb[0].mxu0 %v362
    %v2179 = vpop.f32.mrb[0].mxu0
    %v2180 = vadd.f32 %v1987, %v2179
    %v2181 = vpop.f32.mrb[0].mxu0
    %v2182 = vadd.f32 %v1989, %v2181
    %v2183 = vpop.f32.mrb[0].mxu0
    %v2184 = vadd.f32 %v1991, %v2183
    %v2185 = vpop.f32.mrb[0].mxu0
    %v2186 = vadd.f32 %v1993, %v2185
    %2187 = vmatprep.mubr.bf16.mxu0 %v370
    %2188 = vmatmul.mubr.bf16.gmra.mrb[0].mxu0 %v369
    %v2189 = vpop.f32.mrb[0].mxu0
    %v2190 = vadd.f32 %v1997, %v2189
    %v2191 = vpop.f32.mrb[0].mxu0
    %v2192 = vadd.f32 %v1999, %v2191
    %v2193 = vpop.f32.mrb[0].mxu0
    %v2194 = vadd.f32 %v2001, %v2193
    %v2195 = vpop.f32.mrb[0].mxu0
    %v2196 = vadd.f32 %v2003, %v2195
    %2197 = vdwg.mxu0
    %2198 = vmatprep.subr.bf16.mxu0 %v1371
    %2199 = vmatpush1.bf16.msra.mxu0 %v1370
    %2200 = vmatprep.subr.bf16.mxu0 0
    %2201 = vmatpush1.bf16.msra.mxu0 0
    %2202 = vmatprep.subr.bf16.mxu0 0
    %2203 = vmatpush1.bf16.msra.mxu0 0
    %2204 = vmatprep.subr.bf16.mxu0 0
    %2205 = vmatpush1.bf16.msra.mxu0 0
    %2206 = vmatprep.subr.bf16.mxu0 0
    %2207 = vmatpush1.bf16.msra.mxu0 0
    %2208 = vmatprep.subr.bf16.mxu0 0
    %2209 = vmatpush1.bf16.msra.mxu0 0
    %2210 = vmatprep.subr.bf16.mxu0 0
    %2211 = vmatpush1.bf16.msra.mxu0 0
    %2212 = vmatprep.subr.bf16.mxu0 0
    %2213 = vmatpush1.bf16.msra.mxu0 0
    %2214 = vmatprep.subr.bf16.mxu0 0
    %2215 = vmatpush1.bf16.msra.mxu0 0
    %2216 = vmatprep.subr.bf16.mxu0 0
    %2217 = vmatpush1.bf16.msra.mxu0 0
    %2218 = vmatprep.subr.bf16.mxu0 0
    %2219 = vmatpush1.bf16.msra.mxu0 0
    %2220 = vmatprep.subr.bf16.mxu0 0
    %2221 = vmatpush1.bf16.msra.mxu0 0
    %2222 = vmatprep.subr.bf16.mxu0 0
    %2223 = vmatpush1.bf16.msra.mxu0 0
    %2224 = vmatprep.subr.bf16.mxu0 0
    %2225 = vmatpush1.bf16.msra.mxu0 0
    %2226 = vmatprep.subr.bf16.mxu0 0
    %2227 = vmatpush1.bf16.msra.mxu0 0
    %2228 = vmatprep.subr.bf16.mxu0 0
    %2229 = vmatpush1.bf16.msra.mxu0 0
    %2230 = vmatprep.mubr.bf16.mxu0 0
    %2231 = vmatmul.mubr.bf16.gmra.mrb[0].mxu0 %v1572
    %v2232 = vpop.f32.mrb[0].mxu0
    %v2233 = vadd.f32 %v2040, %v2232
    %v2234 = vpop.f32.mrb[0].mxu0
    %v2235 = vadd.f32 %v2042, %v2234
    %v2236 = vpop.f32.mrb[0].mxu0
    %v2237 = vadd.f32 %v2044, %v2236
    %v2238 = vpop.f32.mrb[0].mxu0
    %v2239 = vadd.f32 %v2046, %v2238
    %2240 = vmatprep.mubr.bf16.mxu0 0
    %2241 = vmatmul.mubr.bf16.gmra.mrb[0].mxu0 %v1575
    %v2242 = vpop.f32.mrb[0].mxu0
    %v2243 = vadd.f32 %v2050, %v2242
    %v2244 = vpop.f32.mrb[0].mxu0
    %v2245 = vadd.f32 %v2052, %v2244
    %v2246 = vpop.f32.mrb[0].mxu0
    %v2247 = vadd.f32 %v2054, %v2246
    %v2248 = vpop.f32.mrb[0].mxu0
    %v2249 = vadd.f32 %v2056, %v2248
    %2250 = vmatprep.mubr.bf16.mxu0 0
    %2251 = vmatmul.mubr.bf16.gmra.mrb[0].mxu0 %v1578
    %v2252 = vpop.f32.mrb[0].mxu0
    %v2253 = vadd.f32 %v2060, %v2252
    %v2254 = vpop.f32.mrb[0].mxu0
    %v2255 = vadd.f32 %v2062, %v2254
    %v2256 = vpop.f32.mrb[0].mxu0
    %v2257 = vadd.f32 %v2064, %v2256
    %v2258 = vpop.f32.mrb[0].mxu0
    %v2259 = vadd.f32 %v2066, %v2258
    %2260 = vmatprep.mubr.bf16.mxu0 0
    %2261 = vmatmul.mubr.bf16.gmra.mrb[0].mxu0 %v1581
    %v2262 = vpop.f32.mrb[0].mxu0
    %v2263 = vadd.f32 %v2070, %v2262
    %v2264 = vpop.f32.mrb[0].mxu0
    %v2265 = vadd.f32 %v2072, %v2264
    %v2266 = vpop.f32.mrb[0].mxu0
    %v2267 = vadd.f32 %v2074, %v2266
    %v2268 = vpop.f32.mrb[0].mxu0
    %v2269 = vadd.f32 %v2076, %v2268
    %2270 = vmatprep.mubr.bf16.mxu0 0
    %2271 = vmatmul.mubr.bf16.gmra.mrb[0].mxu0 %v1584
    %v2272 = vpop.f32.mrb[0].mxu0
    %v2273 = vadd.f32 %v2080, %v2272
    %v2274 = vpop.f32.mrb[0].mxu0
    %v2275 = vadd.f32 %v2082, %v2274
    %v2276 = vpop.f32.mrb[0].mxu0
    %v2277 = vadd.f32 %v2084, %v2276
    %v2278 = vpop.f32.mrb[0].mxu0
    %v2279 = vadd.f32 %v2086, %v2278
    %2280 = vmatprep.mubr.bf16.mxu0 0
    %2281 = vmatmul.mubr.bf16.gmra.mrb[0].mxu0 %v1587
    %v2282 = vpop.f32.mrb[0].mxu0
    %v2283 = vadd.f32 %v2090, %v2282
    %v2284 = vpop.f32.mrb[0].mxu0
    %v2285 = vadd.f32 %v2092, %v2284
    %v2286 = vpop.f32.mrb[0].mxu0
    %v2287 = vadd.f32 %v2094, %v2286
    %v2288 = vpop.f32.mrb[0].mxu0
    %v2289 = vadd.f32 %v2096, %v2288
    %2290 = vmatprep.mubr.bf16.mxu0 0
    %2291 = vmatmul.mubr.bf16.gmra.mrb[0].mxu0 %v1590
    %v2292 = vpop.f32.mrb[0].mxu0
    %v2293 = vadd.f32 %v2100, %v2292
    %v2294 = vpop.f32.mrb[0].mxu0
    %v2295 = vadd.f32 %v2102, %v2294
    %v2296 = vpop.f32.mrb[0].mxu0
    %v2297 = vadd.f32 %v2104, %v2296
    %v2298 = vpop.f32.mrb[0].mxu0
    %v2299 = vadd.f32 %v2106, %v2298
    %2300 = vmatprep.mubr.bf16.mxu0 0
    %2301 = vmatmul.mubr.bf16.gmra.mrb[0].mxu0 %v1593
    %v2302 = vpop.f32.mrb[0].mxu0
    %v2303 = vadd.f32 %v2110, %v2302
    %v2304 = vpop.f32.mrb[0].mxu0
    %v2305 = vadd.f32 %v2112, %v2304
    %v2306 = vpop.f32.mrb[0].mxu0
    %v2307 = vadd.f32 %v2114, %v2306
    %v2308 = vpop.f32.mrb[0].mxu0
    %v2309 = vadd.f32 %v2116, %v2308
    %2310 = vmatprep.mubr.bf16.mxu0 0
    %2311 = vmatmul.mubr.bf16.gmra.mrb[0].mxu0 %v1596
    %v2312 = vpop.f32.mrb[0].mxu0
    %v2313 = vadd.f32 %v2120, %v2312
    %v2314 = vpop.f32.mrb[0].mxu0
    %v2315 = vadd.f32 %v2122, %v2314
    %v2316 = vpop.f32.mrb[0].mxu0
    %v2317 = vadd.f32 %v2124, %v2316
    %v2318 = vpop.f32.mrb[0].mxu0
    %v2319 = vadd.f32 %v2126, %v2318
    %2320 = vmatprep.mubr.bf16.mxu0 0
    %2321 = vmatmul.mubr.bf16.gmra.mrb[0].mxu0 %v1599
    %v2322 = vpop.f32.mrb[0].mxu0
    %v2323 = vadd.f32 %v2130, %v2322
    %v2324 = vpop.f32.mrb[0].mxu0
    %v2325 = vadd.f32 %v2132, %v2324
    %v2326 = vpop.f32.mrb[0].mxu0
    %v2327 = vadd.f32 %v2134, %v2326
    %v2328 = vpop.f32.mrb[0].mxu0
    %v2329 = vadd.f32 %v2136, %v2328
    %2330 = vmatprep.mubr.bf16.mxu0 0
    %2331 = vmatmul.mubr.bf16.gmra.mrb[0].mxu0 %v1602
    %v2332 = vpop.f32.mrb[0].mxu0
    %v2333 = vadd.f32 %v2140, %v2332
    %v2334 = vpop.f32.mrb[0].mxu0
    %v2335 = vadd.f32 %v2142, %v2334
    %v2336 = vpop.f32.mrb[0].mxu0
    %v2337 = vadd.f32 %v2144, %v2336
    %v2338 = vpop.f32.mrb[0].mxu0
    %v2339 = vadd.f32 %v2146, %v2338
    %2340 = vmatprep.mubr.bf16.mxu0 0
    %2341 = vmatmul.mubr.bf16.gmra.mrb[0].mxu0 %v1605
    %v2342 = vpop.f32.mrb[0].mxu0
    %v2343 = vadd.f32 %v2150, %v2342
    %v2344 = vpop.f32.mrb[0].mxu0
    %v2345 = vadd.f32 %v2152, %v2344
    %v2346 = vpop.f32.mrb[0].mxu0
    %v2347 = vadd.f32 %v2154, %v2346
    %v2348 = vpop.f32.mrb[0].mxu0
    %v2349 = vadd.f32 %v2156, %v2348
    %2350 = vmatprep.mubr.bf16.mxu0 0
    %2351 = vmatmul.mubr.bf16.gmra.mrb[0].mxu0 %v1608
    %v2352 = vpop.f32.mrb[0].mxu0
    %v2353 = vadd.f32 %v2160, %v2352
    %v2354 = vpop.f32.mrb[0].mxu0
    %v2355 = vadd.f32 %v2162, %v2354
    %v2356 = vpop.f32.mrb[0].mxu0
    %v2357 = vadd.f32 %v2164, %v2356
    %v2358 = vpop.f32.mrb[0].mxu0
    %v2359 = vadd.f32 %v2166, %v2358
    %2360 = vmatprep.mubr.bf16.mxu0 0
    %2361 = vmatmul.mubr.bf16.gmra.mrb[0].mxu0 %v1611
    %v2362 = vpop.f32.mrb[0].mxu0
    %v2363 = vadd.f32 %v2170, %v2362
    %v2364 = vpop.f32.mrb[0].mxu0
    %v2365 = vadd.f32 %v2172, %v2364
    %v2366 = vpop.f32.mrb[0].mxu0
    %v2367 = vadd.f32 %v2174, %v2366
    %v2368 = vpop.f32.mrb[0].mxu0
    %v2369 = vadd.f32 %v2176, %v2368
    %2370 = vmatprep.mubr.bf16.mxu0 0
    %2371 = vmatmul.mubr.bf16.gmra.mrb[0].mxu0 %v1614
    %v2372 = vpop.f32.mrb[0].mxu0
    %v2373 = vadd.f32 %v2180, %v2372
    %v2374 = vpop.f32.mrb[0].mxu0
    %v2375 = vadd.f32 %v2182, %v2374
    %v2376 = vpop.f32.mrb[0].mxu0
    %v2377 = vadd.f32 %v2184, %v2376
    %v2378 = vpop.f32.mrb[0].mxu0
    %v2379 = vadd.f32 %v2186, %v2378
    %2380 = vmatprep.mubr.bf16.mxu0 0
    %2381 = vmatmul.mubr.bf16.gmra.mrb[0].mxu0 %v1617
    %v2382 = vpop.f32.mrb[0].mxu0
    %v2383 = vadd.f32 %v2190, %v2382
    %v2384 = vpop.f32.mrb[0].mxu0
    %v2385 = vadd.f32 %v2192, %v2384
    %v2386 = vpop.f32.mrb[0].mxu0
    %v2387 = vadd.f32 %v2194, %v2386
    %v2388 = vpop.f32.mrb[0].mxu0
    %v2389 = vadd.f32 %v2196, %v2388
    %2390 = vdwg.mxu0
    %2391 = vmatprep.subr.bf16.mxu0 %v1181
    %2392 = vmatpush1.bf16.msra.mxu0 %v1180
    %2393 = vmatprep.subr.bf16.mxu0 %v1185
    %2394 = vmatpush1.bf16.msra.mxu0 %v1184
    %2395 = vmatprep.subr.bf16.mxu0 %v1189
    %2396 = vmatpush1.bf16.msra.mxu0 %v1188
    %2397 = vmatprep.subr.bf16.mxu0 %v1193
    %2398 = vmatpush1.bf16.msra.mxu0 %v1192
    %2399 = vmatprep.subr.bf16.mxu0 %v1197
    %2400 = vmatpush1.bf16.msra.mxu0 %v1196
    %2401 = vmatprep.subr.bf16.mxu0 %v1201
    %2402 = vmatpush1.bf16.msra.mxu0 %v1200
    %2403 = vmatprep.subr.bf16.mxu0 %v1205
    %2404 = vmatpush1.bf16.msra.mxu0 %v1204
    %2405 = vmatprep.subr.bf16.mxu0 %v1209
    %2406 = vmatpush1.bf16.msra.mxu0 %v1208
    %2407 = vmatprep.subr.bf16.mxu0 %v1213
    %2408 = vmatpush1.bf16.msra.mxu0 %v1212
    %2409 = vmatprep.subr.bf16.mxu0 %v1217
    %2410 = vmatpush1.bf16.msra.mxu0 %v1216
    %2411 = vmatprep.subr.bf16.mxu0 %v1221
    %2412 = vmatpush1.bf16.msra.mxu0 %v1220
    %2413 = vmatprep.subr.bf16.mxu0 %v1225
    %2414 = vmatpush1.bf16.msra.mxu0 %v1224
    %2415 = vmatprep.subr.bf16.mxu0 %v1229
    %2416 = vmatpush1.bf16.msra.mxu0 %v1228
    %2417 = vmatprep.subr.bf16.mxu0 %v1233
    %2418 = vmatpush1.bf16.msra.mxu0 %v1232
    %2419 = vmatprep.subr.bf16.mxu0 %v1237
    %2420 = vmatpush1.bf16.msra.mxu0 %v1236
    %2421 = vmatprep.subr.bf16.mxu0 %v1241
    %2422 = vmatpush1.bf16.msra.mxu0 %v1240
    %2423 = vmatprep.mubr.bf16.mxu0 %v261
    %2424 = vmatmul.mubr.bf16.gmra.mrb[0].mxu0 %v260
    %v2425 = vpop.f32.mrb[0].mxu0
    %v2426 = vadd.f32 %v581, %v2425
    %v2427 = vpop.f32.mrb[0].mxu0
    %v2428 = vadd.f32 %v585, %v2427
    %v2429 = vpop.f32.mrb[0].mxu0
    %v2430 = vadd.f32 %v581, %v2429
    %v2431 = vpop.f32.mrb[0].mxu0
    %v2432 = vadd.f32 %v585, %v2431
    %2433 = vmatprep.mubr.bf16.mxu0 %v268
    %2434 = vmatmul.mubr.bf16.gmra.mrb[0].mxu0 %v267
    %v2435 = vpop.f32.mrb[0].mxu0
    %v2436 = vadd.f32 %v581, %v2435
    %v2437 = vpop.f32.mrb[0].mxu0
    %v2438 = vadd.f32 %v585, %v2437
    %v2439 = vpop.f32.mrb[0].mxu0
    %v2440 = vadd.f32 %v581, %v2439
    %v2441 = vpop.f32.mrb[0].mxu0
    %v2442 = vadd.f32 %v585, %v2441
    %2443 = vmatprep.mubr.bf16.mxu0 %v275
    %2444 = vmatmul.mubr.bf16.gmra.mrb[0].mxu0 %v274
    %v2445 = vpop.f32.mrb[0].mxu0
    %v2446 = vadd.f32 %v581, %v2445
    %v2447 = vpop.f32.mrb[0].mxu0
    %v2448 = vadd.f32 %v585, %v2447
    %v2449 = vpop.f32.mrb[0].mxu0
    %v2450 = vadd.f32 %v581, %v2449
    %v2451 = vpop.f32.mrb[0].mxu0
    %v2452 = vadd.f32 %v585, %v2451
    %2453 = vmatprep.mubr.bf16.mxu0 %v282
    %2454 = vmatmul.mubr.bf16.gmra.mrb[0].mxu0 %v281
    %v2455 = vpop.f32.mrb[0].mxu0
    %v2456 = vadd.f32 %v581, %v2455
    %v2457 = vpop.f32.mrb[0].mxu0
    %v2458 = vadd.f32 %v585, %v2457
    %v2459 = vpop.f32.mrb[0].mxu0
    %v2460 = vadd.f32 %v581, %v2459
    %v2461 = vpop.f32.mrb[0].mxu0
    %v2462 = vadd.f32 %v585, %v2461
    %2463 = vmatprep.mubr.bf16.mxu0 %v289
    %2464 = vmatmul.mubr.bf16.gmra.mrb[0].mxu0 %v288
    %v2465 = vpop.f32.mrb[0].mxu0
    %v2466 = vadd.f32 %v581, %v2465
    %v2467 = vpop.f32.mrb[0].mxu0
    %v2468 = vadd.f32 %v585, %v2467
    %v2469 = vpop.f32.mrb[0].mxu0
    %v2470 = vadd.f32 %v581, %v2469
    %v2471 = vpop.f32.mrb[0].mxu0
    %v2472 = vadd.f32 %v585, %v2471
    %2473 = vmatprep.mubr.bf16.mxu0 %v296
    %2474 = vmatmul.mubr.bf16.gmra.mrb[0].mxu0 %v295
    %v2475 = vpop.f32.mrb[0].mxu0
    %v2476 = vadd.f32 %v581, %v2475
    %v2477 = vpop.f32.mrb[0].mxu0
    %v2478 = vadd.f32 %v585, %v2477
    %v2479 = vpop.f32.mrb[0].mxu0
    %v2480 = vadd.f32 %v581, %v2479
    %v2481 = vpop.f32.mrb[0].mxu0
    %v2482 = vadd.f32 %v585, %v2481
    %2483 = vmatprep.mubr.bf16.mxu0 %v303
    %2484 = vmatmul.mubr.bf16.gmra.mrb[0].mxu0 %v302
    %v2485 = vpop.f32.mrb[0].mxu0
    %v2486 = vadd.f32 %v581, %v2485
    %v2487 = vpop.f32.mrb[0].mxu0
    %v2488 = vadd.f32 %v585, %v2487
    %v2489 = vpop.f32.mrb[0].mxu0
    %v2490 = vadd.f32 %v581, %v2489
    %v2491 = vpop.f32.mrb[0].mxu0
    %v2492 = vadd.f32 %v585, %v2491
    %2493 = vmatprep.mubr.bf16.mxu0 %v310
    %2494 = vmatmul.mubr.bf16.gmra.mrb[0].mxu0 %v309
    %v2495 = vpop.f32.mrb[0].mxu0
    %v2496 = vadd.f32 %v581, %v2495
    %v2497 = vpop.f32.mrb[0].mxu0
    %v2498 = vadd.f32 %v585, %v2497
    %v2499 = vpop.f32.mrb[0].mxu0
    %v2500 = vadd.f32 %v581, %v2499
    %v2501 = vpop.f32.mrb[0].mxu0
    %v2502 = vadd.f32 %v585, %v2501
    %2503 = vmatprep.mubr.bf16.mxu0 %v317
    %2504 = vmatmul.mubr.bf16.gmra.mrb[0].mxu0 %v316
    %v2505 = vpop.f32.mrb[0].mxu0
    %v2506 = vadd.f32 %v581, %v2505
    %v2507 = vpop.f32.mrb[0].mxu0
    %v2508 = vadd.f32 %v585, %v2507
    %v2509 = vpop.f32.mrb[0].mxu0
    %v2510 = vadd.f32 %v581, %v2509
    %v2511 = vpop.f32.mrb[0].mxu0
    %v2512 = vadd.f32 %v585, %v2511
    %2513 = vmatprep.mubr.bf16.mxu0 %v324
    %2514 = vmatmul.mubr.bf16.gmra.mrb[0].mxu0 %v323
    %v2515 = vpop.f32.mrb[0].mxu0
    %v2516 = vadd.f32 %v581, %v2515
    %v2517 = vpop.f32.mrb[0].mxu0
    %v2518 = vadd.f32 %v585, %v2517
    %v2519 = vpop.f32.mrb[0].mxu0
    %v2520 = vadd.f32 %v581, %v2519
    %v2521 = vpop.f32.mrb[0].mxu0
    %v2522 = vadd.f32 %v585, %v2521
    %2523 = vmatprep.mubr.bf16.mxu0 %v331
    %2524 = vmatmul.mubr.bf16.gmra.mrb[0].mxu0 %v330
    %v2525 = vpop.f32.mrb[0].mxu0
    %v2526 = vadd.f32 %v581, %v2525
    %v2527 = vpop.f32.mrb[0].mxu0
    %v2528 = vadd.f32 %v585, %v2527
    %v2529 = vpop.f32.mrb[0].mxu0
    %v2530 = vadd.f32 %v581, %v2529
    %v2531 = vpop.f32.mrb[0].mxu0
    %v2532 = vadd.f32 %v585, %v2531
    %2533 = vmatprep.mubr.bf16.mxu0 %v338
    %2534 = vmatmul.mubr.bf16.gmra.mrb[0].mxu0 %v337
    %v2535 = vpop.f32.mrb[0].mxu0
    %v2536 = vadd.f32 %v581, %v2535
    %v2537 = vpop.f32.mrb[0].mxu0
    %v2538 = vadd.f32 %v585, %v2537
    %v2539 = vpop.f32.mrb[0].mxu0
    %v2540 = vadd.f32 %v581, %v2539
    %v2541 = vpop.f32.mrb[0].mxu0
    %v2542 = vadd.f32 %v585, %v2541
    %2543 = vmatprep.mubr.bf16.mxu0 %v345
    %2544 = vmatmul.mubr.bf16.gmra.mrb[0].mxu0 %v344
    %v2545 = vpop.f32.mrb[0].mxu0
    %v2546 = vadd.f32 %v581, %v2545
    %v2547 = vpop.f32.mrb[0].mxu0
    %v2548 = vadd.f32 %v585, %v2547
    %v2549 = vpop.f32.mrb[0].mxu0
    %v2550 = vadd.f32 %v581, %v2549
    %v2551 = vpop.f32.mrb[0].mxu0
    %v2552 = vadd.f32 %v585, %v2551
    %2553 = vmatprep.mubr.bf16.mxu0 %v352
    %2554 = vmatmul.mubr.bf16.gmra.mrb[0].mxu0 %v351
    %v2555 = vpop.f32.mrb[0].mxu0
    %v2556 = vadd.f32 %v581, %v2555
    %v2557 = vpop.f32.mrb[0].mxu0
    %v2558 = vadd.f32 %v585, %v2557
    %v2559 = vpop.f32.mrb[0].mxu0
    %v2560 = vadd.f32 %v581, %v2559
    %v2561 = vpop.f32.mrb[0].mxu0
    %v2562 = vadd.f32 %v585, %v2561
    %2563 = vmatprep.mubr.bf16.mxu0 %v359
    %2564 = vmatmul.mubr.bf16.gmra.mrb[0].mxu0 %v358
    %v2565 = vpop.f32.mrb[0].mxu0
    %v2566 = vadd.f32 %v581, %v2565
    %v2567 = vpop.f32.mrb[0].mxu0
    %v2568 = vadd.f32 %v585, %v2567
    %v2569 = vpop.f32.mrb[0].mxu0
    %v2570 = vadd.f32 %v581, %v2569
    %v2571 = vpop.f32.mrb[0].mxu0
    %v2572 = vadd.f32 %v585, %v2571
    %2573 = vmatprep.mubr.bf16.mxu0 %v366
    %2574 = vmatmul.mubr.bf16.gmra.mrb[0].mxu0 %v365
    %v2575 = vpop.f32.mrb[0].mxu0
    %v2576 = vadd.f32 %v581, %v2575
    %v2577 = vpop.f32.mrb[0].mxu0
    %v2578 = vadd.f32 %v585, %v2577
    %v2579 = vpop.f32.mrb[0].mxu0
    %v2580 = vadd.f32 %v581, %v2579
    %v2581 = vpop.f32.mrb[0].mxu0
    %v2582 = vadd.f32 %v585, %v2581
    %2583 = vdwg.mxu0
    %2584 = vmatprep.subr.bf16.mxu0 %v1245
    %2585 = vmatpush1.bf16.msra.mxu0 %v1244
    %2586 = vmatprep.subr.bf16.mxu0 %v1249
    %2587 = vmatpush1.bf16.msra.mxu0 %v1248
    %2588 = vmatprep.subr.bf16.mxu0 %v1253
    %2589 = vmatpush1.bf16.msra.mxu0 %v1252
    %2590 = vmatprep.subr.bf16.mxu0 %v1257
    %2591 = vmatpush1.bf16.msra.mxu0 %v1256
    %2592 = vmatprep.subr.bf16.mxu0 %v1261
    %2593 = vmatpush1.bf16.msra.mxu0 %v1260
    %2594 = vmatprep.subr.bf16.mxu0 %v1265
    %2595 = vmatpush1.bf16.msra.mxu0 %v1264
    %2596 = vmatprep.subr.bf16.mxu0 %v1269
    %2597 = vmatpush1.bf16.msra.mxu0 %v1268
    %2598 = vmatprep.subr.bf16.mxu0 %v1273
    %2599 = vmatpush1.bf16.msra.mxu0 %v1272
    %2600 = vmatprep.subr.bf16.mxu0 %v1277
    %2601 = vmatpush1.bf16.msra.mxu0 %v1276
    %2602 = vmatprep.subr.bf16.mxu0 %v1281
    %2603 = vmatpush1.bf16.msra.mxu0 %v1280
    %2604 = vmatprep.subr.bf16.mxu0 %v1285
    %2605 = vmatpush1.bf16.msra.mxu0 %v1284
    %2606 = vmatprep.subr.bf16.mxu0 %v1289
    %2607 = vmatpush1.bf16.msra.mxu0 %v1288
    %2608 = vmatprep.subr.bf16.mxu0 %v1293
    %2609 = vmatpush1.bf16.msra.mxu0 %v1292
    %2610 = vmatprep.subr.bf16.mxu0 %v1297
    %2611 = vmatpush1.bf16.msra.mxu0 %v1296
    %2612 = vmatprep.subr.bf16.mxu0 %v1301
    %2613 = vmatpush1.bf16.msra.mxu0 %v1300
    %2614 = vmatprep.subr.bf16.mxu0 %v1305
    %2615 = vmatpush1.bf16.msra.mxu0 %v1304
    %2616 = vmatprep.mubr.bf16.mxu0 %v263
    %2617 = vmatmul.mubr.bf16.gmra.mrb[0].mxu0 %v262
    %v2618 = vpop.f32.mrb[0].mxu0
    %v2619 = vadd.f32 %v2426, %v2618
    %v2620 = vpop.f32.mrb[0].mxu0
    %v2621 = vadd.f32 %v2428, %v2620
    %v2622 = vpop.f32.mrb[0].mxu0
    %v2623 = vadd.f32 %v2430, %v2622
    %v2624 = vpop.f32.mrb[0].mxu0
    %v2625 = vadd.f32 %v2432, %v2624
    %2626 = vmatprep.mubr.bf16.mxu0 %v270
    %2627 = vmatmul.mubr.bf16.gmra.mrb[0].mxu0 %v269
    %v2628 = vpop.f32.mrb[0].mxu0
    %v2629 = vadd.f32 %v2436, %v2628
    %v2630 = vpop.f32.mrb[0].mxu0
    %v2631 = vadd.f32 %v2438, %v2630
    %v2632 = vpop.f32.mrb[0].mxu0
    %v2633 = vadd.f32 %v2440, %v2632
    %v2634 = vpop.f32.mrb[0].mxu0
    %v2635 = vadd.f32 %v2442, %v2634
    %2636 = vmatprep.mubr.bf16.mxu0 %v277
    %2637 = vmatmul.mubr.bf16.gmra.mrb[0].mxu0 %v276
    %v2638 = vpop.f32.mrb[0].mxu0
    %v2639 = vadd.f32 %v2446, %v2638
    %v2640 = vpop.f32.mrb[0].mxu0
    %v2641 = vadd.f32 %v2448, %v2640
    %v2642 = vpop.f32.mrb[0].mxu0
    %v2643 = vadd.f32 %v2450, %v2642
    %v2644 = vpop.f32.mrb[0].mxu0
    %v2645 = vadd.f32 %v2452, %v2644
    %2646 = vmatprep.mubr.bf16.mxu0 %v284
    %2647 = vmatmul.mubr.bf16.gmra.mrb[0].mxu0 %v283
    %v2648 = vpop.f32.mrb[0].mxu0
    %v2649 = vadd.f32 %v2456, %v2648
    %v2650 = vpop.f32.mrb[0].mxu0
    %v2651 = vadd.f32 %v2458, %v2650
    %v2652 = vpop.f32.mrb[0].mxu0
    %v2653 = vadd.f32 %v2460, %v2652
    %v2654 = vpop.f32.mrb[0].mxu0
    %v2655 = vadd.f32 %v2462, %v2654
    %2656 = vmatprep.mubr.bf16.mxu0 %v291
    %2657 = vmatmul.mubr.bf16.gmra.mrb[0].mxu0 %v290
    %v2658 = vpop.f32.mrb[0].mxu0
    %v2659 = vadd.f32 %v2466, %v2658
    %v2660 = vpop.f32.mrb[0].mxu0
    %v2661 = vadd.f32 %v2468, %v2660
    %v2662 = vpop.f32.mrb[0].mxu0
    %v2663 = vadd.f32 %v2470, %v2662
    %v2664 = vpop.f32.mrb[0].mxu0
    %v2665 = vadd.f32 %v2472, %v2664
    %2666 = vmatprep.mubr.bf16.mxu0 %v298
    %2667 = vmatmul.mubr.bf16.gmra.mrb[0].mxu0 %v297
    %v2668 = vpop.f32.mrb[0].mxu0
    %v2669 = vadd.f32 %v2476, %v2668
    %v2670 = vpop.f32.mrb[0].mxu0
    %v2671 = vadd.f32 %v2478, %v2670
    %v2672 = vpop.f32.mrb[0].mxu0
    %v2673 = vadd.f32 %v2480, %v2672
    %v2674 = vpop.f32.mrb[0].mxu0
    %v2675 = vadd.f32 %v2482, %v2674
    %2676 = vmatprep.mubr.bf16.mxu0 %v305
    %2677 = vmatmul.mubr.bf16.gmra.mrb[0].mxu0 %v304
    %v2678 = vpop.f32.mrb[0].mxu0
    %v2679 = vadd.f32 %v2486, %v2678
    %v2680 = vpop.f32.mrb[0].mxu0
    %v2681 = vadd.f32 %v2488, %v2680
    %v2682 = vpop.f32.mrb[0].mxu0
    %v2683 = vadd.f32 %v2490, %v2682
    %v2684 = vpop.f32.mrb[0].mxu0
    %v2685 = vadd.f32 %v2492, %v2684
    %2686 = vmatprep.mubr.bf16.mxu0 %v312
    %2687 = vmatmul.mubr.bf16.gmra.mrb[0].mxu0 %v311
    %v2688 = vpop.f32.mrb[0].mxu0
    %v2689 = vadd.f32 %v2496, %v2688
    %v2690 = vpop.f32.mrb[0].mxu0
    %v2691 = vadd.f32 %v2498, %v2690
    %v2692 = vpop.f32.mrb[0].mxu0
    %v2693 = vadd.f32 %v2500, %v2692
    %v2694 = vpop.f32.mrb[0].mxu0
    %v2695 = vadd.f32 %v2502, %v2694
    %2696 = vmatprep.mubr.bf16.mxu0 %v319
    %2697 = vmatmul.mubr.bf16.gmra.mrb[0].mxu0 %v318
    %v2698 = vpop.f32.mrb[0].mxu0
    %v2699 = vadd.f32 %v2506, %v2698
    %v2700 = vpop.f32.mrb[0].mxu0
    %v2701 = vadd.f32 %v2508, %v2700
    %v2702 = vpop.f32.mrb[0].mxu0
    %v2703 = vadd.f32 %v2510, %v2702
    %v2704 = vpop.f32.mrb[0].mxu0
    %v2705 = vadd.f32 %v2512, %v2704
    %2706 = vmatprep.mubr.bf16.mxu0 %v326
    %2707 = vmatmul.mubr.bf16.gmra.mrb[0].mxu0 %v325
    %v2708 = vpop.f32.mrb[0].mxu0
    %v2709 = vadd.f32 %v2516, %v2708
    %v2710 = vpop.f32.mrb[0].mxu0
    %v2711 = vadd.f32 %v2518, %v2710
    %v2712 = vpop.f32.mrb[0].mxu0
    %v2713 = vadd.f32 %v2520, %v2712
    %v2714 = vpop.f32.mrb[0].mxu0
    %v2715 = vadd.f32 %v2522, %v2714
    %2716 = vmatprep.mubr.bf16.mxu0 %v333
    %2717 = vmatmul.mubr.bf16.gmra.mrb[0].mxu0 %v332
    %v2718 = vpop.f32.mrb[0].mxu0
    %v2719 = vadd.f32 %v2526, %v2718
    %v2720 = vpop.f32.mrb[0].mxu0
    %v2721 = vadd.f32 %v2528, %v2720
    %v2722 = vpop.f32.mrb[0].mxu0
    %v2723 = vadd.f32 %v2530, %v2722
    %v2724 = vpop.f32.mrb[0].mxu0
    %v2725 = vadd.f32 %v2532, %v2724
    %2726 = vmatprep.mubr.bf16.mxu0 %v340
    %2727 = vmatmul.mubr.bf16.gmra.mrb[0].mxu0 %v339
    %v2728 = vpop.f32.mrb[0].mxu0
    %v2729 = vadd.f32 %v2536, %v2728
    %v2730 = vpop.f32.mrb[0].mxu0
    %v2731 = vadd.f32 %v2538, %v2730
    %v2732 = vpop.f32.mrb[0].mxu0
    %v2733 = vadd.f32 %v2540, %v2732
    %v2734 = vpop.f32.mrb[0].mxu0
    %v2735 = vadd.f32 %v2542, %v2734
    %2736 = vmatprep.mubr.bf16.mxu0 %v347
    %2737 = vmatmul.mubr.bf16.gmra.mrb[0].mxu0 %v346
    %v2738 = vpop.f32.mrb[0].mxu0
    %v2739 = vadd.f32 %v2546, %v2738
    %v2740 = vpop.f32.mrb[0].mxu0
    %v2741 = vadd.f32 %v2548, %v2740
    %v2742 = vpop.f32.mrb[0].mxu0
    %v2743 = vadd.f32 %v2550, %v2742
    %v2744 = vpop.f32.mrb[0].mxu0
    %v2745 = vadd.f32 %v2552, %v2744
    %2746 = vmatprep.mubr.bf16.mxu0 %v354
    %2747 = vmatmul.mubr.bf16.gmra.mrb[0].mxu0 %v353
    %v2748 = vpop.f32.mrb[0].mxu0
    %v2749 = vadd.f32 %v2556, %v2748
    %v2750 = vpop.f32.mrb[0].mxu0
    %v2751 = vadd.f32 %v2558, %v2750
    %v2752 = vpop.f32.mrb[0].mxu0
    %v2753 = vadd.f32 %v2560, %v2752
    %v2754 = vpop.f32.mrb[0].mxu0
    %v2755 = vadd.f32 %v2562, %v2754
    %2756 = vmatprep.mubr.bf16.mxu0 %v361
    %2757 = vmatmul.mubr.bf16.gmra.mrb[0].mxu0 %v360
    %v2758 = vpop.f32.mrb[0].mxu0
    %v2759 = vadd.f32 %v2566, %v2758
    %v2760 = vpop.f32.mrb[0].mxu0
    %v2761 = vadd.f32 %v2568, %v2760
    %v2762 = vpop.f32.mrb[0].mxu0
    %v2763 = vadd.f32 %v2570, %v2762
    %v2764 = vpop.f32.mrb[0].mxu0
    %v2765 = vadd.f32 %v2572, %v2764
    %2766 = vmatprep.mubr.bf16.mxu0 %v368
    %2767 = vmatmul.mubr.bf16.gmra.mrb[0].mxu0 %v367
    %v2768 = vpop.f32.mrb[0].mxu0
    %v2769 = vadd.f32 %v2576, %v2768
    %v2770 = vpop.f32.mrb[0].mxu0
    %v2771 = vadd.f32 %v2578, %v2770
    %v2772 = vpop.f32.mrb[0].mxu0
    %v2773 = vadd.f32 %v2580, %v2772
    %v2774 = vpop.f32.mrb[0].mxu0
    %v2775 = vadd.f32 %v2582, %v2774
    %2776 = vdwg.mxu0
    %2777 = vmatprep.subr.bf16.mxu0 %v1309
    %2778 = vmatpush1.bf16.msra.mxu0 %v1308
    %2779 = vmatprep.subr.bf16.mxu0 %v1313
    %2780 = vmatpush1.bf16.msra.mxu0 %v1312
    %2781 = vmatprep.subr.bf16.mxu0 %v1317
    %2782 = vmatpush1.bf16.msra.mxu0 %v1316
    %2783 = vmatprep.subr.bf16.mxu0 %v1321
    %2784 = vmatpush1.bf16.msra.mxu0 %v1320
    %2785 = vmatprep.subr.bf16.mxu0 %v1325
    %2786 = vmatpush1.bf16.msra.mxu0 %v1324
    %2787 = vmatprep.subr.bf16.mxu0 %v1329
    %2788 = vmatpush1.bf16.msra.mxu0 %v1328
    %2789 = vmatprep.subr.bf16.mxu0 %v1333
    %2790 = vmatpush1.bf16.msra.mxu0 %v1332
    %2791 = vmatprep.subr.bf16.mxu0 %v1337
    %2792 = vmatpush1.bf16.msra.mxu0 %v1336
    %2793 = vmatprep.subr.bf16.mxu0 %v1341
    %2794 = vmatpush1.bf16.msra.mxu0 %v1340
    %2795 = vmatprep.subr.bf16.mxu0 %v1345
    %2796 = vmatpush1.bf16.msra.mxu0 %v1344
    %2797 = vmatprep.subr.bf16.mxu0 %v1349
    %2798 = vmatpush1.bf16.msra.mxu0 %v1348
    %2799 = vmatprep.subr.bf16.mxu0 %v1353
    %2800 = vmatpush1.bf16.msra.mxu0 %v1352
    %2801 = vmatprep.subr.bf16.mxu0 %v1357
    %2802 = vmatpush1.bf16.msra.mxu0 %v1356
    %2803 = vmatprep.subr.bf16.mxu0 %v1361
    %2804 = vmatpush1.bf16.msra.mxu0 %v1360
    %2805 = vmatprep.subr.bf16.mxu0 %v1365
    %2806 = vmatpush1.bf16.msra.mxu0 %v1364
    %2807 = vmatprep.subr.bf16.mxu0 %v1369
    %2808 = vmatpush1.bf16.msra.mxu0 %v1368
    %2809 = vmatprep.mubr.bf16.mxu0 %v265
    %2810 = vmatmul.mubr.bf16.gmra.mrb[0].mxu0 %v264
    %v2811 = vpop.f32.mrb[0].mxu0
    %v2812 = vadd.f32 %v2619, %v2811
    %v2813 = vpop.f32.mrb[0].mxu0
    %v2814 = vadd.f32 %v2621, %v2813
    %v2815 = vpop.f32.mrb[0].mxu0
    %v2816 = vadd.f32 %v2623, %v2815
    %v2817 = vpop.f32.mrb[0].mxu0
    %v2818 = vadd.f32 %v2625, %v2817
    %2819 = vmatprep.mubr.bf16.mxu0 %v272
    %2820 = vmatmul.mubr.bf16.gmra.mrb[0].mxu0 %v271
    %v2821 = vpop.f32.mrb[0].mxu0
    %v2822 = vadd.f32 %v2629, %v2821
    %v2823 = vpop.f32.mrb[0].mxu0
    %v2824 = vadd.f32 %v2631, %v2823
    %v2825 = vpop.f32.mrb[0].mxu0
    %v2826 = vadd.f32 %v2633, %v2825
    %v2827 = vpop.f32.mrb[0].mxu0
    %v2828 = vadd.f32 %v2635, %v2827
    %2829 = vmatprep.mubr.bf16.mxu0 %v279
    %2830 = vmatmul.mubr.bf16.gmra.mrb[0].mxu0 %v278
    %v2831 = vpop.f32.mrb[0].mxu0
    %v2832 = vadd.f32 %v2639, %v2831
    %v2833 = vpop.f32.mrb[0].mxu0
    %v2834 = vadd.f32 %v2641, %v2833
    %v2835 = vpop.f32.mrb[0].mxu0
    %v2836 = vadd.f32 %v2643, %v2835
    %v2837 = vpop.f32.mrb[0].mxu0
    %v2838 = vadd.f32 %v2645, %v2837
    %2839 = vmatprep.mubr.bf16.mxu0 %v286
    %2840 = vmatmul.mubr.bf16.gmra.mrb[0].mxu0 %v285
    %v2841 = vpop.f32.mrb[0].mxu0
    %v2842 = vadd.f32 %v2649, %v2841
    %v2843 = vpop.f32.mrb[0].mxu0
    %v2844 = vadd.f32 %v2651, %v2843
    %v2845 = vpop.f32.mrb[0].mxu0
    %v2846 = vadd.f32 %v2653, %v2845
    %v2847 = vpop.f32.mrb[0].mxu0
    %v2848 = vadd.f32 %v2655, %v2847
    %2849 = vmatprep.mubr.bf16.mxu0 %v293
    %2850 = vmatmul.mubr.bf16.gmra.mrb[0].mxu0 %v292
    %v2851 = vpop.f32.mrb[0].mxu0
    %v2852 = vadd.f32 %v2659, %v2851
    %v2853 = vpop.f32.mrb[0].mxu0
    %v2854 = vadd.f32 %v2661, %v2853
    %v2855 = vpop.f32.mrb[0].mxu0
    %v2856 = vadd.f32 %v2663, %v2855
    %v2857 = vpop.f32.mrb[0].mxu0
    %v2858 = vadd.f32 %v2665, %v2857
    %2859 = vmatprep.mubr.bf16.mxu0 %v300
    %2860 = vmatmul.mubr.bf16.gmra.mrb[0].mxu0 %v299
    %v2861 = vpop.f32.mrb[0].mxu0
    %v2862 = vadd.f32 %v2669, %v2861
    %v2863 = vpop.f32.mrb[0].mxu0
    %v2864 = vadd.f32 %v2671, %v2863
    %v2865 = vpop.f32.mrb[0].mxu0
    %v2866 = vadd.f32 %v2673, %v2865
    %v2867 = vpop.f32.mrb[0].mxu0
    %v2868 = vadd.f32 %v2675, %v2867
    %2869 = vmatprep.mubr.bf16.mxu0 %v307
    %2870 = vmatmul.mubr.bf16.gmra.mrb[0].mxu0 %v306
    %v2871 = vpop.f32.mrb[0].mxu0
    %v2872 = vadd.f32 %v2679, %v2871
    %v2873 = vpop.f32.mrb[0].mxu0
    %v2874 = vadd.f32 %v2681, %v2873
    %v2875 = vpop.f32.mrb[0].mxu0
    %v2876 = vadd.f32 %v2683, %v2875
    %v2877 = vpop.f32.mrb[0].mxu0
    %v2878 = vadd.f32 %v2685, %v2877
    %2879 = vmatprep.mubr.bf16.mxu0 %v314
    %2880 = vmatmul.mubr.bf16.gmra.mrb[0].mxu0 %v313
    %v2881 = vpop.f32.mrb[0].mxu0
    %v2882 = vadd.f32 %v2689, %v2881
    %v2883 = vpop.f32.mrb[0].mxu0
    %v2884 = vadd.f32 %v2691, %v2883
    %v2885 = vpop.f32.mrb[0].mxu0
    %v2886 = vadd.f32 %v2693, %v2885
    %v2887 = vpop.f32.mrb[0].mxu0
    %v2888 = vadd.f32 %v2695, %v2887
    %2889 = vmatprep.mubr.bf16.mxu0 %v321
    %2890 = vmatmul.mubr.bf16.gmra.mrb[0].mxu0 %v320
    %v2891 = vpop.f32.mrb[0].mxu0
    %v2892 = vadd.f32 %v2699, %v2891
    %v2893 = vpop.f32.mrb[0].mxu0
    %v2894 = vadd.f32 %v2701, %v2893
    %v2895 = vpop.f32.mrb[0].mxu0
    %v2896 = vadd.f32 %v2703, %v2895
    %v2897 = vpop.f32.mrb[0].mxu0
    %v2898 = vadd.f32 %v2705, %v2897
    %2899 = vmatprep.mubr.bf16.mxu0 %v328
    %2900 = vmatmul.mubr.bf16.gmra.mrb[0].mxu0 %v327
    %v2901 = vpop.f32.mrb[0].mxu0
    %v2902 = vadd.f32 %v2709, %v2901
    %v2903 = vpop.f32.mrb[0].mxu0
    %v2904 = vadd.f32 %v2711, %v2903
    %v2905 = vpop.f32.mrb[0].mxu0
    %v2906 = vadd.f32 %v2713, %v2905
    %v2907 = vpop.f32.mrb[0].mxu0
    %v2908 = vadd.f32 %v2715, %v2907
    %2909 = vmatprep.mubr.bf16.mxu0 %v335
    %2910 = vmatmul.mubr.bf16.gmra.mrb[0].mxu0 %v334
    %v2911 = vpop.f32.mrb[0].mxu0
    %v2912 = vadd.f32 %v2719, %v2911
    %v2913 = vpop.f32.mrb[0].mxu0
    %v2914 = vadd.f32 %v2721, %v2913
    %v2915 = vpop.f32.mrb[0].mxu0
    %v2916 = vadd.f32 %v2723, %v2915
    %v2917 = vpop.f32.mrb[0].mxu0
    %v2918 = vadd.f32 %v2725, %v2917
    %2919 = vmatprep.mubr.bf16.mxu0 %v342
    %2920 = vmatmul.mubr.bf16.gmra.mrb[0].mxu0 %v341
    %v2921 = vpop.f32.mrb[0].mxu0
    %v2922 = vadd.f32 %v2729, %v2921
    %v2923 = vpop.f32.mrb[0].mxu0
    %v2924 = vadd.f32 %v2731, %v2923
    %v2925 = vpop.f32.mrb[0].mxu0
    %v2926 = vadd.f32 %v2733, %v2925
    %v2927 = vpop.f32.mrb[0].mxu0
    %v2928 = vadd.f32 %v2735, %v2927
    %2929 = vmatprep.mubr.bf16.mxu0 %v349
    %2930 = vmatmul.mubr.bf16.gmra.mrb[0].mxu0 %v348
    %v2931 = vpop.f32.mrb[0].mxu0
    %v2932 = vadd.f32 %v2739, %v2931
    %v2933 = vpop.f32.mrb[0].mxu0
    %v2934 = vadd.f32 %v2741, %v2933
    %v2935 = vpop.f32.mrb[0].mxu0
    %v2936 = vadd.f32 %v2743, %v2935
    %v2937 = vpop.f32.mrb[0].mxu0
    %v2938 = vadd.f32 %v2745, %v2937
    %2939 = vmatprep.mubr.bf16.mxu0 %v356
    %2940 = vmatmul.mubr.bf16.gmra.mrb[0].mxu0 %v355
    %v2941 = vpop.f32.mrb[0].mxu0
    %v2942 = vadd.f32 %v2749, %v2941
    %v2943 = vpop.f32.mrb[0].mxu0
    %v2944 = vadd.f32 %v2751, %v2943
    %v2945 = vpop.f32.mrb[0].mxu0
    %v2946 = vadd.f32 %v2753, %v2945
    %v2947 = vpop.f32.mrb[0].mxu0
    %v2948 = vadd.f32 %v2755, %v2947
    %2949 = vmatprep.mubr.bf16.mxu0 %v363
    %2950 = vmatmul.mubr.bf16.gmra.mrb[0].mxu0 %v362
    %v2951 = vpop.f32.mrb[0].mxu0
    %v2952 = vadd.f32 %v2759, %v2951
    %v2953 = vpop.f32.mrb[0].mxu0
    %v2954 = vadd.f32 %v2761, %v2953
    %v2955 = vpop.f32.mrb[0].mxu0
    %v2956 = vadd.f32 %v2763, %v2955
    %v2957 = vpop.f32.mrb[0].mxu0
    %v2958 = vadd.f32 %v2765, %v2957
    %2959 = vmatprep.mubr.bf16.mxu0 %v370
    %2960 = vmatmul.mubr.bf16.gmra.mrb[0].mxu0 %v369
    %v2961 = vpop.f32.mrb[0].mxu0
    %v2962 = vadd.f32 %v2769, %v2961
    %v2963 = vpop.f32.mrb[0].mxu0
    %v2964 = vadd.f32 %v2771, %v2963
    %v2965 = vpop.f32.mrb[0].mxu0
    %v2966 = vadd.f32 %v2773, %v2965
    %v2967 = vpop.f32.mrb[0].mxu0
    %v2968 = vadd.f32 %v2775, %v2967
    %2969 = vdwg.mxu0
    %2970 = vmatprep.subr.bf16.mxu0 %v1373
    %2971 = vmatpush1.bf16.msra.mxu0 %v1372
    %2972 = vmatprep.subr.bf16.mxu0 0
    %2973 = vmatpush1.bf16.msra.mxu0 0
    %2974 = vmatprep.subr.bf16.mxu0 0
    %2975 = vmatpush1.bf16.msra.mxu0 0
    %2976 = vmatprep.subr.bf16.mxu0 0
    %2977 = vmatpush1.bf16.msra.mxu0 0
    %2978 = vmatprep.subr.bf16.mxu0 0
    %2979 = vmatpush1.bf16.msra.mxu0 0
    %2980 = vmatprep.subr.bf16.mxu0 0
    %2981 = vmatpush1.bf16.msra.mxu0 0
    %2982 = vmatprep.subr.bf16.mxu0 0
    %2983 = vmatpush1.bf16.msra.mxu0 0
    %2984 = vmatprep.subr.bf16.mxu0 0
    %2985 = vmatpush1.bf16.msra.mxu0 0
    %2986 = vmatprep.subr.bf16.mxu0 0
    %2987 = vmatpush1.bf16.msra.mxu0 0
    %2988 = vmatprep.subr.bf16.mxu0 0
    %2989 = vmatpush1.bf16.msra.mxu0 0
    %2990 = vmatprep.subr.bf16.mxu0 0
    %2991 = vmatpush1.bf16.msra.mxu0 0
    %2992 = vmatprep.subr.bf16.mxu0 0
    %2993 = vmatpush1.bf16.msra.mxu0 0
    %2994 = vmatprep.subr.bf16.mxu0 0
    %2995 = vmatpush1.bf16.msra.mxu0 0
    %2996 = vmatprep.subr.bf16.mxu0 0
    %2997 = vmatpush1.bf16.msra.mxu0 0
    %2998 = vmatprep.subr.bf16.mxu0 0
    %2999 = vmatpush1.bf16.msra.mxu0 0
    %3000 = vmatprep.subr.bf16.mxu0 0
    %3001 = vmatpush1.bf16.msra.mxu0 0
    %3002 = vmatprep.mubr.bf16.mxu0 0
    %3003 = vmatmul.mubr.bf16.gmra.mrb[0].mxu0 %v1572
    %v3004 = vpop.f32.mrb[0].mxu0
    %v3005 = vadd.f32 %v2812, %v3004
    %v3006 = vpop.f32.mrb[0].mxu0
    %v3007 = vadd.f32 %v2814, %v3006
    %v3008 = vpop.f32.mrb[0].mxu0
    %v3009 = vadd.f32 %v2816, %v3008
    %v3010 = vpop.f32.mrb[0].mxu0
    %v3011 = vadd.f32 %v2818, %v3010
    %3012 = vmatprep.mubr.bf16.mxu0 0
    %3013 = vmatmul.mubr.bf16.gmra.mrb[0].mxu0 %v1575
    %v3014 = vpop.f32.mrb[0].mxu0
    %v3015 = vadd.f32 %v2822, %v3014
    %v3016 = vpop.f32.mrb[0].mxu0
    %v3017 = vadd.f32 %v2824, %v3016
    %v3018 = vpop.f32.mrb[0].mxu0
    %v3019 = vadd.f32 %v2826, %v3018
    %v3020 = vpop.f32.mrb[0].mxu0
    %v3021 = vadd.f32 %v2828, %v3020
    %3022 = vmatprep.mubr.bf16.mxu0 0
    %3023 = vmatmul.mubr.bf16.gmra.mrb[0].mxu0 %v1578
    %v3024 = vpop.f32.mrb[0].mxu0
    %v3025 = vadd.f32 %v2832, %v3024
    %v3026 = vpop.f32.mrb[0].mxu0
    %v3027 = vadd.f32 %v2834, %v3026
    %v3028 = vpop.f32.mrb[0].mxu0
    %v3029 = vadd.f32 %v2836, %v3028
    %v3030 = vpop.f32.mrb[0].mxu0
    %v3031 = vadd.f32 %v2838, %v3030
    %3032 = vmatprep.mubr.bf16.mxu0 0
    %3033 = vmatmul.mubr.bf16.gmra.mrb[0].mxu0 %v1581
    %v3034 = vpop.f32.mrb[0].mxu0
    %v3035 = vadd.f32 %v2842, %v3034
    %v3036 = vpop.f32.mrb[0].mxu0
    %v3037 = vadd.f32 %v2844, %v3036
    %v3038 = vpop.f32.mrb[0].mxu0
    %v3039 = vadd.f32 %v2846, %v3038
    %v3040 = vpop.f32.mrb[0].mxu0
    %v3041 = vadd.f32 %v2848, %v3040
    %3042 = vmatprep.mubr.bf16.mxu0 0
    %3043 = vmatmul.mubr.bf16.gmra.mrb[0].mxu0 %v1584
    %v3044 = vpop.f32.mrb[0].mxu0
    %v3045 = vadd.f32 %v2852, %v3044
    %v3046 = vpop.f32.mrb[0].mxu0
    %v3047 = vadd.f32 %v2854, %v3046
    %v3048 = vpop.f32.mrb[0].mxu0
    %v3049 = vadd.f32 %v2856, %v3048
    %v3050 = vpop.f32.mrb[0].mxu0
    %v3051 = vadd.f32 %v2858, %v3050
    %3052 = vmatprep.mubr.bf16.mxu0 0
    %3053 = vmatmul.mubr.bf16.gmra.mrb[0].mxu0 %v1587
    %v3054 = vpop.f32.mrb[0].mxu0
    %v3055 = vadd.f32 %v2862, %v3054
    %v3056 = vpop.f32.mrb[0].mxu0
    %v3057 = vadd.f32 %v2864, %v3056
    %v3058 = vpop.f32.mrb[0].mxu0
    %v3059 = vadd.f32 %v2866, %v3058
    %v3060 = vpop.f32.mrb[0].mxu0
    %v3061 = vadd.f32 %v2868, %v3060
    %3062 = vmatprep.mubr.bf16.mxu0 0
    %3063 = vmatmul.mubr.bf16.gmra.mrb[0].mxu0 %v1590
    %v3064 = vpop.f32.mrb[0].mxu0
    %v3065 = vadd.f32 %v2872, %v3064
    %v3066 = vpop.f32.mrb[0].mxu0
    %v3067 = vadd.f32 %v2874, %v3066
    %v3068 = vpop.f32.mrb[0].mxu0
    %v3069 = vadd.f32 %v2876, %v3068
    %v3070 = vpop.f32.mrb[0].mxu0
    %v3071 = vadd.f32 %v2878, %v3070
    %3072 = vmatprep.mubr.bf16.mxu0 0
    %3073 = vmatmul.mubr.bf16.gmra.mrb[0].mxu0 %v1593
    %v3074 = vpop.f32.mrb[0].mxu0
    %v3075 = vadd.f32 %v2882, %v3074
    %v3076 = vpop.f32.mrb[0].mxu0
    %v3077 = vadd.f32 %v2884, %v3076
    %v3078 = vpop.f32.mrb[0].mxu0
    %v3079 = vadd.f32 %v2886, %v3078
    %v3080 = vpop.f32.mrb[0].mxu0
    %v3081 = vadd.f32 %v2888, %v3080
    %3082 = vmatprep.mubr.bf16.mxu0 0
    %3083 = vmatmul.mubr.bf16.gmra.mrb[0].mxu0 %v1596
    %v3084 = vpop.f32.mrb[0].mxu0
    %v3085 = vadd.f32 %v2892, %v3084
    %v3086 = vpop.f32.mrb[0].mxu0
    %v3087 = vadd.f32 %v2894, %v3086
    %v3088 = vpop.f32.mrb[0].mxu0
    %v3089 = vadd.f32 %v2896, %v3088
    %v3090 = vpop.f32.mrb[0].mxu0
    %v3091 = vadd.f32 %v2898, %v3090
    %3092 = vmatprep.mubr.bf16.mxu0 0
    %3093 = vmatmul.mubr.bf16.gmra.mrb[0].mxu0 %v1599
    %v3094 = vpop.f32.mrb[0].mxu0
    %v3095 = vadd.f32 %v2902, %v3094
    %v3096 = vpop.f32.mrb[0].mxu0
    %v3097 = vadd.f32 %v2904, %v3096
    %v3098 = vpop.f32.mrb[0].mxu0
    %v3099 = vadd.f32 %v2906, %v3098
    %v3100 = vpop.f32.mrb[0].mxu0
    %v3101 = vadd.f32 %v2908, %v3100
    %3102 = vmatprep.mubr.bf16.mxu0 0
    %3103 = vmatmul.mubr.bf16.gmra.mrb[0].mxu0 %v1602
    %v3104 = vpop.f32.mrb[0].mxu0
    %v3105 = vadd.f32 %v2912, %v3104
    %v3106 = vpop.f32.mrb[0].mxu0
    %v3107 = vadd.f32 %v2914, %v3106
    %v3108 = vpop.f32.mrb[0].mxu0
    %v3109 = vadd.f32 %v2916, %v3108
    %v3110 = vpop.f32.mrb[0].mxu0
    %v3111 = vadd.f32 %v2918, %v3110
    %3112 = vmatprep.mubr.bf16.mxu0 0
    %3113 = vmatmul.mubr.bf16.gmra.mrb[0].mxu0 %v1605
    %v3114 = vpop.f32.mrb[0].mxu0
    %v3115 = vadd.f32 %v2922, %v3114
    %v3116 = vpop.f32.mrb[0].mxu0
    %v3117 = vadd.f32 %v2924, %v3116
    %v3118 = vpop.f32.mrb[0].mxu0
    %v3119 = vadd.f32 %v2926, %v3118
    %v3120 = vpop.f32.mrb[0].mxu0
    %v3121 = vadd.f32 %v2928, %v3120
    %3122 = vmatprep.mubr.bf16.mxu0 0
    %3123 = vmatmul.mubr.bf16.gmra.mrb[0].mxu0 %v1608
    %v3124 = vpop.f32.mrb[0].mxu0
    %v3125 = vadd.f32 %v2932, %v3124
    %v3126 = vpop.f32.mrb[0].mxu0
    %v3127 = vadd.f32 %v2934, %v3126
    %v3128 = vpop.f32.mrb[0].mxu0
    %v3129 = vadd.f32 %v2936, %v3128
    %v3130 = vpop.f32.mrb[0].mxu0
    %v3131 = vadd.f32 %v2938, %v3130
    %3132 = vmatprep.mubr.bf16.mxu0 0
    %3133 = vmatmul.mubr.bf16.gmra.mrb[0].mxu0 %v1611
    %v3134 = vpop.f32.mrb[0].mxu0
    %v3135 = vadd.f32 %v2942, %v3134
    %v3136 = vpop.f32.mrb[0].mxu0
    %v3137 = vadd.f32 %v2944, %v3136
    %v3138 = vpop.f32.mrb[0].mxu0
    %v3139 = vadd.f32 %v2946, %v3138
    %v3140 = vpop.f32.mrb[0].mxu0
    %v3141 = vadd.f32 %v2948, %v3140
    %3142 = vmatprep.mubr.bf16.mxu0 0
    %3143 = vmatmul.mubr.bf16.gmra.mrb[0].mxu0 %v1614
    %v3144 = vpop.f32.mrb[0].mxu0
    %v3145 = vadd.f32 %v2952, %v3144
    %v3146 = vpop.f32.mrb[0].mxu0
    %v3147 = vadd.f32 %v2954, %v3146
    %v3148 = vpop.f32.mrb[0].mxu0
    %v3149 = vadd.f32 %v2956, %v3148
    %v3150 = vpop.f32.mrb[0].mxu0
    %v3151 = vadd.f32 %v2958, %v3150
    %3152 = vmatprep.mubr.bf16.mxu0 0
    %3153 = vmatmul.mubr.bf16.gmra.mrb[0].mxu0 %v1617
    %v3154 = vpop.f32.mrb[0].mxu0
    %v3155 = vadd.f32 %v2962, %v3154
    %v3156 = vpop.f32.mrb[0].mxu0
    %v3157 = vadd.f32 %v2964, %v3156
    %v3158 = vpop.f32.mrb[0].mxu0
    %v3159 = vadd.f32 %v2966, %v3158
    %v3160 = vpop.f32.mrb[0].mxu0
    %v3161 = vadd.f32 %v2968, %v3160
    %3162 = vdwg.mxu0
    %v3163 = vmul.f32 %v2233, 0.2
    %v3164 = vmul.f32 %v2235, 0.2
    %v3165 = vmul.f32 %v3005, 0.2
    %v3166 = vmul.f32 %v3007, 0.2
    %v3167 = vmul.f32 %v2237, 0.2
    %v3168 = vmul.f32 %v2239, 0.2
    %v3169 = vmul.f32 %v3009, 0.2
    %v3170 = vmul.f32 %v3011, 0.2
    %v3171 = vmul.f32 %v2243, 0.2
    %v3172 = vmul.f32 %v2245, 0.2
    %v3173 = vmul.f32 %v3015, 0.2
    %v3174 = vmul.f32 %v3017, 0.2
    %v3175 = vmul.f32 %v2247, 0.2
    %v3176 = vmul.f32 %v2249, 0.2
    %v3177 = vmul.f32 %v3019, 0.2
    %v3178 = vmul.f32 %v3021, 0.2
    %v3179 = vmul.f32 %v2253, 0.2
    %v3180 = vmul.f32 %v2255, 0.2
    %v3181 = vmul.f32 %v3025, 0.2
    %v3182 = vmul.f32 %v3027, 0.2
    %v3183 = vmul.f32 %v2257, 0.2
    %v3184 = vmul.f32 %v2259, 0.2
    %v3185 = vmul.f32 %v3029, 0.2
    %v3186 = vmul.f32 %v3031, 0.2
    %v3187 = vmul.f32 %v2263, 0.2
    %v3188 = vmul.f32 %v2265, 0.2
    %v3189 = vmul.f32 %v3035, 0.2
    %v3190 = vmul.f32 %v3037, 0.2
    %v3191 = vmul.f32 %v2267, 0.2
    %v3192 = vmul.f32 %v2269, 0.2
    %v3193 = vmul.f32 %v3039, 0.2
    %v3194 = vmul.f32 %v3041, 0.2
    %v3195 = vmul.f32 %v2273, 0.2
    %v3196 = vmul.f32 %v2275, 0.2
    %v3197 = vmul.f32 %v3045, 0.2
    %v3198 = vmul.f32 %v3047, 0.2
    %v3199 = vmul.f32 %v2277, 0.2
    %v3200 = vmul.f32 %v2279, 0.2
    %v3201 = vmul.f32 %v3049, 0.2
    %v3202 = vmul.f32 %v3051, 0.2
    %v3203 = vmul.f32 %v2283, 0.2
    %v3204 = vmul.f32 %v2285, 0.2
    %v3205 = vmul.f32 %v3055, 0.2
    %v3206 = vmul.f32 %v3057, 0.2
    %v3207 = vmul.f32 %v2287, 0.2
    %v3208 = vmul.f32 %v2289, 0.2
    %v3209 = vmul.f32 %v3059, 0.2
    %v3210 = vmul.f32 %v3061, 0.2
    %v3211 = vmul.f32 %v2293, 0.2
    %v3212 = vmul.f32 %v2295, 0.2
    %v3213 = vmul.f32 %v3065, 0.2
    %v3214 = vmul.f32 %v3067, 0.2
    %v3215 = vmul.f32 %v2297, 0.2
    %v3216 = vmul.f32 %v2299, 0.2
    %v3217 = vmul.f32 %v3069, 0.2
    %v3218 = vmul.f32 %v3071, 0.2
    %v3219 = vmul.f32 %v2303, 0.2
    %v3220 = vmul.f32 %v2305, 0.2
    %v3221 = vmul.f32 %v3075, 0.2
    %v3222 = vmul.f32 %v3077, 0.2
    %v3223 = vmul.f32 %v2307, 0.2
    %v3224 = vmul.f32 %v2309, 0.2
    %v3225 = vmul.f32 %v3079, 0.2
    %v3226 = vmul.f32 %v3081, 0.2
    %v3227 = vmul.f32 %v2313, 0.2
    %v3228 = vmul.f32 %v2315, 0.2
    %v3229 = vmul.f32 %v3085, 0.2
    %v3230 = vmul.f32 %v3087, 0.2
    %v3231 = vmul.f32 %v2317, 0.2
    %v3232 = vmul.f32 %v2319, 0.2
    %v3233 = vmul.f32 %v3089, 0.2
    %v3234 = vmul.f32 %v3091, 0.2
    %v3235 = vmul.f32 %v2323, 0.2
    %v3236 = vmul.f32 %v2325, 0.2
    %v3237 = vmul.f32 %v3095, 0.2
    %v3238 = vmul.f32 %v3097, 0.2
    %v3239 = vmul.f32 %v2327, 0.2
    %v3240 = vmul.f32 %v2329, 0.2
    %v3241 = vmul.f32 %v3099, 0.2
    %v3242 = vmul.f32 %v3101, 0.2
    %v3243 = vmul.f32 %v2333, 0.2
    %v3244 = vmul.f32 %v2335, 0.2
    %v3245 = vmul.f32 %v3105, 0.2
    %v3246 = vmul.f32 %v3107, 0.2
    %v3247 = vmul.f32 %v2337, 0.2
    %v3248 = vmul.f32 %v2339, 0.2
    %v3249 = vmul.f32 %v3109, 0.2
    %v3250 = vmul.f32 %v3111, 0.2
    %v3251 = vmul.f32 %v2343, 0.2
    %v3252 = vmul.f32 %v2345, 0.2
    %v3253 = vmul.f32 %v3115, 0.2
    %v3254 = vmul.f32 %v3117, 0.2
    %v3255 = vmul.f32 %v2347, 0.2
    %v3256 = vmul.f32 %v2349, 0.2
    %v3257 = vmul.f32 %v3119, 0.2
    %v3258 = vmul.f32 %v3121, 0.2
    %v3259 = vmul.f32 %v2353, 0.2
    %v3260 = vmul.f32 %v2355, 0.2
    %v3261 = vmul.f32 %v3125, 0.2
    %v3262 = vmul.f32 %v3127, 0.2
    %v3263 = vmul.f32 %v2357, 0.2
    %v3264 = vmul.f32 %v2359, 0.2
    %v3265 = vmul.f32 %v3129, 0.2
    %v3266 = vmul.f32 %v3131, 0.2
    %v3267 = vmul.f32 %v2363, 0.2
    %v3268 = vmul.f32 %v2365, 0.2
    %v3269 = vmul.f32 %v3135, 0.2
    %v3270 = vmul.f32 %v3137, 0.2
    %v3271 = vmul.f32 %v2367, 0.2
    %v3272 = vmul.f32 %v2369, 0.2
    %v3273 = vmul.f32 %v3139, 0.2
    %v3274 = vmul.f32 %v3141, 0.2
    %v3275 = vmul.f32 %v2373, 0.2
    %v3276 = vmul.f32 %v2375, 0.2
    %v3277 = vmul.f32 %v3145, 0.2
    %v3278 = vmul.f32 %v3147, 0.2
    %v3279 = vmul.f32 %v2377, 0.2
    %v3280 = vmul.f32 %v2379, 0.2
    %v3281 = vmul.f32 %v3149, 0.2
    %v3282 = vmul.f32 %v3151, 0.2
    %v3283 = vmul.f32 %v2383, 0.2
    %v3284 = vmul.f32 %v2385, 0.2
    %v3285 = vmul.f32 %v3155, 0.2
    %v3286 = vmul.f32 %v3157, 0.2
    %v3287 = vmul.f32 %v2387, 0.2
    %v3288 = vmul.f32 %v2389, 0.2
    %v3289 = vmul.f32 %v3159, 0.2
    %v3290 = vmul.f32 %v3161, 0.2
    %v3291 = vmax.f32 %v2233, %v3163
    %v3292 = vmax.f32 %v2235, %v3164
    %v3293 = vmax.f32 %v3005, %v3165
    %v3294 = vmax.f32 %v3007, %v3166
    %v3295 = vmax.f32 %v2237, %v3167
    %v3296 = vmax.f32 %v2239, %v3168
    %v3297 = vmax.f32 %v3009, %v3169
    %v3298 = vmax.f32 %v3011, %v3170
    %v3299 = vmax.f32 %v2243, %v3171
    %v3300 = vmax.f32 %v2245, %v3172
    %v3301 = vmax.f32 %v3015, %v3173
    %v3302 = vmax.f32 %v3017, %v3174
    %v3303 = vmax.f32 %v2247, %v3175
    %v3304 = vmax.f32 %v2249, %v3176
    %v3305 = vmax.f32 %v3019, %v3177
    %v3306 = vmax.f32 %v3021, %v3178
    %v3307 = vmax.f32 %v2253, %v3179
    %v3308 = vmax.f32 %v2255, %v3180
    %v3309 = vmax.f32 %v3025, %v3181
    %v3310 = vmax.f32 %v3027, %v3182
    %v3311 = vmax.f32 %v2257, %v3183
    %v3312 = vmax.f32 %v2259, %v3184
    %v3313 = vmax.f32 %v3029, %v3185
    %v3314 = vmax.f32 %v3031, %v3186
    %v3315 = vmax.f32 %v2263, %v3187
    %v3316 = vmax.f32 %v2265, %v3188
    %v3317 = vmax.f32 %v3035, %v3189
    %v3318 = vmax.f32 %v3037, %v3190
    %v3319 = vmax.f32 %v2267, %v3191
    %v3320 = vmax.f32 %v2269, %v3192
    %v3321 = vmax.f32 %v3039, %v3193
    %v3322 = vmax.f32 %v3041, %v3194
    %v3323 = vmax.f32 %v2273, %v3195
    %v3324 = vmax.f32 %v2275, %v3196
    %v3325 = vmax.f32 %v3045, %v3197
    %v3326 = vmax.f32 %v3047, %v3198
    %v3327 = vmax.f32 %v2277, %v3199
    %v3328 = vmax.f32 %v2279, %v3200
    %v3329 = vmax.f32 %v3049, %v3201
    %v3330 = vmax.f32 %v3051, %v3202
    %v3331 = vmax.f32 %v2283, %v3203
    %v3332 = vmax.f32 %v2285, %v3204
    %v3333 = vmax.f32 %v3055, %v3205
    %v3334 = vmax.f32 %v3057, %v3206
    %v3335 = vmax.f32 %v2287, %v3207
    %v3336 = vmax.f32 %v2289, %v3208
    %v3337 = vmax.f32 %v3059, %v3209
    %v3338 = vmax.f32 %v3061, %v3210
    %v3339 = vmax.f32 %v2293, %v3211
    %v3340 = vmax.f32 %v2295, %v3212
    %v3341 = vmax.f32 %v3065, %v3213
    %v3342 = vmax.f32 %v3067, %v3214
    %v3343 = vmax.f32 %v2297, %v3215
    %v3344 = vmax.f32 %v2299, %v3216
    %v3345 = vmax.f32 %v3069, %v3217
    %v3346 = vmax.f32 %v3071, %v3218
    %v3347 = vmax.f32 %v2303, %v3219
    %v3348 = vmax.f32 %v2305, %v3220
    %v3349 = vmax.f32 %v3075, %v3221
    %v3350 = vmax.f32 %v3077, %v3222
    %v3351 = vmax.f32 %v2307, %v3223
    %v3352 = vmax.f32 %v2309, %v3224
    %v3353 = vmax.f32 %v3079, %v3225
    %v3354 = vmax.f32 %v3081, %v3226
    %v3355 = vmax.f32 %v2313, %v3227
    %v3356 = vmax.f32 %v2315, %v3228
    %v3357 = vmax.f32 %v3085, %v3229
    %v3358 = vmax.f32 %v3087, %v3230
    %v3359 = vmax.f32 %v2317, %v3231
    %v3360 = vmax.f32 %v2319, %v3232
    %v3361 = vmax.f32 %v3089, %v3233
    %v3362 = vmax.f32 %v3091, %v3234
    %v3363 = vmax.f32 %v2323, %v3235
    %v3364 = vmax.f32 %v2325, %v3236
    %v3365 = vmax.f32 %v3095, %v3237
    %v3366 = vmax.f32 %v3097, %v3238
    %v3367 = vmax.f32 %v2327, %v3239
    %v3368 = vmax.f32 %v2329, %v3240
    %v3369 = vmax.f32 %v3099, %v3241
    %v3370 = vmax.f32 %v3101, %v3242
    %v3371 = vmax.f32 %v2333, %v3243
    %v3372 = vmax.f32 %v2335, %v3244
    %v3373 = vmax.f32 %v3105, %v3245
    %v3374 = vmax.f32 %v3107, %v3246
    %v3375 = vmax.f32 %v2337, %v3247
    %v3376 = vmax.f32 %v2339, %v3248
    %v3377 = vmax.f32 %v3109, %v3249
    %v3378 = vmax.f32 %v3111, %v3250
    %v3379 = vmax.f32 %v2343, %v3251
    %v3380 = vmax.f32 %v2345, %v3252
    %v3381 = vmax.f32 %v3115, %v3253
    %v3382 = vmax.f32 %v3117, %v3254
    %v3383 = vmax.f32 %v2347, %v3255
    %v3384 = vmax.f32 %v2349, %v3256
    %v3385 = vmax.f32 %v3119, %v3257
    %v3386 = vmax.f32 %v3121, %v3258
    %v3387 = vmax.f32 %v2353, %v3259
    %v3388 = vmax.f32 %v2355, %v3260
    %v3389 = vmax.f32 %v3125, %v3261
    %v3390 = vmax.f32 %v3127, %v3262
    %v3391 = vmax.f32 %v2357, %v3263
    %v3392 = vmax.f32 %v2359, %v3264
    %v3393 = vmax.f32 %v3129, %v3265
    %v3394 = vmax.f32 %v3131, %v3266
    %v3395 = vmax.f32 %v2363, %v3267
    %v3396 = vmax.f32 %v2365, %v3268
    %v3397 = vmax.f32 %v3135, %v3269
    %v3398 = vmax.f32 %v3137, %v3270
    %v3399 = vmax.f32 %v2367, %v3271
    %v3400 = vmax.f32 %v2369, %v3272
    %v3401 = vmax.f32 %v3139, %v3273
    %v3402 = vmax.f32 %v3141, %v3274
    %v3403 = vmax.f32 %v2373, %v3275
    %v3404 = vmax.f32 %v2375, %v3276
    %v3405 = vmax.f32 %v3145, %v3277
    %v3406 = vmax.f32 %v3147, %v3278
    %v3407 = vmax.f32 %v2377, %v3279
    %v3408 = vmax.f32 %v2379, %v3280
    %v3409 = vmax.f32 %v3149, %v3281
    %v3410 = vmax.f32 %v3151, %v3282
    %v3411 = vmax.f32 %v2383, %v3283
    %v3412 = vmax.f32 %v2385, %v3284
    %v3413 = vmax.f32 %v3155, %v3285
    %v3414 = vmax.f32 %v3157, %v3286
    %v3415 = vmax.f32 %v2387, %v3287
    %v3416 = vmax.f32 %v2389, %v3288
    %v3417 = vmax.f32 %v3159, %v3289
    %v3418 = vmax.f32 %v3161, %v3290
    %v3419 = vpack.c.bf16 %v3295, %v3291
    %v3420 = vpack.c.bf16 %v3296, %v3292
    %v3421 = vpack.c.bf16 %v3297, %v3293
    %v3422 = vpack.c.bf16 %v3298, %v3294
    %v3423 = vpack.c.bf16 %v3303, %v3299
    %v3424 = vpack.c.bf16 %v3304, %v3300
    %v3425 = vpack.c.bf16 %v3305, %v3301
    %v3426 = vpack.c.bf16 %v3306, %v3302
    %v3427 = vpack.c.bf16 %v3311, %v3307
    %v3428 = vpack.c.bf16 %v3312, %v3308
    %v3429 = vpack.c.bf16 %v3313, %v3309
    %v3430 = vpack.c.bf16 %v3314, %v3310
    %v3431 = vpack.c.bf16 %v3319, %v3315
    %v3432 = vpack.c.bf16 %v3320, %v3316
    %v3433 = vpack.c.bf16 %v3321, %v3317
    %v3434 = vpack.c.bf16 %v3322, %v3318
    %v3435 = vpack.c.bf16 %v3327, %v3323
    %v3436 = vpack.c.bf16 %v3328, %v3324
    %v3437 = vpack.c.bf16 %v3329, %v3325
    %v3438 = vpack.c.bf16 %v3330, %v3326
    %v3439 = vpack.c.bf16 %v3335, %v3331
    %v3440 = vpack.c.bf16 %v3336, %v3332
    %v3441 = vpack.c.bf16 %v3337, %v3333
    %v3442 = vpack.c.bf16 %v3338, %v3334
    %v3443 = vpack.c.bf16 %v3343, %v3339
    %v3444 = vpack.c.bf16 %v3344, %v3340
    %v3445 = vpack.c.bf16 %v3345, %v3341
    %v3446 = vpack.c.bf16 %v3346, %v3342
    %v3447 = vpack.c.bf16 %v3351, %v3347
    %v3448 = vpack.c.bf16 %v3352, %v3348
    %v3449 = vpack.c.bf16 %v3353, %v3349
    %v3450 = vpack.c.bf16 %v3354, %v3350
    %v3451 = vpack.c.bf16 %v3359, %v3355
    %v3452 = vpack.c.bf16 %v3360, %v3356
    %v3453 = vpack.c.bf16 %v3361, %v3357
    %v3454 = vpack.c.bf16 %v3362, %v3358
    %v3455 = vpack.c.bf16 %v3367, %v3363
    %v3456 = vpack.c.bf16 %v3368, %v3364
    %v3457 = vpack.c.bf16 %v3369, %v3365
    %v3458 = vpack.c.bf16 %v3370, %v3366
    %v3459 = vpack.c.bf16 %v3375, %v3371
    %v3460 = vpack.c.bf16 %v3376, %v3372
    %v3461 = vpack.c.bf16 %v3377, %v3373
    %v3462 = vpack.c.bf16 %v3378, %v3374
    %v3463 = vpack.c.bf16 %v3383, %v3379
    %v3464 = vpack.c.bf16 %v3384, %v3380
    %v3465 = vpack.c.bf16 %v3385, %v3381
    %v3466 = vpack.c.bf16 %v3386, %v3382
    %v3467 = vpack.c.bf16 %v3391, %v3387
    %v3468 = vpack.c.bf16 %v3392, %v3388
    %v3469 = vpack.c.bf16 %v3393, %v3389
    %v3470 = vpack.c.bf16 %v3394, %v3390
    %v3471 = vpack.c.bf16 %v3399, %v3395
    %v3472 = vpack.c.bf16 %v3400, %v3396
    %v3473 = vpack.c.bf16 %v3401, %v3397
    %v3474 = vpack.c.bf16 %v3402, %v3398
    %v3475 = vpack.c.bf16 %v3407, %v3403
    %v3476 = vpack.c.bf16 %v3408, %v3404
    %v3477 = vpack.c.bf16 %v3409, %v3405
    %v3478 = vpack.c.bf16 %v3410, %v3406
    %v3479 = vpack.c.bf16 %v3415, %v3411
    %v3480 = vpack.c.bf16 %v3416, %v3412
    %v3481 = vpack.c.bf16 %v3417, %v3413
    %v3482 = vpack.c.bf16 %v3418, %v3414
    %v3483 = vld [vmem:[%s3] sm:$0xff]
    %v3484 = vld [vmem:[%s3 + $0x8] sm:$0xff]
    %v3485 = vld [vmem:[%s3 + $0x10] sm:$0xff]
    %v3486 = vld [vmem:[%s3 + $0x18] sm:$0xff]
    %v3487 = vld [vmem:[%s3 + $0x20] sm:$0xff]
    %v3488 = vld [vmem:[%s3 + $0x28] sm:$0xff]
    %v3489 = vld [vmem:[%s3 + $0x30] sm:$0xff]
    %v3490 = vld [vmem:[%s3 + $0x38] sm:$0xff]
    %v3491 = vld [vmem:[%s3 + $0x40] sm:$0xff]
    %v3492 = vld [vmem:[%s3 + $0x48] sm:$0xff]
    %v3493 = vld [vmem:[%s3 + $0x50] sm:$0xff]
    %v3494 = vld [vmem:[%s3 + $0x58] sm:$0xff]
    %v3495 = vld [vmem:[%s3 + $0x60] sm:$0xff]
    %v3496 = vld [vmem:[%s3 + $0x68] sm:$0xff]
    %v3497 = vld [vmem:[%s3 + $0x70] sm:$0xff]
    %v3498 = vld [vmem:[%s3 + $0x78] sm:$0xff]
    %v3499 = vld [vmem:[%s3 + $0x80] sm:$0xff]
    %v3500 = vld [vmem:[%s3 + $0x88] sm:$0xff]
    %v3501 = vld [vmem:[%s3 + $0x90] sm:$0xff]
    %v3502 = vld [vmem:[%s3 + $0x98] sm:$0xff]
    %v3503 = vld [vmem:[%s3 + $0xa0] sm:$0xff]
    %v3504 = vld [vmem:[%s3 + $0xa8] sm:$0xff]
    %v3505 = vld [vmem:[%s3 + $0xb0] sm:$0xff]
    %v3506 = vld [vmem:[%s3 + $0xb8] sm:$0xff]
    %v3507 = vld [vmem:[%s3 + $0xc0] sm:$0xff]
    %v3508 = vld [vmem:[%s3 + $0xc8] sm:$0xff]
    %v3509 = vld [vmem:[%s3 + $0xd0] sm:$0xff]
    %v3510 = vld [vmem:[%s3 + $0xd8] sm:$0xff]
    %v3511 = vld [vmem:[%s3 + $0xe0] sm:$0xff]
    %v3512 = vld [vmem:[%s3 + $0xe8] sm:$0xff]
    %v3513 = vld [vmem:[%s3 + $0xf0] sm:$0xff]
    %v3514 = vld [vmem:[%s3 + $0xf8] sm:$0xff]
    %v3515 = vld [vmem:[%s3 + $0x100] sm:$0xff]
    %v3516 = vld [vmem:[%s3 + $0x108] sm:$0xff]
    %v3517 = vld [vmem:[%s3 + $0x110] sm:$0xff]
    %v3518 = vld [vmem:[%s3 + $0x118] sm:$0xff]
    %v3519 = vld [vmem:[%s3 + $0x120] sm:$0xff]
    %v3520 = vld [vmem:[%s3 + $0x128] sm:$0xff]
    %v3521 = vld [vmem:[%s3 + $0x130] sm:$0xff]
    %v3522 = vld [vmem:[%s3 + $0x138] sm:$0xff]
    %v3523 = vld [vmem:[%s3 + $0x140] sm:$0xff]
    %v3524 = vld [vmem:[%s3 + $0x148] sm:$0xff]
    %v3525 = vld [vmem:[%s3 + $0x150] sm:$0xff]
    %v3526 = vld [vmem:[%s3 + $0x158] sm:$0xff]
    %v3527 = vld [vmem:[%s3 + $0x160] sm:$0xff]
    %v3528 = vld [vmem:[%s3 + $0x168] sm:$0xff]
    %v3529 = vld [vmem:[%s3 + $0x170] sm:$0xff]
    %v3530 = vld [vmem:[%s3 + $0x178] sm:$0xff]
    %v3531 = vld [vmem:[%s3 + $0x180] sm:$0xff]
    %v3532 = vld [vmem:[%s3 + $0x188] sm:$0xff]
    %v3533 = vld [vmem:[%s3 + $0x190] sm:$0xff]
    %v3534 = vld [vmem:[%s3 + $0x198] sm:$0xff]
    %v3535 = vld [vmem:[%s3 + $0x1a0] sm:$0xff]
    %v3536 = vld [vmem:[%s3 + $0x1a8] sm:$0xff]
    %v3537 = vld [vmem:[%s3 + $0x1b0] sm:$0xff]
    %v3538 = vld [vmem:[%s3 + $0x1b8] sm:$0xff]
    %v3539 = vld [vmem:[%s3 + $0x1c0] sm:$0xff]
    %v3540 = vld [vmem:[%s3 + $0x1c8] sm:$0xff]
    %v3541 = vld [vmem:[%s3 + $0x1d0] sm:$0xff]
    %v3542 = vld [vmem:[%s3 + $0x1d8] sm:$0xff]
    %v3543 = vld [vmem:[%s3 + $0x1e0] sm:$0xff]
    %v3544 = vld [vmem:[%s3 + $0x1e8] sm:$0xff]
    %v3545 = vld [vmem:[%s3 + $0x1f0] sm:$0xff]
    %v3546 = vld [vmem:[%s3 + $0x1f8] sm:$0xff]
    %v3547 = vld [vmem:[%s4] sm:$0x3]
    %v3549 = vlaneseq
    %v3550 = vshrl.u32 %v3549, 7
    %v3551 = vsub.s32 0, %v3550
    %v3552 = vrot.slane %v3547, %v3551
    %v3553 = vlaneseq
    %v3554 = vshrl.u32 %v3553, 7
    %v3555 = vsub.s32 1, %v3554
    %v3556 = vrot.slane %v3547, %v3555
    %v3623 = vunpack.c.l.b16 %v3483
    %v3624 = vunpack.c.h.b16 %v3483
    %v3625 = vunpack.c.l.b16 %v3484
    %v3626 = vunpack.c.h.b16 %v3484
    %v3627 = vunpack.c.l.b16 %v3485
    %v3628 = vunpack.c.h.b16 %v3485
    %v3629 = vunpack.c.l.b16 %v3486
    %v3630 = vunpack.c.h.b16 %v3486
    %v3631 = vunpack.c.l.b16 %v3487
    %v3632 = vunpack.c.h.b16 %v3487
    %v3633 = vunpack.c.l.b16 %v3488
    %v3634 = vunpack.c.h.b16 %v3488
    %v3635 = vunpack.c.l.b16 %v3489
    %v3636 = vunpack.c.h.b16 %v3489
    %v3637 = vunpack.c.l.b16 %v3490
    %v3638 = vunpack.c.h.b16 %v3490
    %v3639 = vunpack.c.l.b16 %v3491
    %v3640 = vunpack.c.h.b16 %v3491
    %v3641 = vunpack.c.l.b16 %v3492
    %v3642 = vunpack.c.h.b16 %v3492
    %v3643 = vunpack.c.l.b16 %v3493
    %v3644 = vunpack.c.h.b16 %v3493
    %v3645 = vunpack.c.l.b16 %v3494
    %v3646 = vunpack.c.h.b16 %v3494
    %v3647 = vunpack.c.l.b16 %v3495
    %v3648 = vunpack.c.h.b16 %v3495
    %v3649 = vunpack.c.l.b16 %v3496
    %v3650 = vunpack.c.h.b16 %v3496
    %v3651 = vunpack.c.l.b16 %v3497
    %v3652 = vunpack.c.h.b16 %v3497
    %v3653 = vunpack.c.l.b16 %v3498
    %v3654 = vunpack.c.h.b16 %v3498
    %v3655 = vunpack.c.l.b16 %v3499
    %v3656 = vunpack.c.h.b16 %v3499
    %v3657 = vunpack.c.l.b16 %v3500
    %v3658 = vunpack.c.h.b16 %v3500
    %v3659 = vunpack.c.l.b16 %v3501
    %v3660 = vunpack.c.h.b16 %v3501
    %v3661 = vunpack.c.l.b16 %v3502
    %v3662 = vunpack.c.h.b16 %v3502
    %v3663 = vunpack.c.l.b16 %v3503
    %v3664 = vunpack.c.h.b16 %v3503
    %v3665 = vunpack.c.l.b16 %v3504
    %v3666 = vunpack.c.h.b16 %v3504
    %v3667 = vunpack.c.l.b16 %v3505
    %v3668 = vunpack.c.h.b16 %v3505
    %v3669 = vunpack.c.l.b16 %v3506
    %v3670 = vunpack.c.h.b16 %v3506
    %v3671 = vunpack.c.l.b16 %v3507
    %v3672 = vunpack.c.h.b16 %v3507
    %v3673 = vunpack.c.l.b16 %v3508
    %v3674 = vunpack.c.h.b16 %v3508
    %v3675 = vunpack.c.l.b16 %v3509
    %v3676 = vunpack.c.h.b16 %v3509
    %v3677 = vunpack.c.l.b16 %v3510
    %v3678 = vunpack.c.h.b16 %v3510
    %v3679 = vunpack.c.l.b16 %v3511
    %v3680 = vunpack.c.h.b16 %v3511
    %v3681 = vunpack.c.l.b16 %v3512
    %v3682 = vunpack.c.h.b16 %v3512
    %v3683 = vunpack.c.l.b16 %v3513
    %v3684 = vunpack.c.h.b16 %v3513
    %v3685 = vunpack.c.l.b16 %v3514
    %v3686 = vunpack.c.h.b16 %v3514
    %v3687 = vunpack.c.l.b16 %v3515
    %v3688 = vunpack.c.h.b16 %v3515
    %v3689 = vunpack.c.l.b16 %v3516
    %v3690 = vunpack.c.h.b16 %v3516
    %v3691 = vunpack.c.l.b16 %v3517
    %v3692 = vunpack.c.h.b16 %v3517
    %v3693 = vunpack.c.l.b16 %v3518
    %v3694 = vunpack.c.h.b16 %v3518
    %v3695 = vunpack.c.l.b16 %v3519
    %v3696 = vunpack.c.h.b16 %v3519
    %v3697 = vunpack.c.l.b16 %v3520
    %v3698 = vunpack.c.h.b16 %v3520
    %v3699 = vunpack.c.l.b16 %v3521
    %v3700 = vunpack.c.h.b16 %v3521
    %v3701 = vunpack.c.l.b16 %v3522
    %v3702 = vunpack.c.h.b16 %v3522
    %v3703 = vunpack.c.l.b16 %v3523
    %v3704 = vunpack.c.h.b16 %v3523
    %v3705 = vunpack.c.l.b16 %v3524
    %v3706 = vunpack.c.h.b16 %v3524
    %v3707 = vunpack.c.l.b16 %v3525
    %v3708 = vunpack.c.h.b16 %v3525
    %v3709 = vunpack.c.l.b16 %v3526
    %v3710 = vunpack.c.h.b16 %v3526
    %v3711 = vunpack.c.l.b16 %v3527
    %v3712 = vunpack.c.h.b16 %v3527
    %v3713 = vunpack.c.l.b16 %v3528
    %v3714 = vunpack.c.h.b16 %v3528
    %v3715 = vunpack.c.l.b16 %v3529
    %v3716 = vunpack.c.h.b16 %v3529
    %v3717 = vunpack.c.l.b16 %v3530
    %v3718 = vunpack.c.h.b16 %v3530
    %v3719 = vunpack.c.l.b16 %v3531
    %v3720 = vunpack.c.h.b16 %v3531
    %v3721 = vunpack.c.l.b16 %v3532
    %v3722 = vunpack.c.h.b16 %v3532
    %v3723 = vunpack.c.l.b16 %v3533
    %v3724 = vunpack.c.h.b16 %v3533
    %v3725 = vunpack.c.l.b16 %v3534
    %v3726 = vunpack.c.h.b16 %v3534
    %v3727 = vunpack.c.l.b16 %v3535
    %v3728 = vunpack.c.h.b16 %v3535
    %v3729 = vunpack.c.l.b16 %v3536
    %v3730 = vunpack.c.h.b16 %v3536
    %v3731 = vunpack.c.l.b16 %v3537
    %v3732 = vunpack.c.h.b16 %v3537
    %v3733 = vunpack.c.l.b16 %v3538
    %v3734 = vunpack.c.h.b16 %v3538
    %v3735 = vunpack.c.l.b16 %v3539
    %v3736 = vunpack.c.h.b16 %v3539
    %v3737 = vunpack.c.l.b16 %v3540
    %v3738 = vunpack.c.h.b16 %v3540
    %v3739 = vunpack.c.l.b16 %v3541
    %v3740 = vunpack.c.h.b16 %v3541
    %v3741 = vunpack.c.l.b16 %v3542
    %v3742 = vunpack.c.h.b16 %v3542
    %v3743 = vunpack.c.l.b16 %v3543
    %v3744 = vunpack.c.h.b16 %v3543
    %v3745 = vunpack.c.l.b16 %v3544
    %v3746 = vunpack.c.h.b16 %v3544
    %v3747 = vunpack.c.l.b16 %v3545
    %v3748 = vunpack.c.h.b16 %v3545
    %v3749 = vunpack.c.l.b16 %v3546
    %v3750 = vunpack.c.h.b16 %v3546
    %v3751 = vpack.c.b16 %v3625, %v3623
    %v3752 = vpack.c.b16 %v3626, %v3624
    %v3753 = vpack.c.b16 %v3629, %v3627
    %v3754 = vpack.c.b16 %v3630, %v3628
    %v3755 = vpack.c.b16 %v3633, %v3631
    %v3756 = vpack.c.b16 %v3634, %v3632
    %v3757 = vpack.c.b16 %v3637, %v3635
    %v3758 = vpack.c.b16 %v3638, %v3636
    %v3759 = vpack.c.b16 %v3641, %v3639
    %v3760 = vpack.c.b16 %v3642, %v3640
    %v3761 = vpack.c.b16 %v3645, %v3643
    %v3762 = vpack.c.b16 %v3646, %v3644
    %v3763 = vpack.c.b16 %v3649, %v3647
    %v3764 = vpack.c.b16 %v3650, %v3648
    %v3765 = vpack.c.b16 %v3653, %v3651
    %v3766 = vpack.c.b16 %v3654, %v3652
    %v3767 = vpack.c.b16 %v3657, %v3655
    %v3768 = vpack.c.b16 %v3658, %v3656
    %v3769 = vpack.c.b16 %v3661, %v3659
    %v3770 = vpack.c.b16 %v3662, %v3660
    %v3771 = vpack.c.b16 %v3665, %v3663
    %v3772 = vpack.c.b16 %v3666, %v3664
    %v3773 = vpack.c.b16 %v3669, %v3667
    %v3774 = vpack.c.b16 %v3670, %v3668
    %v3775 = vpack.c.b16 %v3673, %v3671
    %v3776 = vpack.c.b16 %v3674, %v3672
    %v3777 = vpack.c.b16 %v3677, %v3675
    %v3778 = vpack.c.b16 %v3678, %v3676
    %v3779 = vpack.c.b16 %v3681, %v3679
    %v3780 = vpack.c.b16 %v3682, %v3680
    %v3781 = vpack.c.b16 %v3685, %v3683
    %v3782 = vpack.c.b16 %v3686, %v3684
    %v3783 = vpack.c.b16 %v3689, %v3687
    %v3784 = vpack.c.b16 %v3690, %v3688
    %v3785 = vpack.c.b16 %v3693, %v3691
    %v3786 = vpack.c.b16 %v3694, %v3692
    %v3787 = vpack.c.b16 %v3697, %v3695
    %v3788 = vpack.c.b16 %v3698, %v3696
    %v3789 = vpack.c.b16 %v3701, %v3699
    %v3790 = vpack.c.b16 %v3702, %v3700
    %v3791 = vpack.c.b16 %v3705, %v3703
    %v3792 = vpack.c.b16 %v3706, %v3704
    %v3793 = vpack.c.b16 %v3709, %v3707
    %v3794 = vpack.c.b16 %v3710, %v3708
    %v3795 = vpack.c.b16 %v3713, %v3711
    %v3796 = vpack.c.b16 %v3714, %v3712
    %v3797 = vpack.c.b16 %v3717, %v3715
    %v3798 = vpack.c.b16 %v3718, %v3716
    %v3799 = vpack.c.b16 %v3721, %v3719
    %v3800 = vpack.c.b16 %v3722, %v3720
    %v3801 = vpack.c.b16 %v3725, %v3723
    %v3802 = vpack.c.b16 %v3726, %v3724
    %v3803 = vpack.c.b16 %v3729, %v3727
    %v3804 = vpack.c.b16 %v3730, %v3728
    %v3805 = vpack.c.b16 %v3733, %v3731
    %v3806 = vpack.c.b16 %v3734, %v3732
    %v3807 = vpack.c.b16 %v3737, %v3735
    %v3808 = vpack.c.b16 %v3738, %v3736
    %v3809 = vpack.c.b16 %v3741, %v3739
    %v3810 = vpack.c.b16 %v3742, %v3740
    %v3811 = vpack.c.b16 %v3745, %v3743
    %v3812 = vpack.c.b16 %v3746, %v3744
    %v3813 = vpack.c.b16 %v3749, %v3747
    %v3814 = vpack.c.b16 %v3750, %v3748
    %3879 = vmatprep.subr.bf16.mxu0 %v3752
    %3880 = vmatpush1.bf16.msra.mxu0 %v3751
    %3881 = vmatprep.subr.bf16.mxu0 %v3754
    %3882 = vmatpush1.bf16.msra.mxu0 %v3753
    %3883 = vmatprep.subr.bf16.mxu0 %v3756
    %3884 = vmatpush1.bf16.msra.mxu0 %v3755
    %3885 = vmatprep.subr.bf16.mxu0 %v3758
    %3886 = vmatpush1.bf16.msra.mxu0 %v3757
    %3887 = vmatprep.subr.bf16.mxu0 %v3760
    %3888 = vmatpush1.bf16.msra.mxu0 %v3759
    %3889 = vmatprep.subr.bf16.mxu0 %v3762
    %3890 = vmatpush1.bf16.msra.mxu0 %v3761
    %3891 = vmatprep.subr.bf16.mxu0 %v3764
    %3892 = vmatpush1.bf16.msra.mxu0 %v3763
    %3893 = vmatprep.subr.bf16.mxu0 %v3766
    %3894 = vmatpush1.bf16.msra.mxu0 %v3765
    %3895 = vmatprep.subr.bf16.mxu0 %v3768
    %3896 = vmatpush1.bf16.msra.mxu0 %v3767
    %3897 = vmatprep.subr.bf16.mxu0 %v3770
    %3898 = vmatpush1.bf16.msra.mxu0 %v3769
    %3899 = vmatprep.subr.bf16.mxu0 %v3772
    %3900 = vmatpush1.bf16.msra.mxu0 %v3771
    %3901 = vmatprep.subr.bf16.mxu0 %v3774
    %3902 = vmatpush1.bf16.msra.mxu0 %v3773
    %3903 = vmatprep.subr.bf16.mxu0 %v3776
    %3904 = vmatpush1.bf16.msra.mxu0 %v3775
    %3905 = vmatprep.subr.bf16.mxu0 %v3778
    %3906 = vmatpush1.bf16.msra.mxu0 %v3777
    %3907 = vmatprep.subr.bf16.mxu0 %v3780
    %3908 = vmatpush1.bf16.msra.mxu0 %v3779
    %3909 = vmatprep.subr.bf16.mxu0 %v3782
    %3910 = vmatpush1.bf16.msra.mxu0 %v3781
    %3911 = vmatprep.mubr.bf16.mxu0 %v3420
    %3912 = vmatmul.mubr.bf16.gmra.mrb[0].mxu0 %v3419
    %v3913 = vpop.f32.mrb[0].mxu0
    %v3914 = vadd.f32 %v3552, %v3913
    %v3915 = vpop.f32.mrb[0].mxu0
    %v3916 = vadd.f32 %v3556, %v3915
    %v3917 = vpop.f32.mrb[0].mxu0
    %v3918 = vadd.f32 %v3552, %v3917
    %v3919 = vpop.f32.mrb[0].mxu0
    %v3920 = vadd.f32 %v3556, %v3919
    %3921 = vmatprep.mubr.bf16.mxu0 %v3424
    %3922 = vmatmul.mubr.bf16.gmra.mrb[0].mxu0 %v3423
    %v3923 = vpop.f32.mrb[0].mxu0
    %v3924 = vadd.f32 %v3552, %v3923
    %v3925 = vpop.f32.mrb[0].mxu0
    %v3926 = vadd.f32 %v3556, %v3925
    %v3927 = vpop.f32.mrb[0].mxu0
    %v3928 = vadd.f32 %v3552, %v3927
    %v3929 = vpop.f32.mrb[0].mxu0
    %v3930 = vadd.f32 %v3556, %v3929
    %3931 = vmatprep.mubr.bf16.mxu0 %v3428
    %3932 = vmatmul.mubr.bf16.gmra.mrb[0].mxu0 %v3427
    %v3933 = vpop.f32.mrb[0].mxu0
    %v3934 = vadd.f32 %v3552, %v3933
    %v3935 = vpop.f32.mrb[0].mxu0
    %v3936 = vadd.f32 %v3556, %v3935
    %v3937 = vpop.f32.mrb[0].mxu0
    %v3938 = vadd.f32 %v3552, %v3937
    %v3939 = vpop.f32.mrb[0].mxu0
    %v3940 = vadd.f32 %v3556, %v3939
    %3941 = vmatprep.mubr.bf16.mxu0 %v3432
    %3942 = vmatmul.mubr.bf16.gmra.mrb[0].mxu0 %v3431
    %v3943 = vpop.f32.mrb[0].mxu0
    %v3944 = vadd.f32 %v3552, %v3943
    %v3945 = vpop.f32.mrb[0].mxu0
    %v3946 = vadd.f32 %v3556, %v3945
    %v3947 = vpop.f32.mrb[0].mxu0
    %v3948 = vadd.f32 %v3552, %v3947
    %v3949 = vpop.f32.mrb[0].mxu0
    %v3950 = vadd.f32 %v3556, %v3949
    %3951 = vmatprep.mubr.bf16.mxu0 %v3436
    %3952 = vmatmul.mubr.bf16.gmra.mrb[0].mxu0 %v3435
    %v3953 = vpop.f32.mrb[0].mxu0
    %v3954 = vadd.f32 %v3552, %v3953
    %v3955 = vpop.f32.mrb[0].mxu0
    %v3956 = vadd.f32 %v3556, %v3955
    %v3957 = vpop.f32.mrb[0].mxu0
    %v3958 = vadd.f32 %v3552, %v3957
    %v3959 = vpop.f32.mrb[0].mxu0
    %v3960 = vadd.f32 %v3556, %v3959
    %3961 = vmatprep.mubr.bf16.mxu0 %v3440
    %3962 = vmatmul.mubr.bf16.gmra.mrb[0].mxu0 %v3439
    %v3963 = vpop.f32.mrb[0].mxu0
    %v3964 = vadd.f32 %v3552, %v3963
    %v3965 = vpop.f32.mrb[0].mxu0
    %v3966 = vadd.f32 %v3556, %v3965
    %v3967 = vpop.f32.mrb[0].mxu0
    %v3968 = vadd.f32 %v3552, %v3967
    %v3969 = vpop.f32.mrb[0].mxu0
    %v3970 = vadd.f32 %v3556, %v3969
    %3971 = vmatprep.mubr.bf16.mxu0 %v3444
    %3972 = vmatmul.mubr.bf16.gmra.mrb[0].mxu0 %v3443
    %v3973 = vpop.f32.mrb[0].mxu0
    %v3974 = vadd.f32 %v3552, %v3973
    %v3975 = vpop.f32.mrb[0].mxu0
    %v3976 = vadd.f32 %v3556, %v3975
    %v3977 = vpop.f32.mrb[0].mxu0
    %v3978 = vadd.f32 %v3552, %v3977
    %v3979 = vpop.f32.mrb[0].mxu0
    %v3980 = vadd.f32 %v3556, %v3979
    %3981 = vmatprep.mubr.bf16.mxu0 %v3448
    %3982 = vmatmul.mubr.bf16.gmra.mrb[0].mxu0 %v3447
    %v3983 = vpop.f32.mrb[0].mxu0
    %v3984 = vadd.f32 %v3552, %v3983
    %v3985 = vpop.f32.mrb[0].mxu0
    %v3986 = vadd.f32 %v3556, %v3985
    %v3987 = vpop.f32.mrb[0].mxu0
    %v3988 = vadd.f32 %v3552, %v3987
    %v3989 = vpop.f32.mrb[0].mxu0
    %v3990 = vadd.f32 %v3556, %v3989
    %3991 = vmatprep.mubr.bf16.mxu0 %v3452
    %3992 = vmatmul.mubr.bf16.gmra.mrb[0].mxu0 %v3451
    %v3993 = vpop.f32.mrb[0].mxu0
    %v3994 = vadd.f32 %v3552, %v3993
    %v3995 = vpop.f32.mrb[0].mxu0
    %v3996 = vadd.f32 %v3556, %v3995
    %v3997 = vpop.f32.mrb[0].mxu0
    %v3998 = vadd.f32 %v3552, %v3997
    %v3999 = vpop.f32.mrb[0].mxu0
    %v4000 = vadd.f32 %v3556, %v3999
    %4001 = vmatprep.mubr.bf16.mxu0 %v3456
    %4002 = vmatmul.mubr.bf16.gmra.mrb[0].mxu0 %v3455
    %v4003 = vpop.f32.mrb[0].mxu0
    %v4004 = vadd.f32 %v3552, %v4003
    %v4005 = vpop.f32.mrb[0].mxu0
    %v4006 = vadd.f32 %v3556, %v4005
    %v4007 = vpop.f32.mrb[0].mxu0
    %v4008 = vadd.f32 %v3552, %v4007
    %v4009 = vpop.f32.mrb[0].mxu0
    %v4010 = vadd.f32 %v3556, %v4009
    %4011 = vmatprep.mubr.bf16.mxu0 %v3460
    %4012 = vmatmul.mubr.bf16.gmra.mrb[0].mxu0 %v3459
    %v4013 = vpop.f32.mrb[0].mxu0
    %v4014 = vadd.f32 %v3552, %v4013
    %v4015 = vpop.f32.mrb[0].mxu0
    %v4016 = vadd.f32 %v3556, %v4015
    %v4017 = vpop.f32.mrb[0].mxu0
    %v4018 = vadd.f32 %v3552, %v4017
    %v4019 = vpop.f32.mrb[0].mxu0
    %v4020 = vadd.f32 %v3556, %v4019
    %4021 = vmatprep.mubr.bf16.mxu0 %v3464
    %4022 = vmatmul.mubr.bf16.gmra.mrb[0].mxu0 %v3463
    %v4023 = vpop.f32.mrb[0].mxu0
    %v4024 = vadd.f32 %v3552, %v4023
    %v4025 = vpop.f32.mrb[0].mxu0
    %v4026 = vadd.f32 %v3556, %v4025
    %v4027 = vpop.f32.mrb[0].mxu0
    %v4028 = vadd.f32 %v3552, %v4027
    %v4029 = vpop.f32.mrb[0].mxu0
    %v4030 = vadd.f32 %v3556, %v4029
    %4031 = vmatprep.mubr.bf16.mxu0 %v3468
    %4032 = vmatmul.mubr.bf16.gmra.mrb[0].mxu0 %v3467
    %v4033 = vpop.f32.mrb[0].mxu0
    %v4034 = vadd.f32 %v3552, %v4033
    %v4035 = vpop.f32.mrb[0].mxu0
    %v4036 = vadd.f32 %v3556, %v4035
    %v4037 = vpop.f32.mrb[0].mxu0
    %v4038 = vadd.f32 %v3552, %v4037
    %v4039 = vpop.f32.mrb[0].mxu0
    %v4040 = vadd.f32 %v3556, %v4039
    %4041 = vmatprep.mubr.bf16.mxu0 %v3472
    %4042 = vmatmul.mubr.bf16.gmra.mrb[0].mxu0 %v3471
    %v4043 = vpop.f32.mrb[0].mxu0
    %v4044 = vadd.f32 %v3552, %v4043
    %v4045 = vpop.f32.mrb[0].mxu0
    %v4046 = vadd.f32 %v3556, %v4045
    %v4047 = vpop.f32.mrb[0].mxu0
    %v4048 = vadd.f32 %v3552, %v4047
    %v4049 = vpop.f32.mrb[0].mxu0
    %v4050 = vadd.f32 %v3556, %v4049
    %4051 = vmatprep.mubr.bf16.mxu0 %v3476
    %4052 = vmatmul.mubr.bf16.gmra.mrb[0].mxu0 %v3475
    %v4053 = vpop.f32.mrb[0].mxu0
    %v4054 = vadd.f32 %v3552, %v4053
    %v4055 = vpop.f32.mrb[0].mxu0
    %v4056 = vadd.f32 %v3556, %v4055
    %v4057 = vpop.f32.mrb[0].mxu0
    %v4058 = vadd.f32 %v3552, %v4057
    %v4059 = vpop.f32.mrb[0].mxu0
    %v4060 = vadd.f32 %v3556, %v4059
    %4061 = vmatprep.mubr.bf16.mxu0 %v3480
    %4062 = vmatmul.mubr.bf16.gmra.mrb[0].mxu0 %v3479
    %v4063 = vpop.f32.mrb[0].mxu0
    %v4064 = vadd.f32 %v3552, %v4063
    %v4065 = vpop.f32.mrb[0].mxu0
    %v4066 = vadd.f32 %v3556, %v4065
    %v4067 = vpop.f32.mrb[0].mxu0
    %v4068 = vadd.f32 %v3552, %v4067
    %v4069 = vpop.f32.mrb[0].mxu0
    %v4070 = vadd.f32 %v3556, %v4069
    %4071 = vdwg.mxu0
    %4072 = vmatprep.subr.bf16.mxu0 %v3784
    %4073 = vmatpush1.bf16.msra.mxu0 %v3783
    %4074 = vmatprep.subr.bf16.mxu0 %v3786
    %4075 = vmatpush1.bf16.msra.mxu0 %v3785
    %4076 = vmatprep.subr.bf16.mxu0 %v3788
    %4077 = vmatpush1.bf16.msra.mxu0 %v3787
    %4078 = vmatprep.subr.bf16.mxu0 %v3790
    %4079 = vmatpush1.bf16.msra.mxu0 %v3789
    %4080 = vmatprep.subr.bf16.mxu0 %v3792
    %4081 = vmatpush1.bf16.msra.mxu0 %v3791
    %4082 = vmatprep.subr.bf16.mxu0 %v3794
    %4083 = vmatpush1.bf16.msra.mxu0 %v3793
    %4084 = vmatprep.subr.bf16.mxu0 %v3796
    %4085 = vmatpush1.bf16.msra.mxu0 %v3795
    %4086 = vmatprep.subr.bf16.mxu0 %v3798
    %4087 = vmatpush1.bf16.msra.mxu0 %v3797
    %4088 = vmatprep.subr.bf16.mxu0 %v3800
    %4089 = vmatpush1.bf16.msra.mxu0 %v3799
    %4090 = vmatprep.subr.bf16.mxu0 %v3802
    %4091 = vmatpush1.bf16.msra.mxu0 %v3801
    %4092 = vmatprep.subr.bf16.mxu0 %v3804
    %4093 = vmatpush1.bf16.msra.mxu0 %v3803
    %4094 = vmatprep.subr.bf16.mxu0 %v3806
    %4095 = vmatpush1.bf16.msra.mxu0 %v3805
    %4096 = vmatprep.subr.bf16.mxu0 %v3808
    %4097 = vmatpush1.bf16.msra.mxu0 %v3807
    %4098 = vmatprep.subr.bf16.mxu0 %v3810
    %4099 = vmatpush1.bf16.msra.mxu0 %v3809
    %4100 = vmatprep.subr.bf16.mxu0 %v3812
    %4101 = vmatpush1.bf16.msra.mxu0 %v3811
    %4102 = vmatprep.subr.bf16.mxu0 %v3814
    %4103 = vmatpush1.bf16.msra.mxu0 %v3813
    %4104 = vmatprep.mubr.bf16.mxu0 %v3422
    %4105 = vmatmul.mubr.bf16.gmra.mrb[0].mxu0 %v3421
    %v4106 = vpop.f32.mrb[0].mxu0
    %v4107 = vadd.f32 %v3914, %v4106
    %v4108 = vpop.f32.mrb[0].mxu0
    %v4109 = vadd.f32 %v3916, %v4108
    %v4110 = vpop.f32.mrb[0].mxu0
    %v4111 = vadd.f32 %v3918, %v4110
    %v4112 = vpop.f32.mrb[0].mxu0
    %v4113 = vadd.f32 %v3920, %v4112
    %4114 = vmatprep.mubr.bf16.mxu0 %v3426
    %4115 = vmatmul.mubr.bf16.gmra.mrb[0].mxu0 %v3425
    %v4116 = vpop.f32.mrb[0].mxu0
    %v4117 = vadd.f32 %v3924, %v4116
    %v4118 = vpop.f32.mrb[0].mxu0
    %v4119 = vadd.f32 %v3926, %v4118
    %v4120 = vpop.f32.mrb[0].mxu0
    %v4121 = vadd.f32 %v3928, %v4120
    %v4122 = vpop.f32.mrb[0].mxu0
    %v4123 = vadd.f32 %v3930, %v4122
    %4124 = vmatprep.mubr.bf16.mxu0 %v3430
    %4125 = vmatmul.mubr.bf16.gmra.mrb[0].mxu0 %v3429
    %v4126 = vpop.f32.mrb[0].mxu0
    %v4127 = vadd.f32 %v3934, %v4126
    %v4128 = vpop.f32.mrb[0].mxu0
    %v4129 = vadd.f32 %v3936, %v4128
    %v4130 = vpop.f32.mrb[0].mxu0
    %v4131 = vadd.f32 %v3938, %v4130
    %v4132 = vpop.f32.mrb[0].mxu0
    %v4133 = vadd.f32 %v3940, %v4132
    %4134 = vmatprep.mubr.bf16.mxu0 %v3434
    %4135 = vmatmul.mubr.bf16.gmra.mrb[0].mxu0 %v3433
    %v4136 = vpop.f32.mrb[0].mxu0
    %v4137 = vadd.f32 %v3944, %v4136
    %v4138 = vpop.f32.mrb[0].mxu0
    %v4139 = vadd.f32 %v3946, %v4138
    %v4140 = vpop.f32.mrb[0].mxu0
    %v4141 = vadd.f32 %v3948, %v4140
    %v4142 = vpop.f32.mrb[0].mxu0
    %v4143 = vadd.f32 %v3950, %v4142
    %4144 = vmatprep.mubr.bf16.mxu0 %v3438
    %4145 = vmatmul.mubr.bf16.gmra.mrb[0].mxu0 %v3437
    %v4146 = vpop.f32.mrb[0].mxu0
    %v4147 = vadd.f32 %v3954, %v4146
    %v4148 = vpop.f32.mrb[0].mxu0
    %v4149 = vadd.f32 %v3956, %v4148
    %v4150 = vpop.f32.mrb[0].mxu0
    %v4151 = vadd.f32 %v3958, %v4150
    %v4152 = vpop.f32.mrb[0].mxu0
    %v4153 = vadd.f32 %v3960, %v4152
    %4154 = vmatprep.mubr.bf16.mxu0 %v3442
    %4155 = vmatmul.mubr.bf16.gmra.mrb[0].mxu0 %v3441
    %v4156 = vpop.f32.mrb[0].mxu0
    %v4157 = vadd.f32 %v3964, %v4156
    %v4158 = vpop.f32.mrb[0].mxu0
    %v4159 = vadd.f32 %v3966, %v4158
    %v4160 = vpop.f32.mrb[0].mxu0
    %v4161 = vadd.f32 %v3968, %v4160
    %v4162 = vpop.f32.mrb[0].mxu0
    %v4163 = vadd.f32 %v3970, %v4162
    %4164 = vmatprep.mubr.bf16.mxu0 %v3446
    %4165 = vmatmul.mubr.bf16.gmra.mrb[0].mxu0 %v3445
    %v4166 = vpop.f32.mrb[0].mxu0
    %v4167 = vadd.f32 %v3974, %v4166
    %v4168 = vpop.f32.mrb[0].mxu0
    %v4169 = vadd.f32 %v3976, %v4168
    %v4170 = vpop.f32.mrb[0].mxu0
    %v4171 = vadd.f32 %v3978, %v4170
    %v4172 = vpop.f32.mrb[0].mxu0
    %v4173 = vadd.f32 %v3980, %v4172
    %4174 = vmatprep.mubr.bf16.mxu0 %v3450
    %4175 = vmatmul.mubr.bf16.gmra.mrb[0].mxu0 %v3449
    %v4176 = vpop.f32.mrb[0].mxu0
    %v4177 = vadd.f32 %v3984, %v4176
    %v4178 = vpop.f32.mrb[0].mxu0
    %v4179 = vadd.f32 %v3986, %v4178
    %v4180 = vpop.f32.mrb[0].mxu0
    %v4181 = vadd.f32 %v3988, %v4180
    %v4182 = vpop.f32.mrb[0].mxu0
    %v4183 = vadd.f32 %v3990, %v4182
    %4184 = vmatprep.mubr.bf16.mxu0 %v3454
    %4185 = vmatmul.mubr.bf16.gmra.mrb[0].mxu0 %v3453
    %v4186 = vpop.f32.mrb[0].mxu0
    %v4187 = vadd.f32 %v3994, %v4186
    %v4188 = vpop.f32.mrb[0].mxu0
    %v4189 = vadd.f32 %v3996, %v4188
    %v4190 = vpop.f32.mrb[0].mxu0
    %v4191 = vadd.f32 %v3998, %v4190
    %v4192 = vpop.f32.mrb[0].mxu0
    %v4193 = vadd.f32 %v4000, %v4192
    %4194 = vmatprep.mubr.bf16.mxu0 %v3458
    %4195 = vmatmul.mubr.bf16.gmra.mrb[0].mxu0 %v3457
    %v4196 = vpop.f32.mrb[0].mxu0
    %v4197 = vadd.f32 %v4004, %v4196
    %v4198 = vpop.f32.mrb[0].mxu0
    %v4199 = vadd.f32 %v4006, %v4198
    %v4200 = vpop.f32.mrb[0].mxu0
    %v4201 = vadd.f32 %v4008, %v4200
    %v4202 = vpop.f32.mrb[0].mxu0
    %v4203 = vadd.f32 %v4010, %v4202
    %4204 = vmatprep.mubr.bf16.mxu0 %v3462
    %4205 = vmatmul.mubr.bf16.gmra.mrb[0].mxu0 %v3461
    %v4206 = vpop.f32.mrb[0].mxu0
    %v4207 = vadd.f32 %v4014, %v4206
    %v4208 = vpop.f32.mrb[0].mxu0
    %v4209 = vadd.f32 %v4016, %v4208
    %v4210 = vpop.f32.mrb[0].mxu0
    %v4211 = vadd.f32 %v4018, %v4210
    %v4212 = vpop.f32.mrb[0].mxu0
    %v4213 = vadd.f32 %v4020, %v4212
    %4214 = vmatprep.mubr.bf16.mxu0 %v3466
    %4215 = vmatmul.mubr.bf16.gmra.mrb[0].mxu0 %v3465
    %v4216 = vpop.f32.mrb[0].mxu0
    %v4217 = vadd.f32 %v4024, %v4216
    %v4218 = vpop.f32.mrb[0].mxu0
    %v4219 = vadd.f32 %v4026, %v4218
    %v4220 = vpop.f32.mrb[0].mxu0
    %v4221 = vadd.f32 %v4028, %v4220
    %v4222 = vpop.f32.mrb[0].mxu0
    %v4223 = vadd.f32 %v4030, %v4222
    %4224 = vmatprep.mubr.bf16.mxu0 %v3470
    %4225 = vmatmul.mubr.bf16.gmra.mrb[0].mxu0 %v3469
    %v4226 = vpop.f32.mrb[0].mxu0
    %v4227 = vadd.f32 %v4034, %v4226
    %v4228 = vpop.f32.mrb[0].mxu0
    %v4229 = vadd.f32 %v4036, %v4228
    %v4230 = vpop.f32.mrb[0].mxu0
    %v4231 = vadd.f32 %v4038, %v4230
    %v4232 = vpop.f32.mrb[0].mxu0
    %v4233 = vadd.f32 %v4040, %v4232
    %4234 = vmatprep.mubr.bf16.mxu0 %v3474
    %4235 = vmatmul.mubr.bf16.gmra.mrb[0].mxu0 %v3473
    %v4236 = vpop.f32.mrb[0].mxu0
    %v4237 = vadd.f32 %v4044, %v4236
    %v4238 = vpop.f32.mrb[0].mxu0
    %v4239 = vadd.f32 %v4046, %v4238
    %v4240 = vpop.f32.mrb[0].mxu0
    %v4241 = vadd.f32 %v4048, %v4240
    %v4242 = vpop.f32.mrb[0].mxu0
    %v4243 = vadd.f32 %v4050, %v4242
    %4244 = vmatprep.mubr.bf16.mxu0 %v3478
    %4245 = vmatmul.mubr.bf16.gmra.mrb[0].mxu0 %v3477
    %v4246 = vpop.f32.mrb[0].mxu0
    %v4247 = vadd.f32 %v4054, %v4246
    %v4248 = vpop.f32.mrb[0].mxu0
    %v4249 = vadd.f32 %v4056, %v4248
    %v4250 = vpop.f32.mrb[0].mxu0
    %v4251 = vadd.f32 %v4058, %v4250
    %v4252 = vpop.f32.mrb[0].mxu0
    %v4253 = vadd.f32 %v4060, %v4252
    %4254 = vmatprep.mubr.bf16.mxu0 %v3482
    %4255 = vmatmul.mubr.bf16.gmra.mrb[0].mxu0 %v3481
    %v4256 = vpop.f32.mrb[0].mxu0
    %v4257 = vadd.f32 %v4064, %v4256
    %v4258 = vpop.f32.mrb[0].mxu0
    %v4259 = vadd.f32 %v4066, %v4258
    %v4260 = vpop.f32.mrb[0].mxu0
    %v4261 = vadd.f32 %v4068, %v4260
    %v4262 = vpop.f32.mrb[0].mxu0
    %v4263 = vadd.f32 %v4070, %v4262
    %4264 = vdwg.mxu0
    %v4265 = vmul.f32 %v4107, 0.2
    %v4266 = vmul.f32 %v4109, 0.2
    %v4267 = vmul.f32 %v4111, 0.2
    %v4268 = vmul.f32 %v4113, 0.2
    %v4269 = vmul.f32 %v4117, 0.2
    %v4270 = vmul.f32 %v4119, 0.2
    %v4271 = vmul.f32 %v4121, 0.2
    %v4272 = vmul.f32 %v4123, 0.2
    %v4273 = vmul.f32 %v4127, 0.2
    %v4274 = vmul.f32 %v4129, 0.2
    %v4275 = vmul.f32 %v4131, 0.2
    %v4276 = vmul.f32 %v4133, 0.2
    %v4277 = vmul.f32 %v4137, 0.2
    %v4278 = vmul.f32 %v4139, 0.2
    %v4279 = vmul.f32 %v4141, 0.2
    %v4280 = vmul.f32 %v4143, 0.2
    %v4281 = vmul.f32 %v4147, 0.2
    %v4282 = vmul.f32 %v4149, 0.2
    %v4283 = vmul.f32 %v4151, 0.2
    %v4284 = vmul.f32 %v4153, 0.2
    %v4285 = vmul.f32 %v4157, 0.2
    %v4286 = vmul.f32 %v4159, 0.2
    %v4287 = vmul.f32 %v4161, 0.2
    %v4288 = vmul.f32 %v4163, 0.2
    %v4289 = vmul.f32 %v4167, 0.2
    %v4290 = vmul.f32 %v4169, 0.2
    %v4291 = vmul.f32 %v4171, 0.2
    %v4292 = vmul.f32 %v4173, 0.2
    %v4293 = vmul.f32 %v4177, 0.2
    %v4294 = vmul.f32 %v4179, 0.2
    %v4295 = vmul.f32 %v4181, 0.2
    %v4296 = vmul.f32 %v4183, 0.2
    %v4297 = vmul.f32 %v4187, 0.2
    %v4298 = vmul.f32 %v4189, 0.2
    %v4299 = vmul.f32 %v4191, 0.2
    %v4300 = vmul.f32 %v4193, 0.2
    %v4301 = vmul.f32 %v4197, 0.2
    %v4302 = vmul.f32 %v4199, 0.2
    %v4303 = vmul.f32 %v4201, 0.2
    %v4304 = vmul.f32 %v4203, 0.2
    %v4305 = vmul.f32 %v4207, 0.2
    %v4306 = vmul.f32 %v4209, 0.2
    %v4307 = vmul.f32 %v4211, 0.2
    %v4308 = vmul.f32 %v4213, 0.2
    %v4309 = vmul.f32 %v4217, 0.2
    %v4310 = vmul.f32 %v4219, 0.2
    %v4311 = vmul.f32 %v4221, 0.2
    %v4312 = vmul.f32 %v4223, 0.2
    %v4313 = vmul.f32 %v4227, 0.2
    %v4314 = vmul.f32 %v4229, 0.2
    %v4315 = vmul.f32 %v4231, 0.2
    %v4316 = vmul.f32 %v4233, 0.2
    %v4317 = vmul.f32 %v4237, 0.2
    %v4318 = vmul.f32 %v4239, 0.2
    %v4319 = vmul.f32 %v4241, 0.2
    %v4320 = vmul.f32 %v4243, 0.2
    %v4321 = vmul.f32 %v4247, 0.2
    %v4322 = vmul.f32 %v4249, 0.2
    %v4323 = vmul.f32 %v4251, 0.2
    %v4324 = vmul.f32 %v4253, 0.2
    %v4325 = vmul.f32 %v4257, 0.2
    %v4326 = vmul.f32 %v4259, 0.2
    %v4327 = vmul.f32 %v4261, 0.2
    %v4328 = vmul.f32 %v4263, 0.2
    %v4329 = vmax.f32 %v4107, %v4265
    %v4330 = vmax.f32 %v4109, %v4266
    %v4331 = vmax.f32 %v4111, %v4267
    %v4332 = vmax.f32 %v4113, %v4268
    %v4333 = vmax.f32 %v4117, %v4269
    %v4334 = vmax.f32 %v4119, %v4270
    %v4335 = vmax.f32 %v4121, %v4271
    %v4336 = vmax.f32 %v4123, %v4272
    %v4337 = vmax.f32 %v4127, %v4273
    %v4338 = vmax.f32 %v4129, %v4274
    %v4339 = vmax.f32 %v4131, %v4275
    %v4340 = vmax.f32 %v4133, %v4276
    %v4341 = vmax.f32 %v4137, %v4277
    %v4342 = vmax.f32 %v4139, %v4278
    %v4343 = vmax.f32 %v4141, %v4279
    %v4344 = vmax.f32 %v4143, %v4280
    %v4345 = vmax.f32 %v4147, %v4281
    %v4346 = vmax.f32 %v4149, %v4282
    %v4347 = vmax.f32 %v4151, %v4283
    %v4348 = vmax.f32 %v4153, %v4284
    %v4349 = vmax.f32 %v4157, %v4285
    %v4350 = vmax.f32 %v4159, %v4286
    %v4351 = vmax.f32 %v4161, %v4287
    %v4352 = vmax.f32 %v4163, %v4288
    %v4353 = vmax.f32 %v4167, %v4289
    %v4354 = vmax.f32 %v4169, %v4290
    %v4355 = vmax.f32 %v4171, %v4291
    %v4356 = vmax.f32 %v4173, %v4292
    %v4357 = vmax.f32 %v4177, %v4293
    %v4358 = vmax.f32 %v4179, %v4294
    %v4359 = vmax.f32 %v4181, %v4295
    %v4360 = vmax.f32 %v4183, %v4296
    %v4361 = vmax.f32 %v4187, %v4297
    %v4362 = vmax.f32 %v4189, %v4298
    %v4363 = vmax.f32 %v4191, %v4299
    %v4364 = vmax.f32 %v4193, %v4300
    %v4365 = vmax.f32 %v4197, %v4301
    %v4366 = vmax.f32 %v4199, %v4302
    %v4367 = vmax.f32 %v4201, %v4303
    %v4368 = vmax.f32 %v4203, %v4304
    %v4369 = vmax.f32 %v4207, %v4305
    %v4370 = vmax.f32 %v4209, %v4306
    %v4371 = vmax.f32 %v4211, %v4307
    %v4372 = vmax.f32 %v4213, %v4308
    %v4373 = vmax.f32 %v4217, %v4309
    %v4374 = vmax.f32 %v4219, %v4310
    %v4375 = vmax.f32 %v4221, %v4311
    %v4376 = vmax.f32 %v4223, %v4312
    %v4377 = vmax.f32 %v4227, %v4313
    %v4378 = vmax.f32 %v4229, %v4314
    %v4379 = vmax.f32 %v4231, %v4315
    %v4380 = vmax.f32 %v4233, %v4316
    %v4381 = vmax.f32 %v4237, %v4317
    %v4382 = vmax.f32 %v4239, %v4318
    %v4383 = vmax.f32 %v4241, %v4319
    %v4384 = vmax.f32 %v4243, %v4320
    %v4385 = vmax.f32 %v4247, %v4321
    %v4386 = vmax.f32 %v4249, %v4322
    %v4387 = vmax.f32 %v4251, %v4323
    %v4388 = vmax.f32 %v4253, %v4324
    %v4389 = vmax.f32 %v4257, %v4325
    %v4390 = vmax.f32 %v4259, %v4326
    %v4391 = vmax.f32 %v4261, %v4327
    %v4392 = vmax.f32 %v4263, %v4328
    %v4393 = vpack.c.bf16 %v4331, %v4329
    %v4394 = vpack.c.bf16 %v4332, %v4330
    %v4395 = vpack.c.bf16 %v4335, %v4333
    %v4396 = vpack.c.bf16 %v4336, %v4334
    %v4397 = vpack.c.bf16 %v4339, %v4337
    %v4398 = vpack.c.bf16 %v4340, %v4338
    %v4399 = vpack.c.bf16 %v4343, %v4341
    %v4400 = vpack.c.bf16 %v4344, %v4342
    %v4401 = vpack.c.bf16 %v4347, %v4345
    %v4402 = vpack.c.bf16 %v4348, %v4346
    %v4403 = vpack.c.bf16 %v4351, %v4349
    %v4404 = vpack.c.bf16 %v4352, %v4350
    %v4405 = vpack.c.bf16 %v4355, %v4353
    %v4406 = vpack.c.bf16 %v4356, %v4354
    %v4407 = vpack.c.bf16 %v4359, %v4357
    %v4408 = vpack.c.bf16 %v4360, %v4358
    %v4409 = vpack.c.bf16 %v4363, %v4361
    %v4410 = vpack.c.bf16 %v4364, %v4362
    %v4411 = vpack.c.bf16 %v4367, %v4365
    %v4412 = vpack.c.bf16 %v4368, %v4366
    %v4413 = vpack.c.bf16 %v4371, %v4369
    %v4414 = vpack.c.bf16 %v4372, %v4370
    %v4415 = vpack.c.bf16 %v4375, %v4373
    %v4416 = vpack.c.bf16 %v4376, %v4374
    %v4417 = vpack.c.bf16 %v4379, %v4377
    %v4418 = vpack.c.bf16 %v4380, %v4378
    %v4419 = vpack.c.bf16 %v4383, %v4381
    %v4420 = vpack.c.bf16 %v4384, %v4382
    %v4421 = vpack.c.bf16 %v4387, %v4385
    %v4422 = vpack.c.bf16 %v4388, %v4386
    %v4423 = vpack.c.bf16 %v4391, %v4389
    %v4424 = vpack.c.bf16 %v4392, %v4390
    %v4425 = vld [vmem:[%s5] sm:$0xf]
    %v4426 = vld [vmem:[%s5 + $0x4] sm:$0xf]
    %v4427 = vld [vmem:[%s5 + $0x8] sm:$0xf]
    %v4428 = vld [vmem:[%s5 + $0xc] sm:$0xf]
    %v4429 = vld [vmem:[%s5 + $0x10] sm:$0xf]
    %v4430 = vld [vmem:[%s5 + $0x14] sm:$0xf]
    %v4431 = vld [vmem:[%s5 + $0x18] sm:$0xf]
    %v4432 = vld [vmem:[%s5 + $0x1c] sm:$0xf]
    %v4433 = vld [vmem:[%s5 + $0x20] sm:$0xf]
    %v4434 = vld [vmem:[%s5 + $0x24] sm:$0xf]
    %v4435 = vld [vmem:[%s5 + $0x28] sm:$0xf]
    %v4436 = vld [vmem:[%s5 + $0x2c] sm:$0xf]
    %v4437 = vld [vmem:[%s5 + $0x30] sm:$0xf]
    %v4438 = vld [vmem:[%s5 + $0x34] sm:$0xf]
    %v4439 = vld [vmem:[%s5 + $0x38] sm:$0xf]
    %v4440 = vld [vmem:[%s5 + $0x3c] sm:$0xf]
    %v4441 = vld [vmem:[%s5 + $0x40] sm:$0xf]
    %v4442 = vld [vmem:[%s5 + $0x44] sm:$0xf]
    %v4443 = vld [vmem:[%s5 + $0x48] sm:$0xf]
    %v4444 = vld [vmem:[%s5 + $0x4c] sm:$0xf]
    %v4445 = vld [vmem:[%s5 + $0x50] sm:$0xf]
    %v4446 = vld [vmem:[%s5 + $0x54] sm:$0xf]
    %v4447 = vld [vmem:[%s5 + $0x58] sm:$0xf]
    %v4448 = vld [vmem:[%s5 + $0x5c] sm:$0xf]
    %v4449 = vld [vmem:[%s5 + $0x60] sm:$0xf]
    %v4450 = vld [vmem:[%s5 + $0x64] sm:$0xf]
    %v4451 = vld [vmem:[%s5 + $0x68] sm:$0xf]
    %v4452 = vld [vmem:[%s5 + $0x6c] sm:$0xf]
    %v4453 = vld [vmem:[%s5 + $0x70] sm:$0xf]
    %v4454 = vld [vmem:[%s5 + $0x74] sm:$0xf]
    %v4455 = vld [vmem:[%s5 + $0x78] sm:$0xf]
    %v4456 = vld [vmem:[%s5 + $0x7c] sm:$0xf]
    %v4457 = vld [vmem:[%s6] sm:$0x1]
    %v4459 = vlaneseq
    %v4460 = vshrl.u32 %v4459, 7
    %v4461 = vsub.s32 0, %v4460
    %v4462 = vrot.slane %v4457, %v4461
    %v4496 = vunpack.c.l.b16 %v4425
    %v4497 = vunpack.c.l.b16 %v4426
    %v4498 = vunpack.c.l.b16 %v4427
    %v4499 = vunpack.c.l.b16 %v4428
    %v4500 = vunpack.c.l.b16 %v4429
    %v4501 = vunpack.c.l.b16 %v4430
    %v4502 = vunpack.c.l.b16 %v4431
    %v4503 = vunpack.c.l.b16 %v4432
    %v4504 = vunpack.c.l.b16 %v4433
    %v4505 = vunpack.c.l.b16 %v4434
    %v4506 = vunpack.c.l.b16 %v4435
    %v4507 = vunpack.c.l.b16 %v4436
    %v4508 = vunpack.c.l.b16 %v4437
    %v4509 = vunpack.c.l.b16 %v4438
    %v4510 = vunpack.c.l.b16 %v4439
    %v4511 = vunpack.c.l.b16 %v4440
    %v4512 = vunpack.c.l.b16 %v4441
    %v4513 = vunpack.c.l.b16 %v4442
    %v4514 = vunpack.c.l.b16 %v4443
    %v4515 = vunpack.c.l.b16 %v4444
    %v4516 = vunpack.c.l.b16 %v4445
    %v4517 = vunpack.c.l.b16 %v4446
    %v4518 = vunpack.c.l.b16 %v4447
    %v4519 = vunpack.c.l.b16 %v4448
    %v4520 = vunpack.c.l.b16 %v4449
    %v4521 = vunpack.c.l.b16 %v4450
    %v4522 = vunpack.c.l.b16 %v4451
    %v4523 = vunpack.c.l.b16 %v4452
    %v4524 = vunpack.c.l.b16 %v4453
    %v4525 = vunpack.c.l.b16 %v4454
    %v4526 = vunpack.c.l.b16 %v4455
    %v4527 = vunpack.c.l.b16 %v4456
    %v4528 = vpack.c.b16 %v4497, %v4496
    %v4529 = vpack.c.b16 %v4499, %v4498
    %v4530 = vpack.c.b16 %v4501, %v4500
    %v4531 = vpack.c.b16 %v4503, %v4502
    %v4532 = vpack.c.b16 %v4505, %v4504
    %v4533 = vpack.c.b16 %v4507, %v4506
    %v4534 = vpack.c.b16 %v4509, %v4508
    %v4535 = vpack.c.b16 %v4511, %v4510
    %v4536 = vpack.c.b16 %v4513, %v4512
    %v4537 = vpack.c.b16 %v4515, %v4514
    %v4538 = vpack.c.b16 %v4517, %v4516
    %v4539 = vpack.c.b16 %v4519, %v4518
    %v4540 = vpack.c.b16 %v4521, %v4520
    %v4541 = vpack.c.b16 %v4523, %v4522
    %v4542 = vpack.c.b16 %v4525, %v4524
    %v4543 = vpack.c.b16 %v4527, %v4526
    %4560 = vmatprep.subr.bf16.mxu0 0
    %4561 = vmatpush1.bf16.msra.mxu0 %v4528
    %4562 = vmatprep.subr.bf16.mxu0 0
    %4563 = vmatpush1.bf16.msra.mxu0 %v4529
    %4564 = vmatprep.subr.bf16.mxu0 0
    %4565 = vmatpush1.bf16.msra.mxu0 %v4530
    %4566 = vmatprep.subr.bf16.mxu0 0
    %4567 = vmatpush1.bf16.msra.mxu0 %v4531
    %4568 = vmatprep.subr.bf16.mxu0 0
    %4569 = vmatpush1.bf16.msra.mxu0 %v4532
    %4570 = vmatprep.subr.bf16.mxu0 0
    %4571 = vmatpush1.bf16.msra.mxu0 %v4533
    %4572 = vmatprep.subr.bf16.mxu0 0
    %4573 = vmatpush1.bf16.msra.mxu0 %v4534
    %4574 = vmatprep.subr.bf16.mxu0 0
    %4575 = vmatpush1.bf16.msra.mxu0 %v4535
    %4576 = vmatprep.subr.bf16.mxu0 0
    %4577 = vmatpush1.bf16.msra.mxu0 %v4536
    %4578 = vmatprep.subr.bf16.mxu0 0
    %4579 = vmatpush1.bf16.msra.mxu0 %v4537
    %4580 = vmatprep.subr.bf16.mxu0 0
    %4581 = vmatpush1.bf16.msra.mxu0 %v4538
    %4582 = vmatprep.subr.bf16.mxu0 0
    %4583 = vmatpush1.bf16.msra.mxu0 %v4539
    %4584 = vmatprep.subr.bf16.mxu0 0
    %4585 = vmatpush1.bf16.msra.mxu0 %v4540
    %4586 = vmatprep.subr.bf16.mxu0 0
    %4587 = vmatpush1.bf16.msra.mxu0 %v4541
    %4588 = vmatprep.subr.bf16.mxu0 0
    %4589 = vmatpush1.bf16.msra.mxu0 %v4542
    %4590 = vmatprep.subr.bf16.mxu0 0
    %4591 = vmatpush1.bf16.msra.mxu0 %v4543
    %4592 = vmatprep.mubr.bf16.mxu0 %v4394
    %4593 = vmatmul.mubr.bf16.gmra.mrb[0].mxu0 %v4393
    %v4594 = vpop.f32.mrb[0].mxu0
    %v4595 = vadd.f32 %v4462, %v4594
    %v4596 = vpop.f32.mrb[0].mxu0
    %v4597 = vpop.f32.mrb[0].mxu0
    %v4598 = vadd.f32 %v4462, %v4597
    %v4599 = vpop.f32.mrb[0].mxu0
    %4600 = vmatprep.mubr.bf16.mxu0 %v4396
    %4601 = vmatmul.mubr.bf16.gmra.mrb[0].mxu0 %v4395
    %v4602 = vpop.f32.mrb[0].mxu0
    %v4603 = vadd.f32 %v4462, %v4602
    %v4604 = vpop.f32.mrb[0].mxu0
    %v4605 = vpop.f32.mrb[0].mxu0
    %v4606 = vadd.f32 %v4462, %v4605
    %v4607 = vpop.f32.mrb[0].mxu0
    %4608 = vmatprep.mubr.bf16.mxu0 %v4398
    %4609 = vmatmul.mubr.bf16.gmra.mrb[0].mxu0 %v4397
    %v4610 = vpop.f32.mrb[0].mxu0
    %v4611 = vadd.f32 %v4462, %v4610
    %v4612 = vpop.f32.mrb[0].mxu0
    %v4613 = vpop.f32.mrb[0].mxu0
    %v4614 = vadd.f32 %v4462, %v4613
    %v4615 = vpop.f32.mrb[0].mxu0
    %4616 = vmatprep.mubr.bf16.mxu0 %v4400
    %4617 = vmatmul.mubr.bf16.gmra.mrb[0].mxu0 %v4399
    %v4618 = vpop.f32.mrb[0].mxu0
    %v4619 = vadd.f32 %v4462, %v4618
    %v4620 = vpop.f32.mrb[0].mxu0
    %v4621 = vpop.f32.mrb[0].mxu0
    %v4622 = vadd.f32 %v4462, %v4621
    %v4623 = vpop.f32.mrb[0].mxu0
    %4624 = vmatprep.mubr.bf16.mxu0 %v4402
    %4625 = vmatmul.mubr.bf16.gmra.mrb[0].mxu0 %v4401
    %v4626 = vpop.f32.mrb[0].mxu0
    %v4627 = vadd.f32 %v4462, %v4626
    %v4628 = vpop.f32.mrb[0].mxu0
    %v4629 = vpop.f32.mrb[0].mxu0
    %v4630 = vadd.f32 %v4462, %v4629
    %v4631 = vpop.f32.mrb[0].mxu0
    %4632 = vmatprep.mubr.bf16.mxu0 %v4404
    %4633 = vmatmul.mubr.bf16.gmra.mrb[0].mxu0 %v4403
    %v4634 = vpop.f32.mrb[0].mxu0
    %v4635 = vadd.f32 %v4462, %v4634
    %v4636 = vpop.f32.mrb[0].mxu0
    %v4637 = vpop.f32.mrb[0].mxu0
    %v4638 = vadd.f32 %v4462, %v4637
    %v4639 = vpop.f32.mrb[0].mxu0
    %4640 = vmatprep.mubr.bf16.mxu0 %v4406
    %4641 = vmatmul.mubr.bf16.gmra.mrb[0].mxu0 %v4405
    %v4642 = vpop.f32.mrb[0].mxu0
    %v4643 = vadd.f32 %v4462, %v4642
    %v4644 = vpop.f32.mrb[0].mxu0
    %v4645 = vpop.f32.mrb[0].mxu0
    %v4646 = vadd.f32 %v4462, %v4645
    %v4647 = vpop.f32.mrb[0].mxu0
    %4648 = vmatprep.mubr.bf16.mxu0 %v4408
    %4649 = vmatmul.mubr.bf16.gmra.mrb[0].mxu0 %v4407
    %v4650 = vpop.f32.mrb[0].mxu0
    %v4651 = vadd.f32 %v4462, %v4650
    %v4652 = vpop.f32.mrb[0].mxu0
    %v4653 = vpop.f32.mrb[0].mxu0
    %v4654 = vadd.f32 %v4462, %v4653
    %v4655 = vpop.f32.mrb[0].mxu0
    %4656 = vmatprep.mubr.bf16.mxu0 %v4410
    %4657 = vmatmul.mubr.bf16.gmra.mrb[0].mxu0 %v4409
    %v4658 = vpop.f32.mrb[0].mxu0
    %v4659 = vadd.f32 %v4462, %v4658
    %v4660 = vpop.f32.mrb[0].mxu0
    %v4661 = vpop.f32.mrb[0].mxu0
    %v4662 = vadd.f32 %v4462, %v4661
    %v4663 = vpop.f32.mrb[0].mxu0
    %4664 = vmatprep.mubr.bf16.mxu0 %v4412
    %4665 = vmatmul.mubr.bf16.gmra.mrb[0].mxu0 %v4411
    %v4666 = vpop.f32.mrb[0].mxu0
    %v4667 = vadd.f32 %v4462, %v4666
    %v4668 = vpop.f32.mrb[0].mxu0
    %v4669 = vpop.f32.mrb[0].mxu0
    %v4670 = vadd.f32 %v4462, %v4669
    %v4671 = vpop.f32.mrb[0].mxu0
    %4672 = vmatprep.mubr.bf16.mxu0 %v4414
    %4673 = vmatmul.mubr.bf16.gmra.mrb[0].mxu0 %v4413
    %v4674 = vpop.f32.mrb[0].mxu0
    %v4675 = vadd.f32 %v4462, %v4674
    %v4676 = vpop.f32.mrb[0].mxu0
    %v4677 = vpop.f32.mrb[0].mxu0
    %v4678 = vadd.f32 %v4462, %v4677
    %v4679 = vpop.f32.mrb[0].mxu0
    %4680 = vmatprep.mubr.bf16.mxu0 %v4416
    %4681 = vmatmul.mubr.bf16.gmra.mrb[0].mxu0 %v4415
    %v4682 = vpop.f32.mrb[0].mxu0
    %v4683 = vadd.f32 %v4462, %v4682
    %v4684 = vpop.f32.mrb[0].mxu0
    %v4685 = vpop.f32.mrb[0].mxu0
    %v4686 = vadd.f32 %v4462, %v4685
    %v4687 = vpop.f32.mrb[0].mxu0
    %4688 = vmatprep.mubr.bf16.mxu0 %v4418
    %4689 = vmatmul.mubr.bf16.gmra.mrb[0].mxu0 %v4417
    %v4690 = vpop.f32.mrb[0].mxu0
    %v4691 = vadd.f32 %v4462, %v4690
    %v4692 = vpop.f32.mrb[0].mxu0
    %v4693 = vpop.f32.mrb[0].mxu0
    %v4694 = vadd.f32 %v4462, %v4693
    %v4695 = vpop.f32.mrb[0].mxu0
    %4696 = vmatprep.mubr.bf16.mxu0 %v4420
    %4697 = vmatmul.mubr.bf16.gmra.mrb[0].mxu0 %v4419
    %v4698 = vpop.f32.mrb[0].mxu0
    %v4699 = vadd.f32 %v4462, %v4698
    %v4700 = vpop.f32.mrb[0].mxu0
    %v4701 = vpop.f32.mrb[0].mxu0
    %v4702 = vadd.f32 %v4462, %v4701
    %v4703 = vpop.f32.mrb[0].mxu0
    %4704 = vmatprep.mubr.bf16.mxu0 %v4422
    %4705 = vmatmul.mubr.bf16.gmra.mrb[0].mxu0 %v4421
    %v4706 = vpop.f32.mrb[0].mxu0
    %v4707 = vadd.f32 %v4462, %v4706
    %v4708 = vpop.f32.mrb[0].mxu0
    %v4709 = vpop.f32.mrb[0].mxu0
    %v4710 = vadd.f32 %v4462, %v4709
    %v4711 = vpop.f32.mrb[0].mxu0
    %4712 = vmatprep.mubr.bf16.mxu0 %v4424
    %4713 = vmatmul.mubr.bf16.gmra.mrb[0].mxu0 %v4423
    %v4714 = vpop.f32.mrb[0].mxu0
    %v4715 = vadd.f32 %v4462, %v4714
    %v4716 = vpop.f32.mrb[0].mxu0
    %v4717 = vpop.f32.mrb[0].mxu0
    %v4718 = vadd.f32 %v4462, %v4717
    %v4719 = vpop.f32.mrb[0].mxu0
    %4720 = vdwg.mxu0
    %v4721 = vmul.f32 %v4595, 0.2
    %v4722 = vmul.f32 %v4598, 0.2
    %v4723 = vmul.f32 %v4603, 0.2
    %v4724 = vmul.f32 %v4606, 0.2
    %v4725 = vmul.f32 %v4611, 0.2
    %v4726 = vmul.f32 %v4614, 0.2
    %v4727 = vmul.f32 %v4619, 0.2
    %v4728 = vmul.f32 %v4622, 0.2
    %v4729 = vmul.f32 %v4627, 0.2
    %v4730 = vmul.f32 %v4630, 0.2
    %v4731 = vmul.f32 %v4635, 0.2
    %v4732 = vmul.f32 %v4638, 0.2
    %v4733 = vmul.f32 %v4643, 0.2
    %v4734 = vmul.f32 %v4646, 0.2
    %v4735 = vmul.f32 %v4651, 0.2
    %v4736 = vmul.f32 %v4654, 0.2
    %v4737 = vmul.f32 %v4659, 0.2
    %v4738 = vmul.f32 %v4662, 0.2
    %v4739 = vmul.f32 %v4667, 0.2
    %v4740 = vmul.f32 %v4670, 0.2
    %v4741 = vmul.f32 %v4675, 0.2
    %v4742 = vmul.f32 %v4678, 0.2
    %v4743 = vmul.f32 %v4683, 0.2
    %v4744 = vmul.f32 %v4686, 0.2
    %v4745 = vmul.f32 %v4691, 0.2
    %v4746 = vmul.f32 %v4694, 0.2
    %v4747 = vmul.f32 %v4699, 0.2
    %v4748 = vmul.f32 %v4702, 0.2
    %v4749 = vmul.f32 %v4707, 0.2
    %v4750 = vmul.f32 %v4710, 0.2
    %v4751 = vmul.f32 %v4715, 0.2
    %v4752 = vmul.f32 %v4718, 0.2
    %v4753 = vmax.f32 %v4595, %v4721
    %v4754 = vmax.f32 %v4598, %v4722
    %v4755 = vmax.f32 %v4603, %v4723
    %v4756 = vmax.f32 %v4606, %v4724
    %v4757 = vmax.f32 %v4611, %v4725
    %v4758 = vmax.f32 %v4614, %v4726
    %v4759 = vmax.f32 %v4619, %v4727
    %v4760 = vmax.f32 %v4622, %v4728
    %v4761 = vmax.f32 %v4627, %v4729
    %v4762 = vmax.f32 %v4630, %v4730
    %v4763 = vmax.f32 %v4635, %v4731
    %v4764 = vmax.f32 %v4638, %v4732
    %v4765 = vmax.f32 %v4643, %v4733
    %v4766 = vmax.f32 %v4646, %v4734
    %v4767 = vmax.f32 %v4651, %v4735
    %v4768 = vmax.f32 %v4654, %v4736
    %v4769 = vmax.f32 %v4659, %v4737
    %v4770 = vmax.f32 %v4662, %v4738
    %v4771 = vmax.f32 %v4667, %v4739
    %v4772 = vmax.f32 %v4670, %v4740
    %v4773 = vmax.f32 %v4675, %v4741
    %v4774 = vmax.f32 %v4678, %v4742
    %v4775 = vmax.f32 %v4683, %v4743
    %v4776 = vmax.f32 %v4686, %v4744
    %v4777 = vmax.f32 %v4691, %v4745
    %v4778 = vmax.f32 %v4694, %v4746
    %v4779 = vmax.f32 %v4699, %v4747
    %v4780 = vmax.f32 %v4702, %v4748
    %v4781 = vmax.f32 %v4707, %v4749
    %v4782 = vmax.f32 %v4710, %v4750
    %v4783 = vmax.f32 %v4715, %v4751
    %v4784 = vmax.f32 %v4718, %v4752
    %v4785 = vld [vmem:[%s7] sm:$0xf]
    %v4786 = vpack.c.bf16 %v4754, %v4753
    %v4787 = vpack.c.bf16 %v4756, %v4755
    %v4788 = vpack.c.bf16 %v4758, %v4757
    %v4789 = vpack.c.bf16 %v4760, %v4759
    %v4790 = vpack.c.bf16 %v4762, %v4761
    %v4791 = vpack.c.bf16 %v4764, %v4763
    %v4792 = vpack.c.bf16 %v4766, %v4765
    %v4793 = vpack.c.bf16 %v4768, %v4767
    %v4794 = vpack.c.bf16 %v4770, %v4769
    %v4795 = vpack.c.bf16 %v4772, %v4771
    %v4796 = vpack.c.bf16 %v4774, %v4773
    %v4797 = vpack.c.bf16 %v4776, %v4775
    %v4798 = vpack.c.bf16 %v4778, %v4777
    %v4799 = vpack.c.bf16 %v4780, %v4779
    %v4800 = vpack.c.bf16 %v4782, %v4781
    %v4801 = vpack.c.bf16 %v4784, %v4783
    %4802 = vmatprep.subr.bf16.mxu0 0
    %4803 = vmatpush1.bf16.xpose.msra.mxu0 %v4786
    %4804 = vmatprep.subr.bf16.mxu0 0
    %4805 = vmatpush1.bf16.xpose.msra.mxu0 %v4787
    %4806 = vmatprep.subr.bf16.mxu0 0
    %4807 = vmatpush1.bf16.xpose.msra.mxu0 %v4788
    %4808 = vmatprep.subr.bf16.mxu0 0
    %4809 = vmatpush1.bf16.xpose.msra.mxu0 %v4789
    %4810 = vmatprep.subr.bf16.mxu0 0
    %4811 = vmatpush1.bf16.xpose.msra.mxu0 %v4790
    %4812 = vmatprep.subr.bf16.mxu0 0
    %4813 = vmatpush1.bf16.xpose.msra.mxu0 %v4791
    %4814 = vmatprep.subr.bf16.mxu0 0
    %4815 = vmatpush1.bf16.xpose.msra.mxu0 %v4792
    %4816 = vmatprep.subr.bf16.mxu0 0
    %4817 = vmatpush1.bf16.xpose.msra.mxu0 %v4793
    %4818 = vmatprep.subr.bf16.mxu0 0
    %4819 = vmatpush1.bf16.xpose.msra.mxu0 %v4794
    %4820 = vmatprep.subr.bf16.mxu0 0
    %4821 = vmatpush1.bf16.xpose.msra.mxu0 %v4795
    %4822 = vmatprep.subr.bf16.mxu0 0
    %4823 = vmatpush1.bf16.xpose.msra.mxu0 %v4796
    %4824 = vmatprep.subr.bf16.mxu0 0
    %4825 = vmatpush1.bf16.xpose.msra.mxu0 %v4797
    %4826 = vmatprep.subr.bf16.mxu0 0
    %4827 = vmatpush1.bf16.xpose.msra.mxu0 %v4798
    %4828 = vmatprep.subr.bf16.mxu0 0
    %4829 = vmatpush1.bf16.xpose.msra.mxu0 %v4799
    %4830 = vmatprep.subr.bf16.mxu0 0
    %4831 = vmatpush1.bf16.xpose.msra.mxu0 %v4800
    %4832 = vmatprep.subr.bf16.mxu0 0
    %4833 = vmatpush1.bf16.xpose.msra.mxu0 %v4801
    %4834 = vmatprep.mubr.bf16.mxu0 0
    %4835 = vmatmul.mubr.bf16.gmra.mrb[0].mxu0 %v4785
    %v4836 = vpop.f32.mrb[0].mxu0
    %v4837 = vadd.f32 0.0, %v4836
    %v4838 = vpop.f32.mrb[0].mxu0
    %v4839 = vadd.f32 0.0, %v4838
    %v4840 = vpop.f32.mrb[0].mxu0
    %v4841 = vpop.f32.mrb[0].mxu0
    %4842 = vdwg.mxu0
    %v4843 = vld [vmem:[#allocation2] sm:$0x1]
    %4845 = vset.pattern.permute.xlu0 0
    %4846 = vperm.xlu0 %4845, %v4843
    %v4847 = vpop.permute.xlu0 %4846
    %v4849 = vlaneseq
    %v4850 = vshrl.u32 %v4849, 7
    %v4851 = vsub.s32 0, %v4850
    %v4852 = vrot.slane %v4847, %v4851
    %v4853 = vadd.f32 %v4837, %v4852
    %v4854 = vadd.f32 %v4839, %v4852
    %v4857 = vcombine.low %v4853, %v4854
    %v4859 = vunpack.c.l.s4 1966171168
    %v4860 = vunpack.c.0.s8 %v4859
    %v4861 = vlaneseq
    %v4862 = vshrl.u32 %v4861, 7
    %v4863 = vsub.s32 %v4860, %v4862
    %v4864 = vrot.slane %v4857, %v4863
    %v4866 = vunpack.c.l.s4 1966171168
    %v4867 = vunpack.c.0.s8 %v4866
    %v4868 = vlaneseq
    %v4869 = vshrl.u32 %v4868, 7
    %v4870 = vsub.s32 %v4867, %v4869
    %v4871 = vrot.slane %v4864, %v4870
    %v4873 = vlaneseq
    %vm4874 = vcmp.ge.s32.totalorder %v4873, 0
    %vm4875 = vcmp.lt.s32.totalorder %v4873, 256
    %vm4876 = vmand %vm4874, %vm4875
    %4877 = vst.msk [vmem:[#allocation3] sm:$0x3] %vm4876, %v4871
    // Predicated region
    $region38: #{tpu_custom_call.1} parent=1 // pred_check
      _
    $region39: #{tpu_custom_call.1} parent=1 // pred_check_branch
      %4879 = sbr.rel (0) target = $region41
    $region40: #{tpu_custom_call.1} parent=1 // pred_region
      %s4881 = ssub.s32 32, 32
      %4882 = vsyncadd [#allocation4], %s4881
      %s4884 = sshll.u32 [#allocation3], 4
      %s4885 = int_to_ptr.vmem [resolvable:$true] %s4884
      %4887 = dma.vmem_to_hbm [thread:$0]  %s4885, 32, %s9, [#allocation4]
    $region41: #{tpu_custom_call.1} parent=1 // pred_fallthru
      _
    // Predicated region
    $region42: #{tpu_custom_call.1} parent=1 // pred_check
      _
    $region43: #{tpu_custom_call.1} parent=1 // pred_check_branch
      %4889 = sbr.rel (0) target = $region45
    $region44: #{tpu_custom_call.1} parent=1 // pred_region
      %4890 = dma.done [#allocation4], 32
    $region45: #{tpu_custom_call.1} parent=1 // pred_fallthru
      _
    %4891 = vsyncpa [#allocation4], 1

</llo_original>
